<compile_context>
chip_gen: v7x
topology: tpu7x:2x2x1
jax: 0.10.0
libtpu: 0.0.40
codegen_flags: <defaults>
</compile_context>

<pallas_src>
import functools

import jax
import jax.numpy as jnp
from jax.experimental import pallas as pl
from jax.experimental.pallas import tpu as pltpu


def _round_up(x, m):
    return ((x + m - 1) // m) * m


def _var_mlp_kernel(num_hidden_layers, embed_dim, head_stride, *refs):
    # inputs : x, w_in, b_in, [w_h_i, b_h_i] * L, w_heads, b_heads, eps
    # outputs: slab_out (TILE_B, OUT_W) = [mu | logvar | samples | kl_row | pad]
    n_in = 1 + 2 + 2 * num_hidden_layers + 2 + 1
    in_refs = refs[:n_in]
    (slab_out,) = refs[n_in:]

    it = iter(in_refs)
    x_ref = next(it)
    w_in = next(it)
    b_in = next(it)
    hidden_wb = [(next(it), next(it)) for _ in range(num_hidden_layers)]
    w_heads = next(it)
    b_heads = next(it)
    eps_ref = next(it)

    tile_b = x_ref.shape[0]
    out_w = slab_out.shape[1]
    e = embed_dim

    dot = functools.partial(
        jnp.dot,
        precision=jax.lax.Precision.HIGHEST,
        preferred_element_type=jnp.float32,
    )

    x = x_ref[...]

    # base_network: Linear(in_dim, hidden) + ReLU, then L x (Linear + ReLU)
    h = jnp.maximum(dot(x, w_in[...]) + b_in[...], 0.0)
    for w_ref, b_ref in hidden_wb:
        h = jnp.maximum(dot(h, w_ref[...]) + b_ref[...], 0.0)

    # fused heads: single (hidden, 2*head_stride) matmul; each head occupies
    # its own 128-lane-aligned column band, so the split is vreg-aligned.
    heads = dot(h, w_heads[...]) + b_heads[...]
    meanz = heads[:, :e]
    logvar = jnp.clip(heads[:, head_stride:head_stride + e], -20.0, 20.0)

    # reparameterization + KL (std reused for the variance term: one exp/elem)
    std = jnp.exp(0.5 * logvar)
    var = std * std
    samples = meanz + std * eps_ref[...]
    kl_row = jnp.sum(0.5 * (meanz * meanz + var - 1.0 - logvar),
                     axis=1, keepdims=True)

    # Direct sliced writes into the lane-dense output slab (no concat temp).
    # Padded batch rows are dropped by the wrapper slice; only pad lanes
    # need zeroing so downstream reductions over the slab stay clean.
    pad_start = 3 * e + 1
    if pad_start < out_w:
        slab_out[:, pad_start:] = jnp.zeros((tile_b, out_w - pad_start),
                                            jnp.float32)
    slab_out[:, 0:e] = meanz
    slab_out[:, e:2 * e] = logvar
    slab_out[:, 2 * e:3 * e] = samples
    slab_out[:, 3 * e:3 * e + 1] = kl_row


def _pick_tiling(B, in_dim, embed_dim, out_w, weight_bytes):
    """Choose (tile_b, b_pad) under a ~24 MiB VMEM working-set budget."""
    # double-buffered x, eps and output tiles per batch row (f32)
    bytes_per_row = 4 * (2 * in_dim + 2 * embed_dim + 2 * out_w)
    budget = (24 << 20) - weight_bytes
    tile_cap = max(8, (budget // bytes_per_row) // 8 * 8) if budget > 0 else 8
    tile_b = int(min(1024, tile_cap, _round_up(B, 8)))
    # Keep >= 2 grid steps when the batch allows it, so the "parallel" batch
    # axis can feed both v7x TensorCores and pipelining overlaps DMA/compute.
    if _round_up(B, 8) > 8 and _round_up(B, tile_b) == tile_b:
        tile_b = max(8, _round_up((B + 1) // 2, 8))
    b_pad = _round_up(B, tile_b)
    return tile_b, b_pad, bytes_per_row


def var_mlp_forward(x4d, weights, eps):
    """x4d: (B, C, H, W) float32; weights: dict of (in,out) matrices / (1,out) biases."""
    B = x4d.shape[0]
    x = x4d.reshape(B, -1).astype(jnp.float32)  # nn.Flatten
    in_dim = x.shape[1]
    hidden_dim = weights["w_in"].shape[1]
    embed_dim = weights["w_mu"].shape[1]
    num_hidden_layers = len(weights["hidden"])

    # Fused heads, each padded to a 128-lane column band (mu in [0, hs),
    # logvar in [hs, 2*hs)) so the in-kernel split is vreg-aligned.
    head_stride = _round_up(embed_dim, 128)
    w_heads = jnp.zeros((hidden_dim, 2 * head_stride), jnp.float32)
    w_heads = w_heads.at[:, :embed_dim].set(weights["w_mu"])
    w_heads = w_heads.at[:, head_stride:head_stride + embed_dim].set(weights["w_lv"])
    b_heads = jnp.zeros((1, 2 * head_stride), jnp.float32)
    b_heads = b_heads.at[:, :embed_dim].set(weights["b_mu"])
    b_heads = b_heads.at[:, head_stride:head_stride + embed_dim].set(weights["b_lv"])

    out_w = _round_up(3 * embed_dim + 1, 128)  # lane-dense output slab width

    weight_elems = (in_dim * hidden_dim + hidden_dim
                    + num_hidden_layers * (hidden_dim * hidden_dim + hidden_dim)
                    + hidden_dim * 2 * head_stride + 2 * head_stride)
    weight_bytes = 4 * weight_elems

    tile_b, b_pad, bytes_per_row = _pick_tiling(
        B, in_dim, embed_dim, out_w, weight_bytes)
    num_tiles = b_pad // tile_b

    if b_pad != B:
        x = jnp.pad(x, ((0, b_pad - B), (0, 0)))
        eps = jnp.pad(eps, ((0, b_pad - B), (0, 0)))
    eps = eps.astype(jnp.float32)

    # Explicit scoped-VMEM limit: covers the chosen tile on v5e's 16 MiB
    # default, stays well under v7x's 64 MiB physical VMEM.
    vmem_limit = int(min(max(weight_bytes + tile_b * bytes_per_row + (4 << 20),
                             32 << 20),
                         48 << 20))

    single = dict(pipeline_mode=pl.Buffered(1))  # weights: DMA once, 1 buffer

    inputs = [x, weights["w_in"], weights["b_in"]]
    in_specs = [
        pl.BlockSpec((tile_b, in_dim), lambda i: (i, 0)),
        pl.BlockSpec((in_dim, hidden_dim), lambda i: (0, 0), **single),
        pl.BlockSpec((1, hidden_dim), lambda i: (0, 0), **single),
    ]
    for w, b in weights["hidden"]:
        inputs += [w, b]
        in_specs += [
            pl.BlockSpec((hidden_dim, hidden_dim), lambda i: (0, 0), **single),
            pl.BlockSpec((1, hidden_dim), lambda i: (0, 0), **single),
        ]
    inputs += [w_heads, b_heads, eps]
    in_specs += [
        pl.BlockSpec((hidden_dim, 2 * head_stride), lambda i: (0, 0), **single),
        pl.BlockSpec((1, 2 * head_stride), lambda i: (0, 0), **single),
        pl.BlockSpec((tile_b, embed_dim), lambda i: (i, 0)),
    ]

    cost = pl.CostEstimate(
        flops=2 * b_pad * (in_dim * hidden_dim
                           + num_hidden_layers * hidden_dim * hidden_dim
                           + hidden_dim * 2 * head_stride),
        transcendentals=b_pad * embed_dim,
        bytes_accessed=4 * (b_pad * (in_dim + embed_dim + out_w) + weight_elems),
    )

    kernel = functools.partial(
        _var_mlp_kernel, num_hidden_layers, embed_dim, head_stride)
    slab = pl.pallas_call(
        kernel,
        grid=(num_tiles,),
        out_shape=jax.ShapeDtypeStruct((b_pad, out_w), jnp.float32),
        in_specs=in_specs,
        out_specs=pl.BlockSpec((tile_b, out_w), lambda i: (i, 0)),
        compiler_params=pltpu.CompilerParams(
            dimension_semantics=("parallel",),
            vmem_limit_bytes=vmem_limit,
        ),
        cost_estimate=cost,
    )(*inputs)

    meanz = slab[:B, :embed_dim]
    logvar = slab[:B, embed_dim:2 * embed_dim]
    samples = slab[:B, 2 * embed_dim:3 * embed_dim]
    kl_loss = jnp.sum(slab[:B, 3 * embed_dim]) / B

    # NaN-guard matching the PyTorch module (value replacement only).
    # TODO(synk): the host-side `print('NaN detected...')` is not reproduced.
    kl_loss = jnp.where(jnp.isnan(kl_loss), jnp.float32(0.1), kl_loss)
    return [meanz, logvar, samples], kl_loss


def _xavier_uniform(key, fan_in, fan_out):
    bound = jnp.sqrt(6.0 / (fan_in + fan_out))
    # stored as (in, out) so the kernel can do x @ W
    return jax.random.uniform(
        key, (fan_in, fan_out), dtype=jnp.float32, minval=-bound, maxval=bound
    )


def init_var_mlp_weights(key, in_dim, hidden_dim, embed_dim, layers):
    keys = jax.random.split(key, 3 + layers)
    weights = {
        "w_in": _xavier_uniform(keys[0], in_dim, hidden_dim),
        "b_in": jnp.zeros((1, hidden_dim), jnp.float32),
        "hidden": [],
        "w_mu": _xavier_uniform(keys[1], hidden_dim, embed_dim),
        "b_mu": jnp.zeros((1, embed_dim), jnp.float32),
        "w_lv": _xavier_uniform(keys[2], hidden_dim, embed_dim),
        "b_lv": jnp.zeros((1, embed_dim), jnp.float32),
    }
    for i in range(layers):
        weights["hidden"].append(
            (
                _xavier_uniform(keys[3 + i], hidden_dim, hidden_dim),
                jnp.zeros((1, hidden_dim), jnp.float32),
            )
        )
    return weights


def _ref_forward(x4d, weights, eps):
    """Pure-JAX fp32 reference for correctness checking."""
    def dot(a, b):
        return jnp.dot(a, b, precision=jax.lax.Precision.HIGHEST,
                       preferred_element_type=jnp.float32)

    B = x4d.shape[0]
    h = x4d.reshape(B, -1).astype(jnp.float32)
    h = jnp.maximum(dot(h, weights["w_in"]) + weights["b_in"], 0.0)
    for w, b in weights["hidden"]:
        h = jnp.maximum(dot(h, w) + b, 0.0)
    meanz = dot(h, weights["w_mu"]) + weights["b_mu"]
    logvar = jnp.clip(dot(h, weights["w_lv"]) + weights["b_lv"], -20.0, 20.0)
    kl = jnp.mean(jnp.sum(0.5 * (meanz ** 2 + jnp.exp(logvar) - 1.0 - logvar),
                          axis=1))
    samples = meanz + jnp.exp(0.5 * logvar) * eps
    return meanz, logvar, samples, kl


if __name__ == "__main__":
    # params = {'hidden_dim': 32, 'embed_dim': 8, 'layers': 2, 'activation': nn.ReLU}
    B, C, H, W = 2, 4, 16, 16
    in_dim = C * H * W
    hidden_dim, embed_dim, layers = 32, 8, 2

    key = jax.random.PRNGKey(0)
    kx, kw, ke = jax.random.split(key, 3)

    x = jax.random.normal(kx, (B, C, H, W), dtype=jnp.float32)
    weights = init_var_mlp_weights(kw, in_dim, hidden_dim, embed_dim, layers)
    eps = jax.random.normal(ke, (B, embed_dim), dtype=jnp.float32)

    (mu, logvar, samples), kl_loss = var_mlp_forward(x, weights, eps)
    jax.block_until_ready((mu, logvar, samples, kl_loss))

    assert mu.shape == (B, embed_dim)
    assert logvar.shape == (B, embed_dim)
    assert samples.shape == (B, embed_dim)

    mu_r, lv_r, sm_r, kl_r = _ref_forward(x, weights, eps)
    assert jnp.allclose(mu, mu_r, rtol=1e-5, atol=1e-5)
    assert jnp.allclose(logvar, lv_r, rtol=1e-5, atol=1e-5)
    assert jnp.allclose(samples, sm_r, rtol=1e-5, atol=1e-5)
    assert jnp.allclose(kl_loss, kl_r, rtol=1e-5, atol=1e-5)

    print("KERNEL_OK")
</pallas_src>

<mosaic_0001>
module attributes {stable_mosaic.version = 11 : i64} {
  func.func @_var_mlp_kernel(%arg0: i32, %arg1: memref<8x1024xf32, #tpu.memory_space<vmem>>, %arg2: memref<1024x32xf32, #tpu.memory_space<vmem>>, %arg3: memref<1x32xf32, #tpu.memory_space<vmem>>, %arg4: memref<32x32xf32, #tpu.memory_space<vmem>>, %arg5: memref<1x32xf32, #tpu.memory_space<vmem>>, %arg6: memref<32x32xf32, #tpu.memory_space<vmem>>, %arg7: memref<1x32xf32, #tpu.memory_space<vmem>>, %arg8: memref<32x256xf32, #tpu.memory_space<vmem>>, %arg9: memref<1x256xf32, #tpu.memory_space<vmem>>, %arg10: memref<8x8xf32, #tpu.memory_space<vmem>>, %arg11: memref<8x128xf32, #tpu.memory_space<vmem>>) attributes {dimension_semantics = [#tpu.dimension_semantics<parallel>], iteration_bounds = array<i64: 1>, scalar_prefetch = 0 : i64, scratch_operands = 0 : i64, tpu.core_type = #tpu.core_type<tc>, window_params = [{transform_indices = @transform_0, window_bounds = array<i64: 8, 1024>}, {pipeline_mode = #tpu.pipeline_mode<synchronous>, transform_indices = @transform_1, window_bounds = array<i64: 1024, 32>}, {pipeline_mode = #tpu.pipeline_mode<synchronous>, transform_indices = @transform_2, window_bounds = array<i64: 1, 32>}, {pipeline_mode = #tpu.pipeline_mode<synchronous>, transform_indices = @transform_3, window_bounds = array<i64: 32, 32>}, {pipeline_mode = #tpu.pipeline_mode<synchronous>, transform_indices = @transform_4, window_bounds = array<i64: 1, 32>}, {pipeline_mode = #tpu.pipeline_mode<synchronous>, transform_indices = @transform_5, window_bounds = array<i64: 32, 32>}, {pipeline_mode = #tpu.pipeline_mode<synchronous>, transform_indices = @transform_6, window_bounds = array<i64: 1, 32>}, {pipeline_mode = #tpu.pipeline_mode<synchronous>, transform_indices = @transform_7, window_bounds = array<i64: 32, 256>}, {pipeline_mode = #tpu.pipeline_mode<synchronous>, transform_indices = @transform_8, window_bounds = array<i64: 1, 256>}, {transform_indices = @transform_9, window_bounds = array<i64: 8, 8>}, {transform_indices = @transform_10, window_bounds = array<i64: 8, 128>}]} {
    %c0 = arith.constant 0 : index
    %c0_0 = arith.constant 0 : index
    %0 = vector.load %arg1[%c0, %c0_0] : memref<8x1024xf32, #tpu.memory_space<vmem>>, vector<8x1024xf32>
    %c0_1 = arith.constant 0 : index
    %c0_2 = arith.constant 0 : index
    %1 = vector.load %arg2[%c0_1, %c0_2] : memref<1024x32xf32, #tpu.memory_space<vmem>>, vector<1024x32xf32>
    %cst = arith.constant dense<0.000000e+00> : vector<8x32xf32>
    %2 = tpu.matmul %0, %1, %cst {dimension_numbers = #tpu.dot_dimension_numbers<[1], [0], [0], [1], [0, 0, 1, 1], [], []>, precision = #tpu.contract_precision<fp32>} : vector<8x1024xf32>, vector<1024x32xf32>, vector<8x32xf32> -> vector<8x32xf32>
    %c0_3 = arith.constant 0 : index
    %c0_4 = arith.constant 0 : index
    %3 = vector.load %arg3[%c0_3, %c0_4] : memref<1x32xf32, #tpu.memory_space<vmem>>, vector<1x32xf32>
    %4 = vector.broadcast %3 : vector<1x32xf32> to vector<8x32xf32>
    %5 = arith.addf %2, %4 : vector<8x32xf32>
    %cst_5 = arith.constant 0.000000e+00 : f32
    %6 = vector.broadcast %cst_5 : f32 to vector<8x32xf32>
    %7 = arith.maximumf %5, %6 : vector<8x32xf32>
    %c0_6 = arith.constant 0 : index
    %c0_7 = arith.constant 0 : index
    %8 = vector.load %arg4[%c0_6, %c0_7] : memref<32x32xf32, #tpu.memory_space<vmem>>, vector<32x32xf32>
    %cst_8 = arith.constant dense<0.000000e+00> : vector<8x32xf32>
    %9 = tpu.matmul %7, %8, %cst_8 {dimension_numbers = #tpu.dot_dimension_numbers<[1], [0], [0], [1], [0, 0, 1, 1], [], []>, precision = #tpu.contract_precision<fp32>} : vector<8x32xf32>, vector<32x32xf32>, vector<8x32xf32> -> vector<8x32xf32>
    %c0_9 = arith.constant 0 : index
    %c0_10 = arith.constant 0 : index
    %10 = vector.load %arg5[%c0_9, %c0_10] : memref<1x32xf32, #tpu.memory_space<vmem>>, vector<1x32xf32>
    %11 = vector.broadcast %10 : vector<1x32xf32> to vector<8x32xf32>
    %12 = arith.addf %9, %11 : vector<8x32xf32>
    %cst_11 = arith.constant 0.000000e+00 : f32
    %13 = vector.broadcast %cst_11 : f32 to vector<8x32xf32>
    %14 = arith.maximumf %12, %13 : vector<8x32xf32>
    %c0_12 = arith.constant 0 : index
    %c0_13 = arith.constant 0 : index
    %15 = vector.load %arg6[%c0_12, %c0_13] : memref<32x32xf32, #tpu.memory_space<vmem>>, vector<32x32xf32>
    %cst_14 = arith.constant dense<0.000000e+00> : vector<8x32xf32>
    %16 = tpu.matmul %14, %15, %cst_14 {dimension_numbers = #tpu.dot_dimension_numbers<[1], [0], [0], [1], [0, 0, 1, 1], [], []>, precision = #tpu.contract_precision<fp32>} : vector<8x32xf32>, vector<32x32xf32>, vector<8x32xf32> -> vector<8x32xf32>
    %c0_15 = arith.constant 0 : index
    %c0_16 = arith.constant 0 : index
    %17 = vector.load %arg7[%c0_15, %c0_16] : memref<1x32xf32, #tpu.memory_space<vmem>>, vector<1x32xf32>
    %18 = vector.broadcast %17 : vector<1x32xf32> to vector<8x32xf32>
    %19 = arith.addf %16, %18 : vector<8x32xf32>
    %cst_17 = arith.constant 0.000000e+00 : f32
    %20 = vector.broadcast %cst_17 : f32 to vector<8x32xf32>
    %21 = arith.maximumf %19, %20 : vector<8x32xf32>
    %c0_18 = arith.constant 0 : index
    %c0_19 = arith.constant 0 : index
    %22 = vector.load %arg8[%c0_18, %c0_19] : memref<32x256xf32, #tpu.memory_space<vmem>>, vector<32x256xf32>
    %cst_20 = arith.constant dense<0.000000e+00> : vector<8x256xf32>
    %23 = tpu.matmul %21, %22, %cst_20 {dimension_numbers = #tpu.dot_dimension_numbers<[1], [0], [0], [1], [0, 0, 1, 1], [], []>, precision = #tpu.contract_precision<fp32>} : vector<8x32xf32>, vector<32x256xf32>, vector<8x256xf32> -> vector<8x256xf32>
    %c0_21 = arith.constant 0 : index
    %c0_22 = arith.constant 0 : index
    %24 = vector.load %arg9[%c0_21, %c0_22] : memref<1x256xf32, #tpu.memory_space<vmem>>, vector<1x256xf32>
    %25 = vector.broadcast %24 : vector<1x256xf32> to vector<8x256xf32>
    %26 = arith.addf %23, %25 : vector<8x256xf32>
    %27 = vector.extract_strided_slice %26 {offsets = [0, 0], sizes = [8, 8], strides = [1, 1]} : vector<8x256xf32> to vector<8x8xf32>
    %28 = vector.extract_strided_slice %26 {offsets = [0, 128], sizes = [8, 8], strides = [1, 1]} : vector<8x256xf32> to vector<8x8xf32>
    %cst_23 = arith.constant -2.000000e+01 : f32
    %cst_24 = arith.constant 2.000000e+01 : f32
    %29 = vector.broadcast %cst_23 : f32 to vector<8x8xf32>
    %30 = arith.maximumf %29, %28 : vector<8x8xf32>
    %31 = vector.broadcast %cst_24 : f32 to vector<8x8xf32>
    %32 = arith.minimumf %31, %30 : vector<8x8xf32>
    %cst_25 = arith.constant 5.000000e-01 : f32
    %33 = vector.broadcast %cst_25 : f32 to vector<8x8xf32>
    %34 = arith.mulf %33, %32 : vector<8x8xf32>
    %35 = math.exp %34 : vector<8x8xf32>
    %36 = arith.mulf %35, %35 : vector<8x8xf32>
    %c0_26 = arith.constant 0 : index
    %c0_27 = arith.constant 0 : index
    %37 = vector.load %arg10[%c0_26, %c0_27] : memref<8x8xf32, #tpu.memory_space<vmem>>, vector<8x8xf32>
    %38 = arith.mulf %35, %37 : vector<8x8xf32>
    %39 = arith.addf %27, %38 : vector<8x8xf32>
    %40 = arith.mulf %27, %27 : vector<8x8xf32>
    %41 = arith.addf %40, %36 : vector<8x8xf32>
    %cst_28 = arith.constant 1.000000e+00 : f32
    %42 = vector.broadcast %cst_28 : f32 to vector<8x8xf32>
    %43 = arith.subf %41, %42 : vector<8x8xf32>
    %44 = arith.subf %43, %32 : vector<8x8xf32>
    %cst_29 = arith.constant 5.000000e-01 : f32
    %45 = vector.broadcast %cst_29 : f32 to vector<8x8xf32>
    %46 = arith.mulf %45, %44 : vector<8x8xf32>
    %cst_30 = arith.constant dense<0.000000e+00> : vector<8xf32>
    %47 = vector.multi_reduction <add>, %46, %cst_30 [1] : vector<8x8xf32> to vector<8xf32>
    %48 = vector.shape_cast %47 : vector<8xf32> to vector<8x1xf32>
    %cst_31 = arith.constant 0.000000e+00 : f32
    %49 = vector.broadcast %cst_31 : f32 to vector<8x103xf32>
    %c0_32 = arith.constant 0 : index
    %c25 = arith.constant 25 : index
    %50 = vector.load %arg11[%c0_32, %c25] : memref<8x128xf32, #tpu.memory_space<vmem>>, vector<8x103xf32>
    tpu.vector_store %arg11[%c0_32, %c25], %49 {strides = array<i32>} : memref<8x128xf32, #tpu.memory_space<vmem>>, vector<8x103xf32>,
    %c0_33 = arith.constant 0 : index
    %c0_34 = arith.constant 0 : index
    %51 = vector.load %arg11[%c0_33, %c0_34] : memref<8x128xf32, #tpu.memory_space<vmem>>, vector<8x8xf32>
    tpu.vector_store %arg11[%c0_33, %c0_34], %27 {strides = array<i32>} : memref<8x128xf32, #tpu.memory_space<vmem>>, vector<8x8xf32>,
    %c0_35 = arith.constant 0 : index
    %c8 = arith.constant 8 : index
    %52 = vector.load %arg11[%c0_35, %c8] : memref<8x128xf32, #tpu.memory_space<vmem>>, vector<8x8xf32>
    tpu.vector_store %arg11[%c0_35, %c8], %32 {strides = array<i32>} : memref<8x128xf32, #tpu.memory_space<vmem>>, vector<8x8xf32>,
    %c0_36 = arith.constant 0 : index
    %c16 = arith.constant 16 : index
    %53 = vector.load %arg11[%c0_36, %c16] : memref<8x128xf32, #tpu.memory_space<vmem>>, vector<8x8xf32>
    tpu.vector_store %arg11[%c0_36, %c16], %39 {strides = array<i32>} : memref<8x128xf32, #tpu.memory_space<vmem>>, vector<8x8xf32>,
    %c0_37 = arith.constant 0 : index
    %c24 = arith.constant 24 : index
    %54 = vector.load %arg11[%c0_37, %c24] : memref<8x128xf32, #tpu.memory_space<vmem>>, vector<8x1xf32>
    tpu.vector_store %arg11[%c0_37, %c24], %48 {strides = array<i32>} : memref<8x128xf32, #tpu.memory_space<vmem>>, vector<8x1xf32>,
    return
  }
  func.func @transform_0(%arg0: i32) -> (i32, i32) {
    %c0_i32 = arith.constant 0 : i32
    %c0_i32_0 = arith.constant 0 : i32
    return %arg0, %c0_i32 : i32, i32
  }
  func.func @transform_1(%arg0: i32) -> (i32, i32) {
    %c0_i32 = arith.constant 0 : i32
    %c0_i32_0 = arith.constant 0 : i32
    %c0_i32_1 = arith.constant 0 : i32
    return %c0_i32, %c0_i32_0 : i32, i32
  }
  func.func @transform_2(%arg0: i32) -> (i32, i32) {
    %c0_i32 = arith.constant 0 : i32
    %c0_i32_0 = arith.constant 0 : i32
    %c0_i32_1 = arith.constant 0 : i32
    return %c0_i32, %c0_i32_0 : i32, i32
  }
  func.func @transform_3(%arg0: i32) -> (i32, i32) {
    %c0_i32 = arith.constant 0 : i32
    %c0_i32_0 = arith.constant 0 : i32
    %c0_i32_1 = arith.constant 0 : i32
    return %c0_i32, %c0_i32_0 : i32, i32
  }
  func.func @transform_4(%arg0: i32) -> (i32, i32) {
    %c0_i32 = arith.constant 0 : i32
    %c0_i32_0 = arith.constant 0 : i32
    %c0_i32_1 = arith.constant 0 : i32
    return %c0_i32, %c0_i32_0 : i32, i32
  }
  func.func @transform_5(%arg0: i32) -> (i32, i32) {
    %c0_i32 = arith.constant 0 : i32
    %c0_i32_0 = arith.constant 0 : i32
    %c0_i32_1 = arith.constant 0 : i32
    return %c0_i32, %c0_i32_0 : i32, i32
  }
  func.func @transform_6(%arg0: i32) -> (i32, i32) {
    %c0_i32 = arith.constant 0 : i32
    %c0_i32_0 = arith.constant 0 : i32
    %c0_i32_1 = arith.constant 0 : i32
    return %c0_i32, %c0_i32_0 : i32, i32
  }
  func.func @transform_7(%arg0: i32) -> (i32, i32) {
    %c0_i32 = arith.constant 0 : i32
    %c0_i32_0 = arith.constant 0 : i32
    %c0_i32_1 = arith.constant 0 : i32
    return %c0_i32, %c0_i32_0 : i32, i32
  }
  func.func @transform_8(%arg0: i32) -> (i32, i32) {
    %c0_i32 = arith.constant 0 : i32
    %c0_i32_0 = arith.constant 0 : i32
    %c0_i32_1 = arith.constant 0 : i32
    return %c0_i32, %c0_i32_0 : i32, i32
  }
  func.func @transform_9(%arg0: i32) -> (i32, i32) {
    %c0_i32 = arith.constant 0 : i32
    %c0_i32_0 = arith.constant 0 : i32
    return %arg0, %c0_i32 : i32, i32
  }
  func.func @transform_10(%arg0: i32) -> (i32, i32) {
    %c0_i32 = arith.constant 0 : i32
    %c0_i32_0 = arith.constant 0 : i32
    return %arg0, %c0_i32 : i32, i32
  }
}

</mosaic_0001>

<llo_original>
// kernel: tpu_custom_call.1
$region0: #{tpu_custom_call.1}
  #allocation0 [shape = 'u32[]', space=smem, size = 0x4, offset = 0x4, fixed_abs, tag = 'smem constant byte address 0x4 - core index']
  #allocation1 [shape = 'u32[144,128]{1,0:T(1,128)}', space=vmem, size = 0x12000, scoped, tag = 'internal scratch']
  %s0 = inlined_call_operand.vmem [shape: f32[8,1024], index: 0, kind: input, shape index: {}]
  %s1 = inlined_call_operand.vmem [shape: f32[1024,32], index: 1, kind: input, shape index: {}]
  %s2 = inlined_call_operand.vmem [shape: f32[1,32], index: 2, kind: input, shape index: {}]
  %s3 = inlined_call_operand.vmem [shape: f32[32,32], index: 3, kind: input, shape index: {}]
  %s4 = inlined_call_operand.vmem [shape: f32[1,32], index: 4, kind: input, shape index: {}]
  %s5 = inlined_call_operand.vmem [shape: f32[32,32], index: 5, kind: input, shape index: {}]
  %s6 = inlined_call_operand.vmem [shape: f32[1,32], index: 6, kind: input, shape index: {}]
  %s7 = inlined_call_operand.vmem [shape: f32[32,256], index: 7, kind: input, shape index: {}]
  %s8 = inlined_call_operand.vmem [shape: f32[1,256], index: 8, kind: input, shape index: {}]
  %s9 = inlined_call_operand.vmem [shape: f32[8,8], index: 9, kind: input, shape index: {}]
  %s10 = inlined_call_operand.hbm [shape: f32[8,128], index: 10, kind: output, shape index: {}]
  %s11 = sld [smem:[#allocation0]]
  $region50: #{tpu_custom_call.1} parent=0
    _
  %s13 = ssub.s32 1, %s11
  %s14 = scalar_select 0, %s13, %s11
  $region1: #{tpu_custom_call.1} parent=0
    #allocation2 [shape = 'u8[4096]{0}', space=vmem, size = 0x1000, scoped, tag = 'output window, operand 0, single buffered']
    #allocation3 [shape = 's32[1]{0}', space=sflag, size = 0x4, scoped, tag = 'scoped memory for tpu_custom_call.1']
    %15 = vsyncpa [#allocation3], 0
    // Predicated region
    $region2: #{tpu_custom_call.1} parent=1 // pred_check
      _
    $region3: #{tpu_custom_call.1} parent=1 // pred_check_branch
      %17 = sbr.rel (0) target = $region5
    $region4: #{tpu_custom_call.1} parent=1 // pred_region
      _
    $region5: #{tpu_custom_call.1} parent=1 // pred_fallthru
      _
    // Predicated region
    $region6: #{tpu_custom_call.1} parent=1 // pred_check
      _
    $region7: #{tpu_custom_call.1} parent=1 // pred_check_branch
      %19 = sbr.rel (0) target = $region9
    $region8: #{tpu_custom_call.1} parent=1 // pred_region
      _
    $region9: #{tpu_custom_call.1} parent=1 // pred_fallthru
      _
    // Predicated region
    $region10: #{tpu_custom_call.1} parent=1 // pred_check
      _
    $region11: #{tpu_custom_call.1} parent=1 // pred_check_branch
      %21 = sbr.rel (0) target = $region13
    $region12: #{tpu_custom_call.1} parent=1 // pred_region
      _
    $region13: #{tpu_custom_call.1} parent=1 // pred_fallthru
      _
    // Predicated region
    $region14: #{tpu_custom_call.1} parent=1 // pred_check
      _
    $region15: #{tpu_custom_call.1} parent=1 // pred_check_branch
      %23 = sbr.rel (0) target = $region17
    $region16: #{tpu_custom_call.1} parent=1 // pred_region
      _
    $region17: #{tpu_custom_call.1} parent=1 // pred_fallthru
      _
    // Predicated region
    $region18: #{tpu_custom_call.1} parent=1 // pred_check
      _
    $region19: #{tpu_custom_call.1} parent=1 // pred_check_branch
      %25 = sbr.rel (0) target = $region21
    $region20: #{tpu_custom_call.1} parent=1 // pred_region
      _
    $region21: #{tpu_custom_call.1} parent=1 // pred_fallthru
      _
    // Predicated region
    $region22: #{tpu_custom_call.1} parent=1 // pred_check
      _
    $region23: #{tpu_custom_call.1} parent=1 // pred_check_branch
      %27 = sbr.rel (0) target = $region25
    $region24: #{tpu_custom_call.1} parent=1 // pred_region
      _
    $region25: #{tpu_custom_call.1} parent=1 // pred_fallthru
      _
    // Predicated region
    $region26: #{tpu_custom_call.1} parent=1 // pred_check
      _
    $region27: #{tpu_custom_call.1} parent=1 // pred_check_branch
      %29 = sbr.rel (0) target = $region29
    $region28: #{tpu_custom_call.1} parent=1 // pred_region
      _
    $region29: #{tpu_custom_call.1} parent=1 // pred_fallthru
      _
    // Predicated region
    $region30: #{tpu_custom_call.1} parent=1 // pred_check
      _
    $region31: #{tpu_custom_call.1} parent=1 // pred_check_branch
      %31 = sbr.rel (0) target = $region33
    $region32: #{tpu_custom_call.1} parent=1 // pred_region
      _
    $region33: #{tpu_custom_call.1} parent=1 // pred_fallthru
      _
    // Predicated region
    $region34: #{tpu_custom_call.1} parent=1 // pred_check
      _
    $region35: #{tpu_custom_call.1} parent=1 // pred_check_branch
      %33 = sbr.rel (0) target = $region37
    $region36: #{tpu_custom_call.1} parent=1 // pred_region
      _
    $region37: #{tpu_custom_call.1} parent=1 // pred_fallthru
      _
    // Predicated region
    $region38: #{tpu_custom_call.1} parent=1 // pred_check
      _
    $region39: #{tpu_custom_call.1} parent=1 // pred_check_branch
      %35 = sbr.rel (0) target = $region41
    $region40: #{tpu_custom_call.1} parent=1 // pred_region
      _
    $region41: #{tpu_custom_call.1} parent=1 // pred_fallthru
      _
    %v36 = vld [vmem:[%s0] sm:$0xff]
    %v37 = vld [vmem:[%s0 + $0x8] sm:$0xff]
    %v38 = vld [vmem:[%s0 + $0x10] sm:$0xff]
    %v39 = vld [vmem:[%s0 + $0x18] sm:$0xff]
    %v40 = vld [vmem:[%s0 + $0x20] sm:$0xff]
    %v41 = vld [vmem:[%s0 + $0x28] sm:$0xff]
    %v42 = vld [vmem:[%s0 + $0x30] sm:$0xff]
    %v43 = vld [vmem:[%s0 + $0x38] sm:$0xff]
    %v44 = vld [vmem:[%s1] sm:$0xff]
    %v45 = vld [vmem:[%s1 + $0x8] sm:$0xff]
    %v46 = vld [vmem:[%s1 + $0x10] sm:$0xff]
    %v47 = vld [vmem:[%s1 + $0x18] sm:$0xff]
    %v48 = vld [vmem:[%s1 + $0x20] sm:$0xff]
    %v49 = vld [vmem:[%s1 + $0x28] sm:$0xff]
    %v50 = vld [vmem:[%s1 + $0x30] sm:$0xff]
    %v51 = vld [vmem:[%s1 + $0x38] sm:$0xff]
    %v52 = vld [vmem:[%s1 + $0x40] sm:$0xff]
    %v53 = vld [vmem:[%s1 + $0x48] sm:$0xff]
    %v54 = vld [vmem:[%s1 + $0x50] sm:$0xff]
    %v55 = vld [vmem:[%s1 + $0x58] sm:$0xff]
    %v56 = vld [vmem:[%s1 + $0x60] sm:$0xff]
    %v57 = vld [vmem:[%s1 + $0x68] sm:$0xff]
    %v58 = vld [vmem:[%s1 + $0x70] sm:$0xff]
    %v59 = vld [vmem:[%s1 + $0x78] sm:$0xff]
    %v60 = vld [vmem:[%s1 + $0x80] sm:$0xff]
    %v61 = vld [vmem:[%s1 + $0x88] sm:$0xff]
    %v62 = vld [vmem:[%s1 + $0x90] sm:$0xff]
    %v63 = vld [vmem:[%s1 + $0x98] sm:$0xff]
    %v64 = vld [vmem:[%s1 + $0xa0] sm:$0xff]
    %v65 = vld [vmem:[%s1 + $0xa8] sm:$0xff]
    %v66 = vld [vmem:[%s1 + $0xb0] sm:$0xff]
    %v67 = vld [vmem:[%s1 + $0xb8] sm:$0xff]
    %v68 = vld [vmem:[%s1 + $0xc0] sm:$0xff]
    %v69 = vld [vmem:[%s1 + $0xc8] sm:$0xff]
    %v70 = vld [vmem:[%s1 + $0xd0] sm:$0xff]
    %v71 = vld [vmem:[%s1 + $0xd8] sm:$0xff]
    %v72 = vld [vmem:[%s1 + $0xe0] sm:$0xff]
    %v73 = vld [vmem:[%s1 + $0xe8] sm:$0xff]
    %v74 = vld [vmem:[%s1 + $0xf0] sm:$0xff]
    %v75 = vld [vmem:[%s1 + $0xf8] sm:$0xff]
    %v76 = vld [vmem:[%s1 + $0x100] sm:$0xff]
    %v77 = vld [vmem:[%s1 + $0x108] sm:$0xff]
    %v78 = vld [vmem:[%s1 + $0x110] sm:$0xff]
    %v79 = vld [vmem:[%s1 + $0x118] sm:$0xff]
    %v80 = vld [vmem:[%s1 + $0x120] sm:$0xff]
    %v81 = vld [vmem:[%s1 + $0x128] sm:$0xff]
    %v82 = vld [vmem:[%s1 + $0x130] sm:$0xff]
    %v83 = vld [vmem:[%s1 + $0x138] sm:$0xff]
    %v84 = vld [vmem:[%s1 + $0x140] sm:$0xff]
    %v85 = vld [vmem:[%s1 + $0x148] sm:$0xff]
    %v86 = vld [vmem:[%s1 + $0x150] sm:$0xff]
    %v87 = vld [vmem:[%s1 + $0x158] sm:$0xff]
    %v88 = vld [vmem:[%s1 + $0x160] sm:$0xff]
    %v89 = vld [vmem:[%s1 + $0x168] sm:$0xff]
    %v90 = vld [vmem:[%s1 + $0x170] sm:$0xff]
    %v91 = vld [vmem:[%s1 + $0x178] sm:$0xff]
    %v92 = vld [vmem:[%s1 + $0x180] sm:$0xff]
    %v93 = vld [vmem:[%s1 + $0x188] sm:$0xff]
    %v94 = vld [vmem:[%s1 + $0x190] sm:$0xff]
    %v95 = vld [vmem:[%s1 + $0x198] sm:$0xff]
    %v96 = vld [vmem:[%s1 + $0x1a0] sm:$0xff]
    %v97 = vld [vmem:[%s1 + $0x1a8] sm:$0xff]
    %v98 = vld [vmem:[%s1 + $0x1b0] sm:$0xff]
    %v99 = vld [vmem:[%s1 + $0x1b8] sm:$0xff]
    %v100 = vld [vmem:[%s1 + $0x1c0] sm:$0xff]
    %v101 = vld [vmem:[%s1 + $0x1c8] sm:$0xff]
    %v102 = vld [vmem:[%s1 + $0x1d0] sm:$0xff]
    %v103 = vld [vmem:[%s1 + $0x1d8] sm:$0xff]
    %v104 = vld [vmem:[%s1 + $0x1e0] sm:$0xff]
    %v105 = vld [vmem:[%s1 + $0x1e8] sm:$0xff]
    %v106 = vld [vmem:[%s1 + $0x1f0] sm:$0xff]
    %v107 = vld [vmem:[%s1 + $0x1f8] sm:$0xff]
    %v108 = vld [vmem:[%s1 + $0x200] sm:$0xff]
    %v109 = vld [vmem:[%s1 + $0x208] sm:$0xff]
    %v110 = vld [vmem:[%s1 + $0x210] sm:$0xff]
    %v111 = vld [vmem:[%s1 + $0x218] sm:$0xff]
    %v112 = vld [vmem:[%s1 + $0x220] sm:$0xff]
    %v113 = vld [vmem:[%s1 + $0x228] sm:$0xff]
    %v114 = vld [vmem:[%s1 + $0x230] sm:$0xff]
    %v115 = vld [vmem:[%s1 + $0x238] sm:$0xff]
    %v116 = vld [vmem:[%s1 + $0x240] sm:$0xff]
    %v117 = vld [vmem:[%s1 + $0x248] sm:$0xff]
    %v118 = vld [vmem:[%s1 + $0x250] sm:$0xff]
    %v119 = vld [vmem:[%s1 + $0x258] sm:$0xff]
    %v120 = vld [vmem:[%s1 + $0x260] sm:$0xff]
    %v121 = vld [vmem:[%s1 + $0x268] sm:$0xff]
    %v122 = vld [vmem:[%s1 + $0x270] sm:$0xff]
    %v123 = vld [vmem:[%s1 + $0x278] sm:$0xff]
    %v124 = vld [vmem:[%s1 + $0x280] sm:$0xff]
    %v125 = vld [vmem:[%s1 + $0x288] sm:$0xff]
    %v126 = vld [vmem:[%s1 + $0x290] sm:$0xff]
    %v127 = vld [vmem:[%s1 + $0x298] sm:$0xff]
    %v128 = vld [vmem:[%s1 + $0x2a0] sm:$0xff]
    %v129 = vld [vmem:[%s1 + $0x2a8] sm:$0xff]
    %v130 = vld [vmem:[%s1 + $0x2b0] sm:$0xff]
    %v131 = vld [vmem:[%s1 + $0x2b8] sm:$0xff]
    %v132 = vld [vmem:[%s1 + $0x2c0] sm:$0xff]
    %v133 = vld [vmem:[%s1 + $0x2c8] sm:$0xff]
    %v134 = vld [vmem:[%s1 + $0x2d0] sm:$0xff]
    %v135 = vld [vmem:[%s1 + $0x2d8] sm:$0xff]
    %v136 = vld [vmem:[%s1 + $0x2e0] sm:$0xff]
    %v137 = vld [vmem:[%s1 + $0x2e8] sm:$0xff]
    %v138 = vld [vmem:[%s1 + $0x2f0] sm:$0xff]
    %v139 = vld [vmem:[%s1 + $0x2f8] sm:$0xff]
    %v140 = vld [vmem:[%s1 + $0x300] sm:$0xff]
    %v141 = vld [vmem:[%s1 + $0x308] sm:$0xff]
    %v142 = vld [vmem:[%s1 + $0x310] sm:$0xff]
    %v143 = vld [vmem:[%s1 + $0x318] sm:$0xff]
    %v144 = vld [vmem:[%s1 + $0x320] sm:$0xff]
    %v145 = vld [vmem:[%s1 + $0x328] sm:$0xff]
    %v146 = vld [vmem:[%s1 + $0x330] sm:$0xff]
    %v147 = vld [vmem:[%s1 + $0x338] sm:$0xff]
    %v148 = vld [vmem:[%s1 + $0x340] sm:$0xff]
    %v149 = vld [vmem:[%s1 + $0x348] sm:$0xff]
    %v150 = vld [vmem:[%s1 + $0x350] sm:$0xff]
    %v151 = vld [vmem:[%s1 + $0x358] sm:$0xff]
    %v152 = vld [vmem:[%s1 + $0x360] sm:$0xff]
    %v153 = vld [vmem:[%s1 + $0x368] sm:$0xff]
    %v154 = vld [vmem:[%s1 + $0x370] sm:$0xff]
    %v155 = vld [vmem:[%s1 + $0x378] sm:$0xff]
    %v156 = vld [vmem:[%s1 + $0x380] sm:$0xff]
    %v157 = vld [vmem:[%s1 + $0x388] sm:$0xff]
    %v158 = vld [vmem:[%s1 + $0x390] sm:$0xff]
    %v159 = vld [vmem:[%s1 + $0x398] sm:$0xff]
    %v160 = vld [vmem:[%s1 + $0x3a0] sm:$0xff]
    %v161 = vld [vmem:[%s1 + $0x3a8] sm:$0xff]
    %v162 = vld [vmem:[%s1 + $0x3b0] sm:$0xff]
    %v163 = vld [vmem:[%s1 + $0x3b8] sm:$0xff]
    %v164 = vld [vmem:[%s1 + $0x3c0] sm:$0xff]
    %v165 = vld [vmem:[%s1 + $0x3c8] sm:$0xff]
    %v166 = vld [vmem:[%s1 + $0x3d0] sm:$0xff]
    %v167 = vld [vmem:[%s1 + $0x3d8] sm:$0xff]
    %v168 = vld [vmem:[%s1 + $0x3e0] sm:$0xff]
    %v169 = vld [vmem:[%s1 + $0x3e8] sm:$0xff]
    %v170 = vld [vmem:[%s1 + $0x3f0] sm:$0xff]
    %v171 = vld [vmem:[%s1 + $0x3f8] sm:$0xff]
    %v172 = vld [vmem:[%s2] sm:$0x1]
    %v174 = vlaneseq
    %v175 = vshrl.u32 %v174, 7
    %v176 = vsub.s32 0, %v175
    %v177 = vrot.slane %v172, %v176
    %179 = vmatprep.subr.mxu0 0.0
    %v180 = vand.u32 %v44, 4294901760
    %181 = vmatpush1.msra.mxu0 %v180
    %182 = vmatprep.subr.mxu0 0.0
    %v183 = vand.u32 %v45, 4294901760
    %184 = vmatpush1.msra.mxu0 %v183
    %185 = vmatprep.subr.mxu0 0.0
    %v186 = vand.u32 %v46, 4294901760
    %187 = vmatpush1.msra.mxu0 %v186
    %188 = vmatprep.subr.mxu0 0.0
    %v189 = vand.u32 %v47, 4294901760
    %190 = vmatpush1.msra.mxu0 %v189
    %191 = vmatprep.subr.mxu0 0.0
    %v192 = vand.u32 %v48, 4294901760
    %193 = vmatpush1.msra.mxu0 %v192
    %194 = vmatprep.subr.mxu0 0.0
    %v195 = vand.u32 %v49, 4294901760
    %196 = vmatpush1.msra.mxu0 %v195
    %197 = vmatprep.subr.mxu0 0.0
    %v198 = vand.u32 %v50, 4294901760
    %199 = vmatpush1.msra.mxu0 %v198
    %200 = vmatprep.subr.mxu0 0.0
    %v201 = vand.u32 %v51, 4294901760
    %202 = vmatpush1.msra.mxu0 %v201
    %203 = vmatprep.subr.mxu0 0.0
    %v204 = vand.u32 %v52, 4294901760
    %205 = vmatpush1.msra.mxu0 %v204
    %206 = vmatprep.subr.mxu0 0.0
    %v207 = vand.u32 %v53, 4294901760
    %208 = vmatpush1.msra.mxu0 %v207
    %209 = vmatprep.subr.mxu0 0.0
    %v210 = vand.u32 %v54, 4294901760
    %211 = vmatpush1.msra.mxu0 %v210
    %212 = vmatprep.subr.mxu0 0.0
    %v213 = vand.u32 %v55, 4294901760
    %214 = vmatpush1.msra.mxu0 %v213
    %215 = vmatprep.subr.mxu0 0.0
    %v216 = vand.u32 %v56, 4294901760
    %217 = vmatpush1.msra.mxu0 %v216
    %218 = vmatprep.subr.mxu0 0.0
    %v219 = vand.u32 %v57, 4294901760
    %220 = vmatpush1.msra.mxu0 %v219
    %221 = vmatprep.subr.mxu0 0.0
    %v222 = vand.u32 %v58, 4294901760
    %223 = vmatpush1.msra.mxu0 %v222
    %224 = vmatprep.subr.mxu0 0.0
    %v225 = vand.u32 %v59, 4294901760
    %226 = vmatpush1.msra.mxu0 %v225
    %227 = vmatprep.subr.mxu0 0.0
    %v228 = vand.u32 %v60, 4294901760
    %229 = vmatpush1.msra.mxu0 %v228
    %230 = vmatprep.subr.mxu0 0.0
    %v231 = vand.u32 %v61, 4294901760
    %232 = vmatpush1.msra.mxu0 %v231
    %233 = vmatprep.subr.mxu0 0.0
    %v234 = vand.u32 %v62, 4294901760
    %235 = vmatpush1.msra.mxu0 %v234
    %236 = vmatprep.subr.mxu0 0.0
    %v237 = vand.u32 %v63, 4294901760
    %238 = vmatpush1.msra.mxu0 %v237
    %239 = vmatprep.subr.mxu0 0.0
    %v240 = vand.u32 %v64, 4294901760
    %241 = vmatpush1.msra.mxu0 %v240
    %242 = vmatprep.subr.mxu0 0.0
    %v243 = vand.u32 %v65, 4294901760
    %244 = vmatpush1.msra.mxu0 %v243
    %245 = vmatprep.subr.mxu0 0.0
    %v246 = vand.u32 %v66, 4294901760
    %247 = vmatpush1.msra.mxu0 %v246
    %248 = vmatprep.subr.mxu0 0.0
    %v249 = vand.u32 %v67, 4294901760
    %250 = vmatpush1.msra.mxu0 %v249
    %251 = vmatprep.subr.mxu0 0.0
    %v252 = vand.u32 %v68, 4294901760
    %253 = vmatpush1.msra.mxu0 %v252
    %254 = vmatprep.subr.mxu0 0.0
    %v255 = vand.u32 %v69, 4294901760
    %256 = vmatpush1.msra.mxu0 %v255
    %257 = vmatprep.subr.mxu0 0.0
    %v258 = vand.u32 %v70, 4294901760
    %259 = vmatpush1.msra.mxu0 %v258
    %260 = vmatprep.subr.mxu0 0.0
    %v261 = vand.u32 %v71, 4294901760
    %262 = vmatpush1.msra.mxu0 %v261
    %263 = vmatprep.subr.mxu0 0.0
    %v264 = vand.u32 %v72, 4294901760
    %265 = vmatpush1.msra.mxu0 %v264
    %266 = vmatprep.subr.mxu0 0.0
    %v267 = vand.u32 %v73, 4294901760
    %268 = vmatpush1.msra.mxu0 %v267
    %269 = vmatprep.subr.mxu0 0.0
    %v270 = vand.u32 %v74, 4294901760
    %271 = vmatpush1.msra.mxu0 %v270
    %272 = vmatprep.subr.mxu0 0.0
    %v273 = vand.u32 %v75, 4294901760
    %274 = vmatpush1.msra.mxu0 %v273
    %v275 = vand.u32 %v37, 4294901760
    %v276 = vsub.f32 %v37, %v275
    %v277 = vand.u32 %v276, 4294901760
    %v278 = vsub.f32 %v276, %v277
    %v279 = vand.u32 %v278, 4294901760
    %280 = vmatprep.mubr.f32.mxu0 %v279
    %v281 = vand.u32 %v36, 4294901760
    %v282 = vsub.f32 %v36, %v281
    %v283 = vand.u32 %v282, 4294901760
    %v284 = vsub.f32 %v282, %v283
    %v285 = vand.u32 %v284, 4294901760
    %286 = vmatmul.mubr.f32.gmra.mrb[0].mxu0 %v285
    %v287 = vpop.f32.mrb[0].mxu0
    %v288 = vadd.f32 %v177, %v287
    %v289 = vpop.f32.mrb[0].mxu0
    %290 = vdwg.mxu0
    %291 = vmatprep.subr.mxu0 0.0
    %v292 = vand.u32 %v44, 4294901760
    %v293 = vsub.f32 %v44, %v292
    %v294 = vand.u32 %v293, 4294901760
    %v295 = vsub.f32 %v293, %v294
    %v296 = vand.u32 %v295, 4294901760
    %297 = vmatpush1.msra.mxu0 %v296
    %298 = vmatprep.subr.mxu0 0.0
    %v299 = vand.u32 %v45, 4294901760
    %v300 = vsub.f32 %v45, %v299
    %v301 = vand.u32 %v300, 4294901760
    %v302 = vsub.f32 %v300, %v301
    %v303 = vand.u32 %v302, 4294901760
    %304 = vmatpush1.msra.mxu0 %v303
    %305 = vmatprep.subr.mxu0 0.0
    %v306 = vand.u32 %v46, 4294901760
    %v307 = vsub.f32 %v46, %v306
    %v308 = vand.u32 %v307, 4294901760
    %v309 = vsub.f32 %v307, %v308
    %v310 = vand.u32 %v309, 4294901760
    %311 = vmatpush1.msra.mxu0 %v310
    %312 = vmatprep.subr.mxu0 0.0
    %v313 = vand.u32 %v47, 4294901760
    %v314 = vsub.f32 %v47, %v313
    %v315 = vand.u32 %v314, 4294901760
    %v316 = vsub.f32 %v314, %v315
    %v317 = vand.u32 %v316, 4294901760
    %318 = vmatpush1.msra.mxu0 %v317
    %319 = vmatprep.subr.mxu0 0.0
    %v320 = vand.u32 %v48, 4294901760
    %v321 = vsub.f32 %v48, %v320
    %v322 = vand.u32 %v321, 4294901760
    %v323 = vsub.f32 %v321, %v322
    %v324 = vand.u32 %v323, 4294901760
    %325 = vmatpush1.msra.mxu0 %v324
    %326 = vmatprep.subr.mxu0 0.0
    %v327 = vand.u32 %v49, 4294901760
    %v328 = vsub.f32 %v49, %v327
    %v329 = vand.u32 %v328, 4294901760
    %v330 = vsub.f32 %v328, %v329
    %v331 = vand.u32 %v330, 4294901760
    %332 = vmatpush1.msra.mxu0 %v331
    %333 = vmatprep.subr.mxu0 0.0
    %v334 = vand.u32 %v50, 4294901760
    %v335 = vsub.f32 %v50, %v334
    %v336 = vand.u32 %v335, 4294901760
    %v337 = vsub.f32 %v335, %v336
    %v338 = vand.u32 %v337, 4294901760
    %339 = vmatpush1.msra.mxu0 %v338
    %340 = vmatprep.subr.mxu0 0.0
    %v341 = vand.u32 %v51, 4294901760
    %v342 = vsub.f32 %v51, %v341
    %v343 = vand.u32 %v342, 4294901760
    %v344 = vsub.f32 %v342, %v343
    %v345 = vand.u32 %v344, 4294901760
    %346 = vmatpush1.msra.mxu0 %v345
    %347 = vmatprep.subr.mxu0 0.0
    %v348 = vand.u32 %v52, 4294901760
    %v349 = vsub.f32 %v52, %v348
    %v350 = vand.u32 %v349, 4294901760
    %v351 = vsub.f32 %v349, %v350
    %v352 = vand.u32 %v351, 4294901760
    %353 = vmatpush1.msra.mxu0 %v352
    %354 = vmatprep.subr.mxu0 0.0
    %v355 = vand.u32 %v53, 4294901760
    %v356 = vsub.f32 %v53, %v355
    %v357 = vand.u32 %v356, 4294901760
    %v358 = vsub.f32 %v356, %v357
    %v359 = vand.u32 %v358, 4294901760
    %360 = vmatpush1.msra.mxu0 %v359
    %361 = vmatprep.subr.mxu0 0.0
    %v362 = vand.u32 %v54, 4294901760
    %v363 = vsub.f32 %v54, %v362
    %v364 = vand.u32 %v363, 4294901760
    %v365 = vsub.f32 %v363, %v364
    %v366 = vand.u32 %v365, 4294901760
    %367 = vmatpush1.msra.mxu0 %v366
    %368 = vmatprep.subr.mxu0 0.0
    %v369 = vand.u32 %v55, 4294901760
    %v370 = vsub.f32 %v55, %v369
    %v371 = vand.u32 %v370, 4294901760
    %v372 = vsub.f32 %v370, %v371
    %v373 = vand.u32 %v372, 4294901760
    %374 = vmatpush1.msra.mxu0 %v373
    %375 = vmatprep.subr.mxu0 0.0
    %v376 = vand.u32 %v56, 4294901760
    %v377 = vsub.f32 %v56, %v376
    %v378 = vand.u32 %v377, 4294901760
    %v379 = vsub.f32 %v377, %v378
    %v380 = vand.u32 %v379, 4294901760
    %381 = vmatpush1.msra.mxu0 %v380
    %382 = vmatprep.subr.mxu0 0.0
    %v383 = vand.u32 %v57, 4294901760
    %v384 = vsub.f32 %v57, %v383
    %v385 = vand.u32 %v384, 4294901760
    %v386 = vsub.f32 %v384, %v385
    %v387 = vand.u32 %v386, 4294901760
    %388 = vmatpush1.msra.mxu0 %v387
    %389 = vmatprep.subr.mxu0 0.0
    %v390 = vand.u32 %v58, 4294901760
    %v391 = vsub.f32 %v58, %v390
    %v392 = vand.u32 %v391, 4294901760
    %v393 = vsub.f32 %v391, %v392
    %v394 = vand.u32 %v393, 4294901760
    %395 = vmatpush1.msra.mxu0 %v394
    %396 = vmatprep.subr.mxu0 0.0
    %v397 = vand.u32 %v59, 4294901760
    %v398 = vsub.f32 %v59, %v397
    %v399 = vand.u32 %v398, 4294901760
    %v400 = vsub.f32 %v398, %v399
    %v401 = vand.u32 %v400, 4294901760
    %402 = vmatpush1.msra.mxu0 %v401
    %403 = vmatprep.subr.mxu0 0.0
    %v404 = vand.u32 %v60, 4294901760
    %v405 = vsub.f32 %v60, %v404
    %v406 = vand.u32 %v405, 4294901760
    %v407 = vsub.f32 %v405, %v406
    %v408 = vand.u32 %v407, 4294901760
    %409 = vmatpush1.msra.mxu0 %v408
    %410 = vmatprep.subr.mxu0 0.0
    %v411 = vand.u32 %v61, 4294901760
    %v412 = vsub.f32 %v61, %v411
    %v413 = vand.u32 %v412, 4294901760
    %v414 = vsub.f32 %v412, %v413
    %v415 = vand.u32 %v414, 4294901760
    %416 = vmatpush1.msra.mxu0 %v415
    %417 = vmatprep.subr.mxu0 0.0
    %v418 = vand.u32 %v62, 4294901760
    %v419 = vsub.f32 %v62, %v418
    %v420 = vand.u32 %v419, 4294901760
    %v421 = vsub.f32 %v419, %v420
    %v422 = vand.u32 %v421, 4294901760
    %423 = vmatpush1.msra.mxu0 %v422
    %424 = vmatprep.subr.mxu0 0.0
    %v425 = vand.u32 %v63, 4294901760
    %v426 = vsub.f32 %v63, %v425
    %v427 = vand.u32 %v426, 4294901760
    %v428 = vsub.f32 %v426, %v427
    %v429 = vand.u32 %v428, 4294901760
    %430 = vmatpush1.msra.mxu0 %v429
    %431 = vmatprep.subr.mxu0 0.0
    %v432 = vand.u32 %v64, 4294901760
    %v433 = vsub.f32 %v64, %v432
    %v434 = vand.u32 %v433, 4294901760
    %v435 = vsub.f32 %v433, %v434
    %v436 = vand.u32 %v435, 4294901760
    %437 = vmatpush1.msra.mxu0 %v436
    %438 = vmatprep.subr.mxu0 0.0
    %v439 = vand.u32 %v65, 4294901760
    %v440 = vsub.f32 %v65, %v439
    %v441 = vand.u32 %v440, 4294901760
    %v442 = vsub.f32 %v440, %v441
    %v443 = vand.u32 %v442, 4294901760
    %444 = vmatpush1.msra.mxu0 %v443
    %445 = vmatprep.subr.mxu0 0.0
    %v446 = vand.u32 %v66, 4294901760
    %v447 = vsub.f32 %v66, %v446
    %v448 = vand.u32 %v447, 4294901760
    %v449 = vsub.f32 %v447, %v448
    %v450 = vand.u32 %v449, 4294901760
    %451 = vmatpush1.msra.mxu0 %v450
    %452 = vmatprep.subr.mxu0 0.0
    %v453 = vand.u32 %v67, 4294901760
    %v454 = vsub.f32 %v67, %v453
    %v455 = vand.u32 %v454, 4294901760
    %v456 = vsub.f32 %v454, %v455
    %v457 = vand.u32 %v456, 4294901760
    %458 = vmatpush1.msra.mxu0 %v457
    %459 = vmatprep.subr.mxu0 0.0
    %v460 = vand.u32 %v68, 4294901760
    %v461 = vsub.f32 %v68, %v460
    %v462 = vand.u32 %v461, 4294901760
    %v463 = vsub.f32 %v461, %v462
    %v464 = vand.u32 %v463, 4294901760
    %465 = vmatpush1.msra.mxu0 %v464
    %466 = vmatprep.subr.mxu0 0.0
    %v467 = vand.u32 %v69, 4294901760
    %v468 = vsub.f32 %v69, %v467
    %v469 = vand.u32 %v468, 4294901760
    %v470 = vsub.f32 %v468, %v469
    %v471 = vand.u32 %v470, 4294901760
    %472 = vmatpush1.msra.mxu0 %v471
    %473 = vmatprep.subr.mxu0 0.0
    %v474 = vand.u32 %v70, 4294901760
    %v475 = vsub.f32 %v70, %v474
    %v476 = vand.u32 %v475, 4294901760
    %v477 = vsub.f32 %v475, %v476
    %v478 = vand.u32 %v477, 4294901760
    %479 = vmatpush1.msra.mxu0 %v478
    %480 = vmatprep.subr.mxu0 0.0
    %v481 = vand.u32 %v71, 4294901760
    %v482 = vsub.f32 %v71, %v481
    %v483 = vand.u32 %v482, 4294901760
    %v484 = vsub.f32 %v482, %v483
    %v485 = vand.u32 %v484, 4294901760
    %486 = vmatpush1.msra.mxu0 %v485
    %487 = vmatprep.subr.mxu0 0.0
    %v488 = vand.u32 %v72, 4294901760
    %v489 = vsub.f32 %v72, %v488
    %v490 = vand.u32 %v489, 4294901760
    %v491 = vsub.f32 %v489, %v490
    %v492 = vand.u32 %v491, 4294901760
    %493 = vmatpush1.msra.mxu0 %v492
    %494 = vmatprep.subr.mxu0 0.0
    %v495 = vand.u32 %v73, 4294901760
    %v496 = vsub.f32 %v73, %v495
    %v497 = vand.u32 %v496, 4294901760
    %v498 = vsub.f32 %v496, %v497
    %v499 = vand.u32 %v498, 4294901760
    %500 = vmatpush1.msra.mxu0 %v499
    %501 = vmatprep.subr.mxu0 0.0
    %v502 = vand.u32 %v74, 4294901760
    %v503 = vsub.f32 %v74, %v502
    %v504 = vand.u32 %v503, 4294901760
    %v505 = vsub.f32 %v503, %v504
    %v506 = vand.u32 %v505, 4294901760
    %507 = vmatpush1.msra.mxu0 %v506
    %508 = vmatprep.subr.mxu0 0.0
    %v509 = vand.u32 %v75, 4294901760
    %v510 = vsub.f32 %v75, %v509
    %v511 = vand.u32 %v510, 4294901760
    %v512 = vsub.f32 %v510, %v511
    %v513 = vand.u32 %v512, 4294901760
    %514 = vmatpush1.msra.mxu0 %v513
    %v515 = vand.u32 %v37, 4294901760
    %516 = vmatprep.mubr.f32.mxu0 %v515
    %v517 = vand.u32 %v36, 4294901760
    %518 = vmatmul.mubr.f32.gmra.mrb[0].mxu0 %v517
    %v519 = vpop.f32.mrb[0].mxu0
    %v520 = vadd.f32 %v288, %v519
    %v521 = vpop.f32.mrb[0].mxu0
    %522 = vdwg.mxu0
    %523 = vmatprep.subr.mxu0 0.0
    %v524 = vand.u32 %v44, 4294901760
    %v525 = vsub.f32 %v44, %v524
    %526 = vmatpush1.msra.mxu0 %v525
    %527 = vmatprep.subr.mxu0 0.0
    %v528 = vand.u32 %v45, 4294901760
    %v529 = vsub.f32 %v45, %v528
    %530 = vmatpush1.msra.mxu0 %v529
    %531 = vmatprep.subr.mxu0 0.0
    %v532 = vand.u32 %v46, 4294901760
    %v533 = vsub.f32 %v46, %v532
    %534 = vmatpush1.msra.mxu0 %v533
    %535 = vmatprep.subr.mxu0 0.0
    %v536 = vand.u32 %v47, 4294901760
    %v537 = vsub.f32 %v47, %v536
    %538 = vmatpush1.msra.mxu0 %v537
    %539 = vmatprep.subr.mxu0 0.0
    %v540 = vand.u32 %v48, 4294901760
    %v541 = vsub.f32 %v48, %v540
    %542 = vmatpush1.msra.mxu0 %v541
    %543 = vmatprep.subr.mxu0 0.0
    %v544 = vand.u32 %v49, 4294901760
    %v545 = vsub.f32 %v49, %v544
    %546 = vmatpush1.msra.mxu0 %v545
    %547 = vmatprep.subr.mxu0 0.0
    %v548 = vand.u32 %v50, 4294901760
    %v549 = vsub.f32 %v50, %v548
    %550 = vmatpush1.msra.mxu0 %v549
    %551 = vmatprep.subr.mxu0 0.0
    %v552 = vand.u32 %v51, 4294901760
    %v553 = vsub.f32 %v51, %v552
    %554 = vmatpush1.msra.mxu0 %v553
    %555 = vmatprep.subr.mxu0 0.0
    %v556 = vand.u32 %v52, 4294901760
    %v557 = vsub.f32 %v52, %v556
    %558 = vmatpush1.msra.mxu0 %v557
    %559 = vmatprep.subr.mxu0 0.0
    %v560 = vand.u32 %v53, 4294901760
    %v561 = vsub.f32 %v53, %v560
    %562 = vmatpush1.msra.mxu0 %v561
    %563 = vmatprep.subr.mxu0 0.0
    %v564 = vand.u32 %v54, 4294901760
    %v565 = vsub.f32 %v54, %v564
    %566 = vmatpush1.msra.mxu0 %v565
    %567 = vmatprep.subr.mxu0 0.0
    %v568 = vand.u32 %v55, 4294901760
    %v569 = vsub.f32 %v55, %v568
    %570 = vmatpush1.msra.mxu0 %v569
    %571 = vmatprep.subr.mxu0 0.0
    %v572 = vand.u32 %v56, 4294901760
    %v573 = vsub.f32 %v56, %v572
    %574 = vmatpush1.msra.mxu0 %v573
    %575 = vmatprep.subr.mxu0 0.0
    %v576 = vand.u32 %v57, 4294901760
    %v577 = vsub.f32 %v57, %v576
    %578 = vmatpush1.msra.mxu0 %v577
    %579 = vmatprep.subr.mxu0 0.0
    %v580 = vand.u32 %v58, 4294901760
    %v581 = vsub.f32 %v58, %v580
    %582 = vmatpush1.msra.mxu0 %v581
    %583 = vmatprep.subr.mxu0 0.0
    %v584 = vand.u32 %v59, 4294901760
    %v585 = vsub.f32 %v59, %v584
    %586 = vmatpush1.msra.mxu0 %v585
    %587 = vmatprep.subr.mxu0 0.0
    %v588 = vand.u32 %v60, 4294901760
    %v589 = vsub.f32 %v60, %v588
    %590 = vmatpush1.msra.mxu0 %v589
    %591 = vmatprep.subr.mxu0 0.0
    %v592 = vand.u32 %v61, 4294901760
    %v593 = vsub.f32 %v61, %v592
    %594 = vmatpush1.msra.mxu0 %v593
    %595 = vmatprep.subr.mxu0 0.0
    %v596 = vand.u32 %v62, 4294901760
    %v597 = vsub.f32 %v62, %v596
    %598 = vmatpush1.msra.mxu0 %v597
    %599 = vmatprep.subr.mxu0 0.0
    %v600 = vand.u32 %v63, 4294901760
    %v601 = vsub.f32 %v63, %v600
    %602 = vmatpush1.msra.mxu0 %v601
    %603 = vmatprep.subr.mxu0 0.0
    %v604 = vand.u32 %v64, 4294901760
    %v605 = vsub.f32 %v64, %v604
    %606 = vmatpush1.msra.mxu0 %v605
    %607 = vmatprep.subr.mxu0 0.0
    %v608 = vand.u32 %v65, 4294901760
    %v609 = vsub.f32 %v65, %v608
    %610 = vmatpush1.msra.mxu0 %v609
    %611 = vmatprep.subr.mxu0 0.0
    %v612 = vand.u32 %v66, 4294901760
    %v613 = vsub.f32 %v66, %v612
    %614 = vmatpush1.msra.mxu0 %v613
    %615 = vmatprep.subr.mxu0 0.0
    %v616 = vand.u32 %v67, 4294901760
    %v617 = vsub.f32 %v67, %v616
    %618 = vmatpush1.msra.mxu0 %v617
    %619 = vmatprep.subr.mxu0 0.0
    %v620 = vand.u32 %v68, 4294901760
    %v621 = vsub.f32 %v68, %v620
    %622 = vmatpush1.msra.mxu0 %v621
    %623 = vmatprep.subr.mxu0 0.0
    %v624 = vand.u32 %v69, 4294901760
    %v625 = vsub.f32 %v69, %v624
    %626 = vmatpush1.msra.mxu0 %v625
    %627 = vmatprep.subr.mxu0 0.0
    %v628 = vand.u32 %v70, 4294901760
    %v629 = vsub.f32 %v70, %v628
    %630 = vmatpush1.msra.mxu0 %v629
    %631 = vmatprep.subr.mxu0 0.0
    %v632 = vand.u32 %v71, 4294901760
    %v633 = vsub.f32 %v71, %v632
    %634 = vmatpush1.msra.mxu0 %v633
    %635 = vmatprep.subr.mxu0 0.0
    %v636 = vand.u32 %v72, 4294901760
    %v637 = vsub.f32 %v72, %v636
    %638 = vmatpush1.msra.mxu0 %v637
    %639 = vmatprep.subr.mxu0 0.0
    %v640 = vand.u32 %v73, 4294901760
    %v641 = vsub.f32 %v73, %v640
    %642 = vmatpush1.msra.mxu0 %v641
    %643 = vmatprep.subr.mxu0 0.0
    %v644 = vand.u32 %v74, 4294901760
    %v645 = vsub.f32 %v74, %v644
    %646 = vmatpush1.msra.mxu0 %v645
    %647 = vmatprep.subr.mxu0 0.0
    %v648 = vand.u32 %v75, 4294901760
    %v649 = vsub.f32 %v75, %v648
    %650 = vmatpush1.msra.mxu0 %v649
    %v651 = vand.u32 %v37, 4294901760
    %v652 = vsub.f32 %v37, %v651
    %653 = vmatprep.mubr.f32.mxu0 %v652
    %v654 = vand.u32 %v36, 4294901760
    %v655 = vsub.f32 %v36, %v654
    %656 = vmatmul.mubr.f32.gmra.mrb[0].mxu0 %v655
    %v657 = vpop.f32.mrb[0].mxu0
    %v658 = vadd.f32 %v520, %v657
    %v659 = vpop.f32.mrb[0].mxu0
    %660 = vdwg.mxu0
    %661 = vmatprep.subr.mxu0 0.0
    %v662 = vand.u32 %v44, 4294901760
    %663 = vmatpush1.msra.mxu0 %v662
    %664 = vmatprep.subr.mxu0 0.0
    %v665 = vand.u32 %v45, 4294901760
    %666 = vmatpush1.msra.mxu0 %v665
    %667 = vmatprep.subr.mxu0 0.0
    %v668 = vand.u32 %v46, 4294901760
    %669 = vmatpush1.msra.mxu0 %v668
    %670 = vmatprep.subr.mxu0 0.0
    %v671 = vand.u32 %v47, 4294901760
    %672 = vmatpush1.msra.mxu0 %v671
    %673 = vmatprep.subr.mxu0 0.0
    %v674 = vand.u32 %v48, 4294901760
    %675 = vmatpush1.msra.mxu0 %v674
    %676 = vmatprep.subr.mxu0 0.0
    %v677 = vand.u32 %v49, 4294901760
    %678 = vmatpush1.msra.mxu0 %v677
    %679 = vmatprep.subr.mxu0 0.0
    %v680 = vand.u32 %v50, 4294901760
    %681 = vmatpush1.msra.mxu0 %v680
    %682 = vmatprep.subr.mxu0 0.0
    %v683 = vand.u32 %v51, 4294901760
    %684 = vmatpush1.msra.mxu0 %v683
    %685 = vmatprep.subr.mxu0 0.0
    %v686 = vand.u32 %v52, 4294901760
    %687 = vmatpush1.msra.mxu0 %v686
    %688 = vmatprep.subr.mxu0 0.0
    %v689 = vand.u32 %v53, 4294901760
    %690 = vmatpush1.msra.mxu0 %v689
    %691 = vmatprep.subr.mxu0 0.0
    %v692 = vand.u32 %v54, 4294901760
    %693 = vmatpush1.msra.mxu0 %v692
    %694 = vmatprep.subr.mxu0 0.0
    %v695 = vand.u32 %v55, 4294901760
    %696 = vmatpush1.msra.mxu0 %v695
    %697 = vmatprep.subr.mxu0 0.0
    %v698 = vand.u32 %v56, 4294901760
    %699 = vmatpush1.msra.mxu0 %v698
    %700 = vmatprep.subr.mxu0 0.0
    %v701 = vand.u32 %v57, 4294901760
    %702 = vmatpush1.msra.mxu0 %v701
    %703 = vmatprep.subr.mxu0 0.0
    %v704 = vand.u32 %v58, 4294901760
    %705 = vmatpush1.msra.mxu0 %v704
    %706 = vmatprep.subr.mxu0 0.0
    %v707 = vand.u32 %v59, 4294901760
    %708 = vmatpush1.msra.mxu0 %v707
    %709 = vmatprep.subr.mxu0 0.0
    %v710 = vand.u32 %v60, 4294901760
    %711 = vmatpush1.msra.mxu0 %v710
    %712 = vmatprep.subr.mxu0 0.0
    %v713 = vand.u32 %v61, 4294901760
    %714 = vmatpush1.msra.mxu0 %v713
    %715 = vmatprep.subr.mxu0 0.0
    %v716 = vand.u32 %v62, 4294901760
    %717 = vmatpush1.msra.mxu0 %v716
    %718 = vmatprep.subr.mxu0 0.0
    %v719 = vand.u32 %v63, 4294901760
    %720 = vmatpush1.msra.mxu0 %v719
    %721 = vmatprep.subr.mxu0 0.0
    %v722 = vand.u32 %v64, 4294901760
    %723 = vmatpush1.msra.mxu0 %v722
    %724 = vmatprep.subr.mxu0 0.0
    %v725 = vand.u32 %v65, 4294901760
    %726 = vmatpush1.msra.mxu0 %v725
    %727 = vmatprep.subr.mxu0 0.0
    %v728 = vand.u32 %v66, 4294901760
    %729 = vmatpush1.msra.mxu0 %v728
    %730 = vmatprep.subr.mxu0 0.0
    %v731 = vand.u32 %v67, 4294901760
    %732 = vmatpush1.msra.mxu0 %v731
    %733 = vmatprep.subr.mxu0 0.0
    %v734 = vand.u32 %v68, 4294901760
    %735 = vmatpush1.msra.mxu0 %v734
    %736 = vmatprep.subr.mxu0 0.0
    %v737 = vand.u32 %v69, 4294901760
    %738 = vmatpush1.msra.mxu0 %v737
    %739 = vmatprep.subr.mxu0 0.0
    %v740 = vand.u32 %v70, 4294901760
    %741 = vmatpush1.msra.mxu0 %v740
    %742 = vmatprep.subr.mxu0 0.0
    %v743 = vand.u32 %v71, 4294901760
    %744 = vmatpush1.msra.mxu0 %v743
    %745 = vmatprep.subr.mxu0 0.0
    %v746 = vand.u32 %v72, 4294901760
    %747 = vmatpush1.msra.mxu0 %v746
    %748 = vmatprep.subr.mxu0 0.0
    %v749 = vand.u32 %v73, 4294901760
    %750 = vmatpush1.msra.mxu0 %v749
    %751 = vmatprep.subr.mxu0 0.0
    %v752 = vand.u32 %v74, 4294901760
    %753 = vmatpush1.msra.mxu0 %v752
    %754 = vmatprep.subr.mxu0 0.0
    %v755 = vand.u32 %v75, 4294901760
    %756 = vmatpush1.msra.mxu0 %v755
    %v757 = vand.u32 %v37, 4294901760
    %v758 = vsub.f32 %v37, %v757
    %v759 = vand.u32 %v758, 4294901760
    %760 = vmatprep.mubr.f32.mxu0 %v759
    %v761 = vand.u32 %v36, 4294901760
    %v762 = vsub.f32 %v36, %v761
    %v763 = vand.u32 %v762, 4294901760
    %764 = vmatmul.mubr.f32.gmra.mrb[0].mxu0 %v763
    %v765 = vpop.f32.mrb[0].mxu0
    %v766 = vadd.f32 %v658, %v765
    %v767 = vpop.f32.mrb[0].mxu0
    %768 = vdwg.mxu0
    %769 = vmatprep.subr.mxu0 0.0
    %v770 = vand.u32 %v44, 4294901760
    %v771 = vsub.f32 %v44, %v770
    %v772 = vand.u32 %v771, 4294901760
    %773 = vmatpush1.msra.mxu0 %v772
    %774 = vmatprep.subr.mxu0 0.0
    %v775 = vand.u32 %v45, 4294901760
    %v776 = vsub.f32 %v45, %v775
    %v777 = vand.u32 %v776, 4294901760
    %778 = vmatpush1.msra.mxu0 %v777
    %779 = vmatprep.subr.mxu0 0.0
    %v780 = vand.u32 %v46, 4294901760
    %v781 = vsub.f32 %v46, %v780
    %v782 = vand.u32 %v781, 4294901760
    %783 = vmatpush1.msra.mxu0 %v782
    %784 = vmatprep.subr.mxu0 0.0
    %v785 = vand.u32 %v47, 4294901760
    %v786 = vsub.f32 %v47, %v785
    %v787 = vand.u32 %v786, 4294901760
    %788 = vmatpush1.msra.mxu0 %v787
    %789 = vmatprep.subr.mxu0 0.0
    %v790 = vand.u32 %v48, 4294901760
    %v791 = vsub.f32 %v48, %v790
    %v792 = vand.u32 %v791, 4294901760
    %793 = vmatpush1.msra.mxu0 %v792
    %794 = vmatprep.subr.mxu0 0.0
    %v795 = vand.u32 %v49, 4294901760
    %v796 = vsub.f32 %v49, %v795
    %v797 = vand.u32 %v796, 4294901760
    %798 = vmatpush1.msra.mxu0 %v797
    %799 = vmatprep.subr.mxu0 0.0
    %v800 = vand.u32 %v50, 4294901760
    %v801 = vsub.f32 %v50, %v800
    %v802 = vand.u32 %v801, 4294901760
    %803 = vmatpush1.msra.mxu0 %v802
    %804 = vmatprep.subr.mxu0 0.0
    %v805 = vand.u32 %v51, 4294901760
    %v806 = vsub.f32 %v51, %v805
    %v807 = vand.u32 %v806, 4294901760
    %808 = vmatpush1.msra.mxu0 %v807
    %809 = vmatprep.subr.mxu0 0.0
    %v810 = vand.u32 %v52, 4294901760
    %v811 = vsub.f32 %v52, %v810
    %v812 = vand.u32 %v811, 4294901760
    %813 = vmatpush1.msra.mxu0 %v812
    %814 = vmatprep.subr.mxu0 0.0
    %v815 = vand.u32 %v53, 4294901760
    %v816 = vsub.f32 %v53, %v815
    %v817 = vand.u32 %v816, 4294901760
    %818 = vmatpush1.msra.mxu0 %v817
    %819 = vmatprep.subr.mxu0 0.0
    %v820 = vand.u32 %v54, 4294901760
    %v821 = vsub.f32 %v54, %v820
    %v822 = vand.u32 %v821, 4294901760
    %823 = vmatpush1.msra.mxu0 %v822
    %824 = vmatprep.subr.mxu0 0.0
    %v825 = vand.u32 %v55, 4294901760
    %v826 = vsub.f32 %v55, %v825
    %v827 = vand.u32 %v826, 4294901760
    %828 = vmatpush1.msra.mxu0 %v827
    %829 = vmatprep.subr.mxu0 0.0
    %v830 = vand.u32 %v56, 4294901760
    %v831 = vsub.f32 %v56, %v830
    %v832 = vand.u32 %v831, 4294901760
    %833 = vmatpush1.msra.mxu0 %v832
    %834 = vmatprep.subr.mxu0 0.0
    %v835 = vand.u32 %v57, 4294901760
    %v836 = vsub.f32 %v57, %v835
    %v837 = vand.u32 %v836, 4294901760
    %838 = vmatpush1.msra.mxu0 %v837
    %839 = vmatprep.subr.mxu0 0.0
    %v840 = vand.u32 %v58, 4294901760
    %v841 = vsub.f32 %v58, %v840
    %v842 = vand.u32 %v841, 4294901760
    %843 = vmatpush1.msra.mxu0 %v842
    %844 = vmatprep.subr.mxu0 0.0
    %v845 = vand.u32 %v59, 4294901760
    %v846 = vsub.f32 %v59, %v845
    %v847 = vand.u32 %v846, 4294901760
    %848 = vmatpush1.msra.mxu0 %v847
    %849 = vmatprep.subr.mxu0 0.0
    %v850 = vand.u32 %v60, 4294901760
    %v851 = vsub.f32 %v60, %v850
    %v852 = vand.u32 %v851, 4294901760
    %853 = vmatpush1.msra.mxu0 %v852
    %854 = vmatprep.subr.mxu0 0.0
    %v855 = vand.u32 %v61, 4294901760
    %v856 = vsub.f32 %v61, %v855
    %v857 = vand.u32 %v856, 4294901760
    %858 = vmatpush1.msra.mxu0 %v857
    %859 = vmatprep.subr.mxu0 0.0
    %v860 = vand.u32 %v62, 4294901760
    %v861 = vsub.f32 %v62, %v860
    %v862 = vand.u32 %v861, 4294901760
    %863 = vmatpush1.msra.mxu0 %v862
    %864 = vmatprep.subr.mxu0 0.0
    %v865 = vand.u32 %v63, 4294901760
    %v866 = vsub.f32 %v63, %v865
    %v867 = vand.u32 %v866, 4294901760
    %868 = vmatpush1.msra.mxu0 %v867
    %869 = vmatprep.subr.mxu0 0.0
    %v870 = vand.u32 %v64, 4294901760
    %v871 = vsub.f32 %v64, %v870
    %v872 = vand.u32 %v871, 4294901760
    %873 = vmatpush1.msra.mxu0 %v872
    %874 = vmatprep.subr.mxu0 0.0
    %v875 = vand.u32 %v65, 4294901760
    %v876 = vsub.f32 %v65, %v875
    %v877 = vand.u32 %v876, 4294901760
    %878 = vmatpush1.msra.mxu0 %v877
    %879 = vmatprep.subr.mxu0 0.0
    %v880 = vand.u32 %v66, 4294901760
    %v881 = vsub.f32 %v66, %v880
    %v882 = vand.u32 %v881, 4294901760
    %883 = vmatpush1.msra.mxu0 %v882
    %884 = vmatprep.subr.mxu0 0.0
    %v885 = vand.u32 %v67, 4294901760
    %v886 = vsub.f32 %v67, %v885
    %v887 = vand.u32 %v886, 4294901760
    %888 = vmatpush1.msra.mxu0 %v887
    %889 = vmatprep.subr.mxu0 0.0
    %v890 = vand.u32 %v68, 4294901760
    %v891 = vsub.f32 %v68, %v890
    %v892 = vand.u32 %v891, 4294901760
    %893 = vmatpush1.msra.mxu0 %v892
    %894 = vmatprep.subr.mxu0 0.0
    %v895 = vand.u32 %v69, 4294901760
    %v896 = vsub.f32 %v69, %v895
    %v897 = vand.u32 %v896, 4294901760
    %898 = vmatpush1.msra.mxu0 %v897
    %899 = vmatprep.subr.mxu0 0.0
    %v900 = vand.u32 %v70, 4294901760
    %v901 = vsub.f32 %v70, %v900
    %v902 = vand.u32 %v901, 4294901760
    %903 = vmatpush1.msra.mxu0 %v902
    %904 = vmatprep.subr.mxu0 0.0
    %v905 = vand.u32 %v71, 4294901760
    %v906 = vsub.f32 %v71, %v905
    %v907 = vand.u32 %v906, 4294901760
    %908 = vmatpush1.msra.mxu0 %v907
    %909 = vmatprep.subr.mxu0 0.0
    %v910 = vand.u32 %v72, 4294901760
    %v911 = vsub.f32 %v72, %v910
    %v912 = vand.u32 %v911, 4294901760
    %913 = vmatpush1.msra.mxu0 %v912
    %914 = vmatprep.subr.mxu0 0.0
    %v915 = vand.u32 %v73, 4294901760
    %v916 = vsub.f32 %v73, %v915
    %v917 = vand.u32 %v916, 4294901760
    %918 = vmatpush1.msra.mxu0 %v917
    %919 = vmatprep.subr.mxu0 0.0
    %v920 = vand.u32 %v74, 4294901760
    %v921 = vsub.f32 %v74, %v920
    %v922 = vand.u32 %v921, 4294901760
    %923 = vmatpush1.msra.mxu0 %v922
    %924 = vmatprep.subr.mxu0 0.0
    %v925 = vand.u32 %v75, 4294901760
    %v926 = vsub.f32 %v75, %v925
    %v927 = vand.u32 %v926, 4294901760
    %928 = vmatpush1.msra.mxu0 %v927
    %v929 = vand.u32 %v37, 4294901760
    %930 = vmatprep.mubr.f32.mxu0 %v929
    %v931 = vand.u32 %v36, 4294901760
    %932 = vmatmul.mubr.f32.gmra.mrb[0].mxu0 %v931
    %v933 = vpop.f32.mrb[0].mxu0
    %v934 = vadd.f32 %v766, %v933
    %v935 = vpop.f32.mrb[0].mxu0
    %936 = vdwg.mxu0
    %937 = vmatprep.subr.mxu0 0.0
    %v938 = vand.u32 %v44, 4294901760
    %939 = vmatpush1.msra.mxu0 %v938
    %940 = vmatprep.subr.mxu0 0.0
    %v941 = vand.u32 %v45, 4294901760
    %942 = vmatpush1.msra.mxu0 %v941
    %943 = vmatprep.subr.mxu0 0.0
    %v944 = vand.u32 %v46, 4294901760
    %945 = vmatpush1.msra.mxu0 %v944
    %946 = vmatprep.subr.mxu0 0.0
    %v947 = vand.u32 %v47, 4294901760
    %948 = vmatpush1.msra.mxu0 %v947
    %949 = vmatprep.subr.mxu0 0.0
    %v950 = vand.u32 %v48, 4294901760
    %951 = vmatpush1.msra.mxu0 %v950
    %952 = vmatprep.subr.mxu0 0.0
    %v953 = vand.u32 %v49, 4294901760
    %954 = vmatpush1.msra.mxu0 %v953
    %955 = vmatprep.subr.mxu0 0.0
    %v956 = vand.u32 %v50, 4294901760
    %957 = vmatpush1.msra.mxu0 %v956
    %958 = vmatprep.subr.mxu0 0.0
    %v959 = vand.u32 %v51, 4294901760
    %960 = vmatpush1.msra.mxu0 %v959
    %961 = vmatprep.subr.mxu0 0.0
    %v962 = vand.u32 %v52, 4294901760
    %963 = vmatpush1.msra.mxu0 %v962
    %964 = vmatprep.subr.mxu0 0.0
    %v965 = vand.u32 %v53, 4294901760
    %966 = vmatpush1.msra.mxu0 %v965
    %967 = vmatprep.subr.mxu0 0.0
    %v968 = vand.u32 %v54, 4294901760
    %969 = vmatpush1.msra.mxu0 %v968
    %970 = vmatprep.subr.mxu0 0.0
    %v971 = vand.u32 %v55, 4294901760
    %972 = vmatpush1.msra.mxu0 %v971
    %973 = vmatprep.subr.mxu0 0.0
    %v974 = vand.u32 %v56, 4294901760
    %975 = vmatpush1.msra.mxu0 %v974
    %976 = vmatprep.subr.mxu0 0.0
    %v977 = vand.u32 %v57, 4294901760
    %978 = vmatpush1.msra.mxu0 %v977
    %979 = vmatprep.subr.mxu0 0.0
    %v980 = vand.u32 %v58, 4294901760
    %981 = vmatpush1.msra.mxu0 %v980
    %982 = vmatprep.subr.mxu0 0.0
    %v983 = vand.u32 %v59, 4294901760
    %984 = vmatpush1.msra.mxu0 %v983
    %985 = vmatprep.subr.mxu0 0.0
    %v986 = vand.u32 %v60, 4294901760
    %987 = vmatpush1.msra.mxu0 %v986
    %988 = vmatprep.subr.mxu0 0.0
    %v989 = vand.u32 %v61, 4294901760
    %990 = vmatpush1.msra.mxu0 %v989
    %991 = vmatprep.subr.mxu0 0.0
    %v992 = vand.u32 %v62, 4294901760
    %993 = vmatpush1.msra.mxu0 %v992
    %994 = vmatprep.subr.mxu0 0.0
    %v995 = vand.u32 %v63, 4294901760
    %996 = vmatpush1.msra.mxu0 %v995
    %997 = vmatprep.subr.mxu0 0.0
    %v998 = vand.u32 %v64, 4294901760
    %999 = vmatpush1.msra.mxu0 %v998
    %1000 = vmatprep.subr.mxu0 0.0
    %v1001 = vand.u32 %v65, 4294901760
    %1002 = vmatpush1.msra.mxu0 %v1001
    %1003 = vmatprep.subr.mxu0 0.0
    %v1004 = vand.u32 %v66, 4294901760
    %1005 = vmatpush1.msra.mxu0 %v1004
    %1006 = vmatprep.subr.mxu0 0.0
    %v1007 = vand.u32 %v67, 4294901760
    %1008 = vmatpush1.msra.mxu0 %v1007
    %1009 = vmatprep.subr.mxu0 0.0
    %v1010 = vand.u32 %v68, 4294901760
    %1011 = vmatpush1.msra.mxu0 %v1010
    %1012 = vmatprep.subr.mxu0 0.0
    %v1013 = vand.u32 %v69, 4294901760
    %1014 = vmatpush1.msra.mxu0 %v1013
    %1015 = vmatprep.subr.mxu0 0.0
    %v1016 = vand.u32 %v70, 4294901760
    %1017 = vmatpush1.msra.mxu0 %v1016
    %1018 = vmatprep.subr.mxu0 0.0
    %v1019 = vand.u32 %v71, 4294901760
    %1020 = vmatpush1.msra.mxu0 %v1019
    %1021 = vmatprep.subr.mxu0 0.0
    %v1022 = vand.u32 %v72, 4294901760
    %1023 = vmatpush1.msra.mxu0 %v1022
    %1024 = vmatprep.subr.mxu0 0.0
    %v1025 = vand.u32 %v73, 4294901760
    %1026 = vmatpush1.msra.mxu0 %v1025
    %1027 = vmatprep.subr.mxu0 0.0
    %v1028 = vand.u32 %v74, 4294901760
    %1029 = vmatpush1.msra.mxu0 %v1028
    %1030 = vmatprep.subr.mxu0 0.0
    %v1031 = vand.u32 %v75, 4294901760
    %1032 = vmatpush1.msra.mxu0 %v1031
    %v1033 = vand.u32 %v37, 4294901760
    %1034 = vmatprep.mubr.f32.mxu0 %v1033
    %v1035 = vand.u32 %v36, 4294901760
    %1036 = vmatmul.mubr.f32.gmra.mrb[0].mxu0 %v1035
    %v1037 = vpop.f32.mrb[0].mxu0
    %v1038 = vadd.f32 %v934, %v1037
    %v1039 = vpop.f32.mrb[0].mxu0
    %1040 = vdwg.mxu0
    %1041 = vmatprep.subr.mxu0 0.0
    %v1042 = vand.u32 %v76, 4294901760
    %1043 = vmatpush1.msra.mxu0 %v1042
    %1044 = vmatprep.subr.mxu0 0.0
    %v1045 = vand.u32 %v77, 4294901760
    %1046 = vmatpush1.msra.mxu0 %v1045
    %1047 = vmatprep.subr.mxu0 0.0
    %v1048 = vand.u32 %v78, 4294901760
    %1049 = vmatpush1.msra.mxu0 %v1048
    %1050 = vmatprep.subr.mxu0 0.0
    %v1051 = vand.u32 %v79, 4294901760
    %1052 = vmatpush1.msra.mxu0 %v1051
    %1053 = vmatprep.subr.mxu0 0.0
    %v1054 = vand.u32 %v80, 4294901760
    %1055 = vmatpush1.msra.mxu0 %v1054
    %1056 = vmatprep.subr.mxu0 0.0
    %v1057 = vand.u32 %v81, 4294901760
    %1058 = vmatpush1.msra.mxu0 %v1057
    %1059 = vmatprep.subr.mxu0 0.0
    %v1060 = vand.u32 %v82, 4294901760
    %1061 = vmatpush1.msra.mxu0 %v1060
    %1062 = vmatprep.subr.mxu0 0.0
    %v1063 = vand.u32 %v83, 4294901760
    %1064 = vmatpush1.msra.mxu0 %v1063
    %1065 = vmatprep.subr.mxu0 0.0
    %v1066 = vand.u32 %v84, 4294901760
    %1067 = vmatpush1.msra.mxu0 %v1066
    %1068 = vmatprep.subr.mxu0 0.0
    %v1069 = vand.u32 %v85, 4294901760
    %1070 = vmatpush1.msra.mxu0 %v1069
    %1071 = vmatprep.subr.mxu0 0.0
    %v1072 = vand.u32 %v86, 4294901760
    %1073 = vmatpush1.msra.mxu0 %v1072
    %1074 = vmatprep.subr.mxu0 0.0
    %v1075 = vand.u32 %v87, 4294901760
    %1076 = vmatpush1.msra.mxu0 %v1075
    %1077 = vmatprep.subr.mxu0 0.0
    %v1078 = vand.u32 %v88, 4294901760
    %1079 = vmatpush1.msra.mxu0 %v1078
    %1080 = vmatprep.subr.mxu0 0.0
    %v1081 = vand.u32 %v89, 4294901760
    %1082 = vmatpush1.msra.mxu0 %v1081
    %1083 = vmatprep.subr.mxu0 0.0
    %v1084 = vand.u32 %v90, 4294901760
    %1085 = vmatpush1.msra.mxu0 %v1084
    %1086 = vmatprep.subr.mxu0 0.0
    %v1087 = vand.u32 %v91, 4294901760
    %1088 = vmatpush1.msra.mxu0 %v1087
    %1089 = vmatprep.subr.mxu0 0.0
    %v1090 = vand.u32 %v92, 4294901760
    %1091 = vmatpush1.msra.mxu0 %v1090
    %1092 = vmatprep.subr.mxu0 0.0
    %v1093 = vand.u32 %v93, 4294901760
    %1094 = vmatpush1.msra.mxu0 %v1093
    %1095 = vmatprep.subr.mxu0 0.0
    %v1096 = vand.u32 %v94, 4294901760
    %1097 = vmatpush1.msra.mxu0 %v1096
    %1098 = vmatprep.subr.mxu0 0.0
    %v1099 = vand.u32 %v95, 4294901760
    %1100 = vmatpush1.msra.mxu0 %v1099
    %1101 = vmatprep.subr.mxu0 0.0
    %v1102 = vand.u32 %v96, 4294901760
    %1103 = vmatpush1.msra.mxu0 %v1102
    %1104 = vmatprep.subr.mxu0 0.0
    %v1105 = vand.u32 %v97, 4294901760
    %1106 = vmatpush1.msra.mxu0 %v1105
    %1107 = vmatprep.subr.mxu0 0.0
    %v1108 = vand.u32 %v98, 4294901760
    %1109 = vmatpush1.msra.mxu0 %v1108
    %1110 = vmatprep.subr.mxu0 0.0
    %v1111 = vand.u32 %v99, 4294901760
    %1112 = vmatpush1.msra.mxu0 %v1111
    %1113 = vmatprep.subr.mxu0 0.0
    %v1114 = vand.u32 %v100, 4294901760
    %1115 = vmatpush1.msra.mxu0 %v1114
    %1116 = vmatprep.subr.mxu0 0.0
    %v1117 = vand.u32 %v101, 4294901760
    %1118 = vmatpush1.msra.mxu0 %v1117
    %1119 = vmatprep.subr.mxu0 0.0
    %v1120 = vand.u32 %v102, 4294901760
    %1121 = vmatpush1.msra.mxu0 %v1120
    %1122 = vmatprep.subr.mxu0 0.0
    %v1123 = vand.u32 %v103, 4294901760
    %1124 = vmatpush1.msra.mxu0 %v1123
    %1125 = vmatprep.subr.mxu0 0.0
    %v1126 = vand.u32 %v104, 4294901760
    %1127 = vmatpush1.msra.mxu0 %v1126
    %1128 = vmatprep.subr.mxu0 0.0
    %v1129 = vand.u32 %v105, 4294901760
    %1130 = vmatpush1.msra.mxu0 %v1129
    %1131 = vmatprep.subr.mxu0 0.0
    %v1132 = vand.u32 %v106, 4294901760
    %1133 = vmatpush1.msra.mxu0 %v1132
    %1134 = vmatprep.subr.mxu0 0.0
    %v1135 = vand.u32 %v107, 4294901760
    %1136 = vmatpush1.msra.mxu0 %v1135
    %v1137 = vand.u32 %v39, 4294901760
    %v1138 = vsub.f32 %v39, %v1137
    %v1139 = vand.u32 %v1138, 4294901760
    %v1140 = vsub.f32 %v1138, %v1139
    %v1141 = vand.u32 %v1140, 4294901760
    %1142 = vmatprep.mubr.f32.mxu0 %v1141
    %v1143 = vand.u32 %v38, 4294901760
    %v1144 = vsub.f32 %v38, %v1143
    %v1145 = vand.u32 %v1144, 4294901760
    %v1146 = vsub.f32 %v1144, %v1145
    %v1147 = vand.u32 %v1146, 4294901760
    %1148 = vmatmul.mubr.f32.gmra.mrb[0].mxu0 %v1147
    %v1149 = vpop.f32.mrb[0].mxu0
    %v1150 = vadd.f32 %v1038, %v1149
    %v1151 = vpop.f32.mrb[0].mxu0
    %1152 = vdwg.mxu0
    %1153 = vmatprep.subr.mxu0 0.0
    %v1154 = vand.u32 %v76, 4294901760
    %v1155 = vsub.f32 %v76, %v1154
    %v1156 = vand.u32 %v1155, 4294901760
    %v1157 = vsub.f32 %v1155, %v1156
    %v1158 = vand.u32 %v1157, 4294901760
    %1159 = vmatpush1.msra.mxu0 %v1158
    %1160 = vmatprep.subr.mxu0 0.0
    %v1161 = vand.u32 %v77, 4294901760
    %v1162 = vsub.f32 %v77, %v1161
    %v1163 = vand.u32 %v1162, 4294901760
    %v1164 = vsub.f32 %v1162, %v1163
    %v1165 = vand.u32 %v1164, 4294901760
    %1166 = vmatpush1.msra.mxu0 %v1165
    %1167 = vmatprep.subr.mxu0 0.0
    %v1168 = vand.u32 %v78, 4294901760
    %v1169 = vsub.f32 %v78, %v1168
    %v1170 = vand.u32 %v1169, 4294901760
    %v1171 = vsub.f32 %v1169, %v1170
    %v1172 = vand.u32 %v1171, 4294901760
    %1173 = vmatpush1.msra.mxu0 %v1172
    %1174 = vmatprep.subr.mxu0 0.0
    %v1175 = vand.u32 %v79, 4294901760
    %v1176 = vsub.f32 %v79, %v1175
    %v1177 = vand.u32 %v1176, 4294901760
    %v1178 = vsub.f32 %v1176, %v1177
    %v1179 = vand.u32 %v1178, 4294901760
    %1180 = vmatpush1.msra.mxu0 %v1179
    %1181 = vmatprep.subr.mxu0 0.0
    %v1182 = vand.u32 %v80, 4294901760
    %v1183 = vsub.f32 %v80, %v1182
    %v1184 = vand.u32 %v1183, 4294901760
    %v1185 = vsub.f32 %v1183, %v1184
    %v1186 = vand.u32 %v1185, 4294901760
    %1187 = vmatpush1.msra.mxu0 %v1186
    %1188 = vmatprep.subr.mxu0 0.0
    %v1189 = vand.u32 %v81, 4294901760
    %v1190 = vsub.f32 %v81, %v1189
    %v1191 = vand.u32 %v1190, 4294901760
    %v1192 = vsub.f32 %v1190, %v1191
    %v1193 = vand.u32 %v1192, 4294901760
    %1194 = vmatpush1.msra.mxu0 %v1193
    %1195 = vmatprep.subr.mxu0 0.0
    %v1196 = vand.u32 %v82, 4294901760
    %v1197 = vsub.f32 %v82, %v1196
    %v1198 = vand.u32 %v1197, 4294901760
    %v1199 = vsub.f32 %v1197, %v1198
    %v1200 = vand.u32 %v1199, 4294901760
    %1201 = vmatpush1.msra.mxu0 %v1200
    %1202 = vmatprep.subr.mxu0 0.0
    %v1203 = vand.u32 %v83, 4294901760
    %v1204 = vsub.f32 %v83, %v1203
    %v1205 = vand.u32 %v1204, 4294901760
    %v1206 = vsub.f32 %v1204, %v1205
    %v1207 = vand.u32 %v1206, 4294901760
    %1208 = vmatpush1.msra.mxu0 %v1207
    %1209 = vmatprep.subr.mxu0 0.0
    %v1210 = vand.u32 %v84, 4294901760
    %v1211 = vsub.f32 %v84, %v1210
    %v1212 = vand.u32 %v1211, 4294901760
    %v1213 = vsub.f32 %v1211, %v1212
    %v1214 = vand.u32 %v1213, 4294901760
    %1215 = vmatpush1.msra.mxu0 %v1214
    %1216 = vmatprep.subr.mxu0 0.0
    %v1217 = vand.u32 %v85, 4294901760
    %v1218 = vsub.f32 %v85, %v1217
    %v1219 = vand.u32 %v1218, 4294901760
    %v1220 = vsub.f32 %v1218, %v1219
    %v1221 = vand.u32 %v1220, 4294901760
    %1222 = vmatpush1.msra.mxu0 %v1221
    %1223 = vmatprep.subr.mxu0 0.0
    %v1224 = vand.u32 %v86, 4294901760
    %v1225 = vsub.f32 %v86, %v1224
    %v1226 = vand.u32 %v1225, 4294901760
    %v1227 = vsub.f32 %v1225, %v1226
    %v1228 = vand.u32 %v1227, 4294901760
    %1229 = vmatpush1.msra.mxu0 %v1228
    %1230 = vmatprep.subr.mxu0 0.0
    %v1231 = vand.u32 %v87, 4294901760
    %v1232 = vsub.f32 %v87, %v1231
    %v1233 = vand.u32 %v1232, 4294901760
    %v1234 = vsub.f32 %v1232, %v1233
    %v1235 = vand.u32 %v1234, 4294901760
    %1236 = vmatpush1.msra.mxu0 %v1235
    %1237 = vmatprep.subr.mxu0 0.0
    %v1238 = vand.u32 %v88, 4294901760
    %v1239 = vsub.f32 %v88, %v1238
    %v1240 = vand.u32 %v1239, 4294901760
    %v1241 = vsub.f32 %v1239, %v1240
    %v1242 = vand.u32 %v1241, 4294901760
    %1243 = vmatpush1.msra.mxu0 %v1242
    %1244 = vmatprep.subr.mxu0 0.0
    %v1245 = vand.u32 %v89, 4294901760
    %v1246 = vsub.f32 %v89, %v1245
    %v1247 = vand.u32 %v1246, 4294901760
    %v1248 = vsub.f32 %v1246, %v1247
    %v1249 = vand.u32 %v1248, 4294901760
    %1250 = vmatpush1.msra.mxu0 %v1249
    %1251 = vmatprep.subr.mxu0 0.0
    %v1252 = vand.u32 %v90, 4294901760
    %v1253 = vsub.f32 %v90, %v1252
    %v1254 = vand.u32 %v1253, 4294901760
    %v1255 = vsub.f32 %v1253, %v1254
    %v1256 = vand.u32 %v1255, 4294901760
    %1257 = vmatpush1.msra.mxu0 %v1256
    %1258 = vmatprep.subr.mxu0 0.0
    %v1259 = vand.u32 %v91, 4294901760
    %v1260 = vsub.f32 %v91, %v1259
    %v1261 = vand.u32 %v1260, 4294901760
    %v1262 = vsub.f32 %v1260, %v1261
    %v1263 = vand.u32 %v1262, 4294901760
    %1264 = vmatpush1.msra.mxu0 %v1263
    %1265 = vmatprep.subr.mxu0 0.0
    %v1266 = vand.u32 %v92, 4294901760
    %v1267 = vsub.f32 %v92, %v1266
    %v1268 = vand.u32 %v1267, 4294901760
    %v1269 = vsub.f32 %v1267, %v1268
    %v1270 = vand.u32 %v1269, 4294901760
    %1271 = vmatpush1.msra.mxu0 %v1270
    %1272 = vmatprep.subr.mxu0 0.0
    %v1273 = vand.u32 %v93, 4294901760
    %v1274 = vsub.f32 %v93, %v1273
    %v1275 = vand.u32 %v1274, 4294901760
    %v1276 = vsub.f32 %v1274, %v1275
    %v1277 = vand.u32 %v1276, 4294901760
    %1278 = vmatpush1.msra.mxu0 %v1277
    %1279 = vmatprep.subr.mxu0 0.0
    %v1280 = vand.u32 %v94, 4294901760
    %v1281 = vsub.f32 %v94, %v1280
    %v1282 = vand.u32 %v1281, 4294901760
    %v1283 = vsub.f32 %v1281, %v1282
    %v1284 = vand.u32 %v1283, 4294901760
    %1285 = vmatpush1.msra.mxu0 %v1284
    %1286 = vmatprep.subr.mxu0 0.0
    %v1287 = vand.u32 %v95, 4294901760
    %v1288 = vsub.f32 %v95, %v1287
    %v1289 = vand.u32 %v1288, 4294901760
    %v1290 = vsub.f32 %v1288, %v1289
    %v1291 = vand.u32 %v1290, 4294901760
    %1292 = vmatpush1.msra.mxu0 %v1291
    %1293 = vmatprep.subr.mxu0 0.0
    %v1294 = vand.u32 %v96, 4294901760
    %v1295 = vsub.f32 %v96, %v1294
    %v1296 = vand.u32 %v1295, 4294901760
    %v1297 = vsub.f32 %v1295, %v1296
    %v1298 = vand.u32 %v1297, 4294901760
    %1299 = vmatpush1.msra.mxu0 %v1298
    %1300 = vmatprep.subr.mxu0 0.0
    %v1301 = vand.u32 %v97, 4294901760
    %v1302 = vsub.f32 %v97, %v1301
    %v1303 = vand.u32 %v1302, 4294901760
    %v1304 = vsub.f32 %v1302, %v1303
    %v1305 = vand.u32 %v1304, 4294901760
    %1306 = vmatpush1.msra.mxu0 %v1305
    %1307 = vmatprep.subr.mxu0 0.0
    %v1308 = vand.u32 %v98, 4294901760
    %v1309 = vsub.f32 %v98, %v1308
    %v1310 = vand.u32 %v1309, 4294901760
    %v1311 = vsub.f32 %v1309, %v1310
    %v1312 = vand.u32 %v1311, 4294901760
    %1313 = vmatpush1.msra.mxu0 %v1312
    %1314 = vmatprep.subr.mxu0 0.0
    %v1315 = vand.u32 %v99, 4294901760
    %v1316 = vsub.f32 %v99, %v1315
    %v1317 = vand.u32 %v1316, 4294901760
    %v1318 = vsub.f32 %v1316, %v1317
    %v1319 = vand.u32 %v1318, 4294901760
    %1320 = vmatpush1.msra.mxu0 %v1319
    %1321 = vmatprep.subr.mxu0 0.0
    %v1322 = vand.u32 %v100, 4294901760
    %v1323 = vsub.f32 %v100, %v1322
    %v1324 = vand.u32 %v1323, 4294901760
    %v1325 = vsub.f32 %v1323, %v1324
    %v1326 = vand.u32 %v1325, 4294901760
    %1327 = vmatpush1.msra.mxu0 %v1326
    %1328 = vmatprep.subr.mxu0 0.0
    %v1329 = vand.u32 %v101, 4294901760
    %v1330 = vsub.f32 %v101, %v1329
    %v1331 = vand.u32 %v1330, 4294901760
    %v1332 = vsub.f32 %v1330, %v1331
    %v1333 = vand.u32 %v1332, 4294901760
    %1334 = vmatpush1.msra.mxu0 %v1333
    %1335 = vmatprep.subr.mxu0 0.0
    %v1336 = vand.u32 %v102, 4294901760
    %v1337 = vsub.f32 %v102, %v1336
    %v1338 = vand.u32 %v1337, 4294901760
    %v1339 = vsub.f32 %v1337, %v1338
    %v1340 = vand.u32 %v1339, 4294901760
    %1341 = vmatpush1.msra.mxu0 %v1340
    %1342 = vmatprep.subr.mxu0 0.0
    %v1343 = vand.u32 %v103, 4294901760
    %v1344 = vsub.f32 %v103, %v1343
    %v1345 = vand.u32 %v1344, 4294901760
    %v1346 = vsub.f32 %v1344, %v1345
    %v1347 = vand.u32 %v1346, 4294901760
    %1348 = vmatpush1.msra.mxu0 %v1347
    %1349 = vmatprep.subr.mxu0 0.0
    %v1350 = vand.u32 %v104, 4294901760
    %v1351 = vsub.f32 %v104, %v1350
    %v1352 = vand.u32 %v1351, 4294901760
    %v1353 = vsub.f32 %v1351, %v1352
    %v1354 = vand.u32 %v1353, 4294901760
    %1355 = vmatpush1.msra.mxu0 %v1354
    %1356 = vmatprep.subr.mxu0 0.0
    %v1357 = vand.u32 %v105, 4294901760
    %v1358 = vsub.f32 %v105, %v1357
    %v1359 = vand.u32 %v1358, 4294901760
    %v1360 = vsub.f32 %v1358, %v1359
    %v1361 = vand.u32 %v1360, 4294901760
    %1362 = vmatpush1.msra.mxu0 %v1361
    %1363 = vmatprep.subr.mxu0 0.0
    %v1364 = vand.u32 %v106, 4294901760
    %v1365 = vsub.f32 %v106, %v1364
    %v1366 = vand.u32 %v1365, 4294901760
    %v1367 = vsub.f32 %v1365, %v1366
    %v1368 = vand.u32 %v1367, 4294901760
    %1369 = vmatpush1.msra.mxu0 %v1368
    %1370 = vmatprep.subr.mxu0 0.0
    %v1371 = vand.u32 %v107, 4294901760
    %v1372 = vsub.f32 %v107, %v1371
    %v1373 = vand.u32 %v1372, 4294901760
    %v1374 = vsub.f32 %v1372, %v1373
    %v1375 = vand.u32 %v1374, 4294901760
    %1376 = vmatpush1.msra.mxu0 %v1375
    %v1377 = vand.u32 %v39, 4294901760
    %1378 = vmatprep.mubr.f32.mxu0 %v1377
    %v1379 = vand.u32 %v38, 4294901760
    %1380 = vmatmul.mubr.f32.gmra.mrb[0].mxu0 %v1379
    %v1381 = vpop.f32.mrb[0].mxu0
    %v1382 = vadd.f32 %v1150, %v1381
    %v1383 = vpop.f32.mrb[0].mxu0
    %1384 = vdwg.mxu0
    %1385 = vmatprep.subr.mxu0 0.0
    %v1386 = vand.u32 %v76, 4294901760
    %v1387 = vsub.f32 %v76, %v1386
    %1388 = vmatpush1.msra.mxu0 %v1387
    %1389 = vmatprep.subr.mxu0 0.0
    %v1390 = vand.u32 %v77, 4294901760
    %v1391 = vsub.f32 %v77, %v1390
    %1392 = vmatpush1.msra.mxu0 %v1391
    %1393 = vmatprep.subr.mxu0 0.0
    %v1394 = vand.u32 %v78, 4294901760
    %v1395 = vsub.f32 %v78, %v1394
    %1396 = vmatpush1.msra.mxu0 %v1395
    %1397 = vmatprep.subr.mxu0 0.0
    %v1398 = vand.u32 %v79, 4294901760
    %v1399 = vsub.f32 %v79, %v1398
    %1400 = vmatpush1.msra.mxu0 %v1399
    %1401 = vmatprep.subr.mxu0 0.0
    %v1402 = vand.u32 %v80, 4294901760
    %v1403 = vsub.f32 %v80, %v1402
    %1404 = vmatpush1.msra.mxu0 %v1403
    %1405 = vmatprep.subr.mxu0 0.0
    %v1406 = vand.u32 %v81, 4294901760
    %v1407 = vsub.f32 %v81, %v1406
    %1408 = vmatpush1.msra.mxu0 %v1407
    %1409 = vmatprep.subr.mxu0 0.0
    %v1410 = vand.u32 %v82, 4294901760
    %v1411 = vsub.f32 %v82, %v1410
    %1412 = vmatpush1.msra.mxu0 %v1411
    %1413 = vmatprep.subr.mxu0 0.0
    %v1414 = vand.u32 %v83, 4294901760
    %v1415 = vsub.f32 %v83, %v1414
    %1416 = vmatpush1.msra.mxu0 %v1415
    %1417 = vmatprep.subr.mxu0 0.0
    %v1418 = vand.u32 %v84, 4294901760
    %v1419 = vsub.f32 %v84, %v1418
    %1420 = vmatpush1.msra.mxu0 %v1419
    %1421 = vmatprep.subr.mxu0 0.0
    %v1422 = vand.u32 %v85, 4294901760
    %v1423 = vsub.f32 %v85, %v1422
    %1424 = vmatpush1.msra.mxu0 %v1423
    %1425 = vmatprep.subr.mxu0 0.0
    %v1426 = vand.u32 %v86, 4294901760
    %v1427 = vsub.f32 %v86, %v1426
    %1428 = vmatpush1.msra.mxu0 %v1427
    %1429 = vmatprep.subr.mxu0 0.0
    %v1430 = vand.u32 %v87, 4294901760
    %v1431 = vsub.f32 %v87, %v1430
    %1432 = vmatpush1.msra.mxu0 %v1431
    %1433 = vmatprep.subr.mxu0 0.0
    %v1434 = vand.u32 %v88, 4294901760
    %v1435 = vsub.f32 %v88, %v1434
    %1436 = vmatpush1.msra.mxu0 %v1435
    %1437 = vmatprep.subr.mxu0 0.0
    %v1438 = vand.u32 %v89, 4294901760
    %v1439 = vsub.f32 %v89, %v1438
    %1440 = vmatpush1.msra.mxu0 %v1439
    %1441 = vmatprep.subr.mxu0 0.0
    %v1442 = vand.u32 %v90, 4294901760
    %v1443 = vsub.f32 %v90, %v1442
    %1444 = vmatpush1.msra.mxu0 %v1443
    %1445 = vmatprep.subr.mxu0 0.0
    %v1446 = vand.u32 %v91, 4294901760
    %v1447 = vsub.f32 %v91, %v1446
    %1448 = vmatpush1.msra.mxu0 %v1447
    %1449 = vmatprep.subr.mxu0 0.0
    %v1450 = vand.u32 %v92, 4294901760
    %v1451 = vsub.f32 %v92, %v1450
    %1452 = vmatpush1.msra.mxu0 %v1451
    %1453 = vmatprep.subr.mxu0 0.0
    %v1454 = vand.u32 %v93, 4294901760
    %v1455 = vsub.f32 %v93, %v1454
    %1456 = vmatpush1.msra.mxu0 %v1455
    %1457 = vmatprep.subr.mxu0 0.0
    %v1458 = vand.u32 %v94, 4294901760
    %v1459 = vsub.f32 %v94, %v1458
    %1460 = vmatpush1.msra.mxu0 %v1459
    %1461 = vmatprep.subr.mxu0 0.0
    %v1462 = vand.u32 %v95, 4294901760
    %v1463 = vsub.f32 %v95, %v1462
    %1464 = vmatpush1.msra.mxu0 %v1463
    %1465 = vmatprep.subr.mxu0 0.0
    %v1466 = vand.u32 %v96, 4294901760
    %v1467 = vsub.f32 %v96, %v1466
    %1468 = vmatpush1.msra.mxu0 %v1467
    %1469 = vmatprep.subr.mxu0 0.0
    %v1470 = vand.u32 %v97, 4294901760
    %v1471 = vsub.f32 %v97, %v1470
    %1472 = vmatpush1.msra.mxu0 %v1471
    %1473 = vmatprep.subr.mxu0 0.0
    %v1474 = vand.u32 %v98, 4294901760
    %v1475 = vsub.f32 %v98, %v1474
    %1476 = vmatpush1.msra.mxu0 %v1475
    %1477 = vmatprep.subr.mxu0 0.0
    %v1478 = vand.u32 %v99, 4294901760
    %v1479 = vsub.f32 %v99, %v1478
    %1480 = vmatpush1.msra.mxu0 %v1479
    %1481 = vmatprep.subr.mxu0 0.0
    %v1482 = vand.u32 %v100, 4294901760
    %v1483 = vsub.f32 %v100, %v1482
    %1484 = vmatpush1.msra.mxu0 %v1483
    %1485 = vmatprep.subr.mxu0 0.0
    %v1486 = vand.u32 %v101, 4294901760
    %v1487 = vsub.f32 %v101, %v1486
    %1488 = vmatpush1.msra.mxu0 %v1487
    %1489 = vmatprep.subr.mxu0 0.0
    %v1490 = vand.u32 %v102, 4294901760
    %v1491 = vsub.f32 %v102, %v1490
    %1492 = vmatpush1.msra.mxu0 %v1491
    %1493 = vmatprep.subr.mxu0 0.0
    %v1494 = vand.u32 %v103, 4294901760
    %v1495 = vsub.f32 %v103, %v1494
    %1496 = vmatpush1.msra.mxu0 %v1495
    %1497 = vmatprep.subr.mxu0 0.0
    %v1498 = vand.u32 %v104, 4294901760
    %v1499 = vsub.f32 %v104, %v1498
    %1500 = vmatpush1.msra.mxu0 %v1499
    %1501 = vmatprep.subr.mxu0 0.0
    %v1502 = vand.u32 %v105, 4294901760
    %v1503 = vsub.f32 %v105, %v1502
    %1504 = vmatpush1.msra.mxu0 %v1503
    %1505 = vmatprep.subr.mxu0 0.0
    %v1506 = vand.u32 %v106, 4294901760
    %v1507 = vsub.f32 %v106, %v1506
    %1508 = vmatpush1.msra.mxu0 %v1507
    %1509 = vmatprep.subr.mxu0 0.0
    %v1510 = vand.u32 %v107, 4294901760
    %v1511 = vsub.f32 %v107, %v1510
    %1512 = vmatpush1.msra.mxu0 %v1511
    %v1513 = vand.u32 %v39, 4294901760
    %v1514 = vsub.f32 %v39, %v1513
    %1515 = vmatprep.mubr.f32.mxu0 %v1514
    %v1516 = vand.u32 %v38, 4294901760
    %v1517 = vsub.f32 %v38, %v1516
    %1518 = vmatmul.mubr.f32.gmra.mrb[0].mxu0 %v1517
    %v1519 = vpop.f32.mrb[0].mxu0
    %v1520 = vadd.f32 %v1382, %v1519
    %v1521 = vpop.f32.mrb[0].mxu0
    %1522 = vdwg.mxu0
    %1523 = vmatprep.subr.mxu0 0.0
    %v1524 = vand.u32 %v76, 4294901760
    %1525 = vmatpush1.msra.mxu0 %v1524
    %1526 = vmatprep.subr.mxu0 0.0
    %v1527 = vand.u32 %v77, 4294901760
    %1528 = vmatpush1.msra.mxu0 %v1527
    %1529 = vmatprep.subr.mxu0 0.0
    %v1530 = vand.u32 %v78, 4294901760
    %1531 = vmatpush1.msra.mxu0 %v1530
    %1532 = vmatprep.subr.mxu0 0.0
    %v1533 = vand.u32 %v79, 4294901760
    %1534 = vmatpush1.msra.mxu0 %v1533
    %1535 = vmatprep.subr.mxu0 0.0
    %v1536 = vand.u32 %v80, 4294901760
    %1537 = vmatpush1.msra.mxu0 %v1536
    %1538 = vmatprep.subr.mxu0 0.0
    %v1539 = vand.u32 %v81, 4294901760
    %1540 = vmatpush1.msra.mxu0 %v1539
    %1541 = vmatprep.subr.mxu0 0.0
    %v1542 = vand.u32 %v82, 4294901760
    %1543 = vmatpush1.msra.mxu0 %v1542
    %1544 = vmatprep.subr.mxu0 0.0
    %v1545 = vand.u32 %v83, 4294901760
    %1546 = vmatpush1.msra.mxu0 %v1545
    %1547 = vmatprep.subr.mxu0 0.0
    %v1548 = vand.u32 %v84, 4294901760
    %1549 = vmatpush1.msra.mxu0 %v1548
    %1550 = vmatprep.subr.mxu0 0.0
    %v1551 = vand.u32 %v85, 4294901760
    %1552 = vmatpush1.msra.mxu0 %v1551
    %1553 = vmatprep.subr.mxu0 0.0
    %v1554 = vand.u32 %v86, 4294901760
    %1555 = vmatpush1.msra.mxu0 %v1554
    %1556 = vmatprep.subr.mxu0 0.0
    %v1557 = vand.u32 %v87, 4294901760
    %1558 = vmatpush1.msra.mxu0 %v1557
    %1559 = vmatprep.subr.mxu0 0.0
    %v1560 = vand.u32 %v88, 4294901760
    %1561 = vmatpush1.msra.mxu0 %v1560
    %1562 = vmatprep.subr.mxu0 0.0
    %v1563 = vand.u32 %v89, 4294901760
    %1564 = vmatpush1.msra.mxu0 %v1563
    %1565 = vmatprep.subr.mxu0 0.0
    %v1566 = vand.u32 %v90, 4294901760
    %1567 = vmatpush1.msra.mxu0 %v1566
    %1568 = vmatprep.subr.mxu0 0.0
    %v1569 = vand.u32 %v91, 4294901760
    %1570 = vmatpush1.msra.mxu0 %v1569
    %1571 = vmatprep.subr.mxu0 0.0
    %v1572 = vand.u32 %v92, 4294901760
    %1573 = vmatpush1.msra.mxu0 %v1572
    %1574 = vmatprep.subr.mxu0 0.0
    %v1575 = vand.u32 %v93, 4294901760
    %1576 = vmatpush1.msra.mxu0 %v1575
    %1577 = vmatprep.subr.mxu0 0.0
    %v1578 = vand.u32 %v94, 4294901760
    %1579 = vmatpush1.msra.mxu0 %v1578
    %1580 = vmatprep.subr.mxu0 0.0
    %v1581 = vand.u32 %v95, 4294901760
    %1582 = vmatpush1.msra.mxu0 %v1581
    %1583 = vmatprep.subr.mxu0 0.0
    %v1584 = vand.u32 %v96, 4294901760
    %1585 = vmatpush1.msra.mxu0 %v1584
    %1586 = vmatprep.subr.mxu0 0.0
    %v1587 = vand.u32 %v97, 4294901760
    %1588 = vmatpush1.msra.mxu0 %v1587
    %1589 = vmatprep.subr.mxu0 0.0
    %v1590 = vand.u32 %v98, 4294901760
    %1591 = vmatpush1.msra.mxu0 %v1590
    %1592 = vmatprep.subr.mxu0 0.0
    %v1593 = vand.u32 %v99, 4294901760
    %1594 = vmatpush1.msra.mxu0 %v1593
    %1595 = vmatprep.subr.mxu0 0.0
    %v1596 = vand.u32 %v100, 4294901760
    %1597 = vmatpush1.msra.mxu0 %v1596
    %1598 = vmatprep.subr.mxu0 0.0
    %v1599 = vand.u32 %v101, 4294901760
    %1600 = vmatpush1.msra.mxu0 %v1599
    %1601 = vmatprep.subr.mxu0 0.0
    %v1602 = vand.u32 %v102, 4294901760
    %1603 = vmatpush1.msra.mxu0 %v1602
    %1604 = vmatprep.subr.mxu0 0.0
    %v1605 = vand.u32 %v103, 4294901760
    %1606 = vmatpush1.msra.mxu0 %v1605
    %1607 = vmatprep.subr.mxu0 0.0
    %v1608 = vand.u32 %v104, 4294901760
    %1609 = vmatpush1.msra.mxu0 %v1608
    %1610 = vmatprep.subr.mxu0 0.0
    %v1611 = vand.u32 %v105, 4294901760
    %1612 = vmatpush1.msra.mxu0 %v1611
    %1613 = vmatprep.subr.mxu0 0.0
    %v1614 = vand.u32 %v106, 4294901760
    %1615 = vmatpush1.msra.mxu0 %v1614
    %1616 = vmatprep.subr.mxu0 0.0
    %v1617 = vand.u32 %v107, 4294901760
    %1618 = vmatpush1.msra.mxu0 %v1617
    %v1619 = vand.u32 %v39, 4294901760
    %v1620 = vsub.f32 %v39, %v1619
    %v1621 = vand.u32 %v1620, 4294901760
    %1622 = vmatprep.mubr.f32.mxu0 %v1621
    %v1623 = vand.u32 %v38, 4294901760
    %v1624 = vsub.f32 %v38, %v1623
    %v1625 = vand.u32 %v1624, 4294901760
    %1626 = vmatmul.mubr.f32.gmra.mrb[0].mxu0 %v1625
    %v1627 = vpop.f32.mrb[0].mxu0
    %v1628 = vadd.f32 %v1520, %v1627
    %v1629 = vpop.f32.mrb[0].mxu0
    %1630 = vdwg.mxu0
    %1631 = vmatprep.subr.mxu0 0.0
    %v1632 = vand.u32 %v76, 4294901760
    %v1633 = vsub.f32 %v76, %v1632
    %v1634 = vand.u32 %v1633, 4294901760
    %1635 = vmatpush1.msra.mxu0 %v1634
    %1636 = vmatprep.subr.mxu0 0.0
    %v1637 = vand.u32 %v77, 4294901760
    %v1638 = vsub.f32 %v77, %v1637
    %v1639 = vand.u32 %v1638, 4294901760
    %1640 = vmatpush1.msra.mxu0 %v1639
    %1641 = vmatprep.subr.mxu0 0.0
    %v1642 = vand.u32 %v78, 4294901760
    %v1643 = vsub.f32 %v78, %v1642
    %v1644 = vand.u32 %v1643, 4294901760
    %1645 = vmatpush1.msra.mxu0 %v1644
    %1646 = vmatprep.subr.mxu0 0.0
    %v1647 = vand.u32 %v79, 4294901760
    %v1648 = vsub.f32 %v79, %v1647
    %v1649 = vand.u32 %v1648, 4294901760
    %1650 = vmatpush1.msra.mxu0 %v1649
    %1651 = vmatprep.subr.mxu0 0.0
    %v1652 = vand.u32 %v80, 4294901760
    %v1653 = vsub.f32 %v80, %v1652
    %v1654 = vand.u32 %v1653, 4294901760
    %1655 = vmatpush1.msra.mxu0 %v1654
    %1656 = vmatprep.subr.mxu0 0.0
    %v1657 = vand.u32 %v81, 4294901760
    %v1658 = vsub.f32 %v81, %v1657
    %v1659 = vand.u32 %v1658, 4294901760
    %1660 = vmatpush1.msra.mxu0 %v1659
    %1661 = vmatprep.subr.mxu0 0.0
    %v1662 = vand.u32 %v82, 4294901760
    %v1663 = vsub.f32 %v82, %v1662
    %v1664 = vand.u32 %v1663, 4294901760
    %1665 = vmatpush1.msra.mxu0 %v1664
    %1666 = vmatprep.subr.mxu0 0.0
    %v1667 = vand.u32 %v83, 4294901760
    %v1668 = vsub.f32 %v83, %v1667
    %v1669 = vand.u32 %v1668, 4294901760
    %1670 = vmatpush1.msra.mxu0 %v1669
    %1671 = vmatprep.subr.mxu0 0.0
    %v1672 = vand.u32 %v84, 4294901760
    %v1673 = vsub.f32 %v84, %v1672
    %v1674 = vand.u32 %v1673, 4294901760
    %1675 = vmatpush1.msra.mxu0 %v1674
    %1676 = vmatprep.subr.mxu0 0.0
    %v1677 = vand.u32 %v85, 4294901760
    %v1678 = vsub.f32 %v85, %v1677
    %v1679 = vand.u32 %v1678, 4294901760
    %1680 = vmatpush1.msra.mxu0 %v1679
    %1681 = vmatprep.subr.mxu0 0.0
    %v1682 = vand.u32 %v86, 4294901760
    %v1683 = vsub.f32 %v86, %v1682
    %v1684 = vand.u32 %v1683, 4294901760
    %1685 = vmatpush1.msra.mxu0 %v1684
    %1686 = vmatprep.subr.mxu0 0.0
    %v1687 = vand.u32 %v87, 4294901760
    %v1688 = vsub.f32 %v87, %v1687
    %v1689 = vand.u32 %v1688, 4294901760
    %1690 = vmatpush1.msra.mxu0 %v1689
    %1691 = vmatprep.subr.mxu0 0.0
    %v1692 = vand.u32 %v88, 4294901760
    %v1693 = vsub.f32 %v88, %v1692
    %v1694 = vand.u32 %v1693, 4294901760
    %1695 = vmatpush1.msra.mxu0 %v1694
    %1696 = vmatprep.subr.mxu0 0.0
    %v1697 = vand.u32 %v89, 4294901760
    %v1698 = vsub.f32 %v89, %v1697
    %v1699 = vand.u32 %v1698, 4294901760
    %1700 = vmatpush1.msra.mxu0 %v1699
    %1701 = vmatprep.subr.mxu0 0.0
    %v1702 = vand.u32 %v90, 4294901760
    %v1703 = vsub.f32 %v90, %v1702
    %v1704 = vand.u32 %v1703, 4294901760
    %1705 = vmatpush1.msra.mxu0 %v1704
    %1706 = vmatprep.subr.mxu0 0.0
    %v1707 = vand.u32 %v91, 4294901760
    %v1708 = vsub.f32 %v91, %v1707
    %v1709 = vand.u32 %v1708, 4294901760
    %1710 = vmatpush1.msra.mxu0 %v1709
    %1711 = vmatprep.subr.mxu0 0.0
    %v1712 = vand.u32 %v92, 4294901760
    %v1713 = vsub.f32 %v92, %v1712
    %v1714 = vand.u32 %v1713, 4294901760
    %1715 = vmatpush1.msra.mxu0 %v1714
    %1716 = vmatprep.subr.mxu0 0.0
    %v1717 = vand.u32 %v93, 4294901760
    %v1718 = vsub.f32 %v93, %v1717
    %v1719 = vand.u32 %v1718, 4294901760
    %1720 = vmatpush1.msra.mxu0 %v1719
    %1721 = vmatprep.subr.mxu0 0.0
    %v1722 = vand.u32 %v94, 4294901760
    %v1723 = vsub.f32 %v94, %v1722
    %v1724 = vand.u32 %v1723, 4294901760
    %1725 = vmatpush1.msra.mxu0 %v1724
    %1726 = vmatprep.subr.mxu0 0.0
    %v1727 = vand.u32 %v95, 4294901760
    %v1728 = vsub.f32 %v95, %v1727
    %v1729 = vand.u32 %v1728, 4294901760
    %1730 = vmatpush1.msra.mxu0 %v1729
    %1731 = vmatprep.subr.mxu0 0.0
    %v1732 = vand.u32 %v96, 4294901760
    %v1733 = vsub.f32 %v96, %v1732
    %v1734 = vand.u32 %v1733, 4294901760
    %1735 = vmatpush1.msra.mxu0 %v1734
    %1736 = vmatprep.subr.mxu0 0.0
    %v1737 = vand.u32 %v97, 4294901760
    %v1738 = vsub.f32 %v97, %v1737
    %v1739 = vand.u32 %v1738, 4294901760
    %1740 = vmatpush1.msra.mxu0 %v1739
    %1741 = vmatprep.subr.mxu0 0.0
    %v1742 = vand.u32 %v98, 4294901760
    %v1743 = vsub.f32 %v98, %v1742
    %v1744 = vand.u32 %v1743, 4294901760
    %1745 = vmatpush1.msra.mxu0 %v1744
    %1746 = vmatprep.subr.mxu0 0.0
    %v1747 = vand.u32 %v99, 4294901760
    %v1748 = vsub.f32 %v99, %v1747
    %v1749 = vand.u32 %v1748, 4294901760
    %1750 = vmatpush1.msra.mxu0 %v1749
    %1751 = vmatprep.subr.mxu0 0.0
    %v1752 = vand.u32 %v100, 4294901760
    %v1753 = vsub.f32 %v100, %v1752
    %v1754 = vand.u32 %v1753, 4294901760
    %1755 = vmatpush1.msra.mxu0 %v1754
    %1756 = vmatprep.subr.mxu0 0.0
    %v1757 = vand.u32 %v101, 4294901760
    %v1758 = vsub.f32 %v101, %v1757
    %v1759 = vand.u32 %v1758, 4294901760
    %1760 = vmatpush1.msra.mxu0 %v1759
    %1761 = vmatprep.subr.mxu0 0.0
    %v1762 = vand.u32 %v102, 4294901760
    %v1763 = vsub.f32 %v102, %v1762
    %v1764 = vand.u32 %v1763, 4294901760
    %1765 = vmatpush1.msra.mxu0 %v1764
    %1766 = vmatprep.subr.mxu0 0.0
    %v1767 = vand.u32 %v103, 4294901760
    %v1768 = vsub.f32 %v103, %v1767
    %v1769 = vand.u32 %v1768, 4294901760
    %1770 = vmatpush1.msra.mxu0 %v1769
    %1771 = vmatprep.subr.mxu0 0.0
    %v1772 = vand.u32 %v104, 4294901760
    %v1773 = vsub.f32 %v104, %v1772
    %v1774 = vand.u32 %v1773, 4294901760
    %1775 = vmatpush1.msra.mxu0 %v1774
    %1776 = vmatprep.subr.mxu0 0.0
    %v1777 = vand.u32 %v105, 4294901760
    %v1778 = vsub.f32 %v105, %v1777
    %v1779 = vand.u32 %v1778, 4294901760
    %1780 = vmatpush1.msra.mxu0 %v1779
    %1781 = vmatprep.subr.mxu0 0.0
    %v1782 = vand.u32 %v106, 4294901760
    %v1783 = vsub.f32 %v106, %v1782
    %v1784 = vand.u32 %v1783, 4294901760
    %1785 = vmatpush1.msra.mxu0 %v1784
    %1786 = vmatprep.subr.mxu0 0.0
    %v1787 = vand.u32 %v107, 4294901760
    %v1788 = vsub.f32 %v107, %v1787
    %v1789 = vand.u32 %v1788, 4294901760
    %1790 = vmatpush1.msra.mxu0 %v1789
    %v1791 = vand.u32 %v39, 4294901760
    %1792 = vmatprep.mubr.f32.mxu0 %v1791
    %v1793 = vand.u32 %v38, 4294901760
    %1794 = vmatmul.mubr.f32.gmra.mrb[0].mxu0 %v1793
    %v1795 = vpop.f32.mrb[0].mxu0
    %v1796 = vadd.f32 %v1628, %v1795
    %v1797 = vpop.f32.mrb[0].mxu0
    %1798 = vdwg.mxu0
    %1799 = vmatprep.subr.mxu0 0.0
    %v1800 = vand.u32 %v76, 4294901760
    %1801 = vmatpush1.msra.mxu0 %v1800
    %1802 = vmatprep.subr.mxu0 0.0
    %v1803 = vand.u32 %v77, 4294901760
    %1804 = vmatpush1.msra.mxu0 %v1803
    %1805 = vmatprep.subr.mxu0 0.0
    %v1806 = vand.u32 %v78, 4294901760
    %1807 = vmatpush1.msra.mxu0 %v1806
    %1808 = vmatprep.subr.mxu0 0.0
    %v1809 = vand.u32 %v79, 4294901760
    %1810 = vmatpush1.msra.mxu0 %v1809
    %1811 = vmatprep.subr.mxu0 0.0
    %v1812 = vand.u32 %v80, 4294901760
    %1813 = vmatpush1.msra.mxu0 %v1812
    %1814 = vmatprep.subr.mxu0 0.0
    %v1815 = vand.u32 %v81, 4294901760
    %1816 = vmatpush1.msra.mxu0 %v1815
    %1817 = vmatprep.subr.mxu0 0.0
    %v1818 = vand.u32 %v82, 4294901760
    %1819 = vmatpush1.msra.mxu0 %v1818
    %1820 = vmatprep.subr.mxu0 0.0
    %v1821 = vand.u32 %v83, 4294901760
    %1822 = vmatpush1.msra.mxu0 %v1821
    %1823 = vmatprep.subr.mxu0 0.0
    %v1824 = vand.u32 %v84, 4294901760
    %1825 = vmatpush1.msra.mxu0 %v1824
    %1826 = vmatprep.subr.mxu0 0.0
    %v1827 = vand.u32 %v85, 4294901760
    %1828 = vmatpush1.msra.mxu0 %v1827
    %1829 = vmatprep.subr.mxu0 0.0
    %v1830 = vand.u32 %v86, 4294901760
    %1831 = vmatpush1.msra.mxu0 %v1830
    %1832 = vmatprep.subr.mxu0 0.0
    %v1833 = vand.u32 %v87, 4294901760
    %1834 = vmatpush1.msra.mxu0 %v1833
    %1835 = vmatprep.subr.mxu0 0.0
    %v1836 = vand.u32 %v88, 4294901760
    %1837 = vmatpush1.msra.mxu0 %v1836
    %1838 = vmatprep.subr.mxu0 0.0
    %v1839 = vand.u32 %v89, 4294901760
    %1840 = vmatpush1.msra.mxu0 %v1839
    %1841 = vmatprep.subr.mxu0 0.0
    %v1842 = vand.u32 %v90, 4294901760
    %1843 = vmatpush1.msra.mxu0 %v1842
    %1844 = vmatprep.subr.mxu0 0.0
    %v1845 = vand.u32 %v91, 4294901760
    %1846 = vmatpush1.msra.mxu0 %v1845
    %1847 = vmatprep.subr.mxu0 0.0
    %v1848 = vand.u32 %v92, 4294901760
    %1849 = vmatpush1.msra.mxu0 %v1848
    %1850 = vmatprep.subr.mxu0 0.0
    %v1851 = vand.u32 %v93, 4294901760
    %1852 = vmatpush1.msra.mxu0 %v1851
    %1853 = vmatprep.subr.mxu0 0.0
    %v1854 = vand.u32 %v94, 4294901760
    %1855 = vmatpush1.msra.mxu0 %v1854
    %1856 = vmatprep.subr.mxu0 0.0
    %v1857 = vand.u32 %v95, 4294901760
    %1858 = vmatpush1.msra.mxu0 %v1857
    %1859 = vmatprep.subr.mxu0 0.0
    %v1860 = vand.u32 %v96, 4294901760
    %1861 = vmatpush1.msra.mxu0 %v1860
    %1862 = vmatprep.subr.mxu0 0.0
    %v1863 = vand.u32 %v97, 4294901760
    %1864 = vmatpush1.msra.mxu0 %v1863
    %1865 = vmatprep.subr.mxu0 0.0
    %v1866 = vand.u32 %v98, 4294901760
    %1867 = vmatpush1.msra.mxu0 %v1866
    %1868 = vmatprep.subr.mxu0 0.0
    %v1869 = vand.u32 %v99, 4294901760
    %1870 = vmatpush1.msra.mxu0 %v1869
    %1871 = vmatprep.subr.mxu0 0.0
    %v1872 = vand.u32 %v100, 4294901760
    %1873 = vmatpush1.msra.mxu0 %v1872
    %1874 = vmatprep.subr.mxu0 0.0
    %v1875 = vand.u32 %v101, 4294901760
    %1876 = vmatpush1.msra.mxu0 %v1875
    %1877 = vmatprep.subr.mxu0 0.0
    %v1878 = vand.u32 %v102, 4294901760
    %1879 = vmatpush1.msra.mxu0 %v1878
    %1880 = vmatprep.subr.mxu0 0.0
    %v1881 = vand.u32 %v103, 4294901760
    %1882 = vmatpush1.msra.mxu0 %v1881
    %1883 = vmatprep.subr.mxu0 0.0
    %v1884 = vand.u32 %v104, 4294901760
    %1885 = vmatpush1.msra.mxu0 %v1884
    %1886 = vmatprep.subr.mxu0 0.0
    %v1887 = vand.u32 %v105, 4294901760
    %1888 = vmatpush1.msra.mxu0 %v1887
    %1889 = vmatprep.subr.mxu0 0.0
    %v1890 = vand.u32 %v106, 4294901760
    %1891 = vmatpush1.msra.mxu0 %v1890
    %1892 = vmatprep.subr.mxu0 0.0
    %v1893 = vand.u32 %v107, 4294901760
    %1894 = vmatpush1.msra.mxu0 %v1893
    %v1895 = vand.u32 %v39, 4294901760
    %1896 = vmatprep.mubr.f32.mxu0 %v1895
    %v1897 = vand.u32 %v38, 4294901760
    %1898 = vmatmul.mubr.f32.gmra.mrb[0].mxu0 %v1897
    %v1899 = vpop.f32.mrb[0].mxu0
    %v1900 = vadd.f32 %v1796, %v1899
    %v1901 = vpop.f32.mrb[0].mxu0
    %1902 = vdwg.mxu0
    %1903 = vmatprep.subr.mxu0 0.0
    %v1904 = vand.u32 %v108, 4294901760
    %1905 = vmatpush1.msra.mxu0 %v1904
    %1906 = vmatprep.subr.mxu0 0.0
    %v1907 = vand.u32 %v109, 4294901760
    %1908 = vmatpush1.msra.mxu0 %v1907
    %1909 = vmatprep.subr.mxu0 0.0
    %v1910 = vand.u32 %v110, 4294901760
    %1911 = vmatpush1.msra.mxu0 %v1910
    %1912 = vmatprep.subr.mxu0 0.0
    %v1913 = vand.u32 %v111, 4294901760
    %1914 = vmatpush1.msra.mxu0 %v1913
    %1915 = vmatprep.subr.mxu0 0.0
    %v1916 = vand.u32 %v112, 4294901760
    %1917 = vmatpush1.msra.mxu0 %v1916
    %1918 = vmatprep.subr.mxu0 0.0
    %v1919 = vand.u32 %v113, 4294901760
    %1920 = vmatpush1.msra.mxu0 %v1919
    %1921 = vmatprep.subr.mxu0 0.0
    %v1922 = vand.u32 %v114, 4294901760
    %1923 = vmatpush1.msra.mxu0 %v1922
    %1924 = vmatprep.subr.mxu0 0.0
    %v1925 = vand.u32 %v115, 4294901760
    %1926 = vmatpush1.msra.mxu0 %v1925
    %1927 = vmatprep.subr.mxu0 0.0
    %v1928 = vand.u32 %v116, 4294901760
    %1929 = vmatpush1.msra.mxu0 %v1928
    %1930 = vmatprep.subr.mxu0 0.0
    %v1931 = vand.u32 %v117, 4294901760
    %1932 = vmatpush1.msra.mxu0 %v1931
    %1933 = vmatprep.subr.mxu0 0.0
    %v1934 = vand.u32 %v118, 4294901760
    %1935 = vmatpush1.msra.mxu0 %v1934
    %1936 = vmatprep.subr.mxu0 0.0
    %v1937 = vand.u32 %v119, 4294901760
    %1938 = vmatpush1.msra.mxu0 %v1937
    %1939 = vmatprep.subr.mxu0 0.0
    %v1940 = vand.u32 %v120, 4294901760
    %1941 = vmatpush1.msra.mxu0 %v1940
    %1942 = vmatprep.subr.mxu0 0.0
    %v1943 = vand.u32 %v121, 4294901760
    %1944 = vmatpush1.msra.mxu0 %v1943
    %1945 = vmatprep.subr.mxu0 0.0
    %v1946 = vand.u32 %v122, 4294901760
    %1947 = vmatpush1.msra.mxu0 %v1946
    %1948 = vmatprep.subr.mxu0 0.0
    %v1949 = vand.u32 %v123, 4294901760
    %1950 = vmatpush1.msra.mxu0 %v1949
    %1951 = vmatprep.subr.mxu0 0.0
    %v1952 = vand.u32 %v124, 4294901760
    %1953 = vmatpush1.msra.mxu0 %v1952
    %1954 = vmatprep.subr.mxu0 0.0
    %v1955 = vand.u32 %v125, 4294901760
    %1956 = vmatpush1.msra.mxu0 %v1955
    %1957 = vmatprep.subr.mxu0 0.0
    %v1958 = vand.u32 %v126, 4294901760
    %1959 = vmatpush1.msra.mxu0 %v1958
    %1960 = vmatprep.subr.mxu0 0.0
    %v1961 = vand.u32 %v127, 4294901760
    %1962 = vmatpush1.msra.mxu0 %v1961
    %1963 = vmatprep.subr.mxu0 0.0
    %v1964 = vand.u32 %v128, 4294901760
    %1965 = vmatpush1.msra.mxu0 %v1964
    %1966 = vmatprep.subr.mxu0 0.0
    %v1967 = vand.u32 %v129, 4294901760
    %1968 = vmatpush1.msra.mxu0 %v1967
    %1969 = vmatprep.subr.mxu0 0.0
    %v1970 = vand.u32 %v130, 4294901760
    %1971 = vmatpush1.msra.mxu0 %v1970
    %1972 = vmatprep.subr.mxu0 0.0
    %v1973 = vand.u32 %v131, 4294901760
    %1974 = vmatpush1.msra.mxu0 %v1973
    %1975 = vmatprep.subr.mxu0 0.0
    %v1976 = vand.u32 %v132, 4294901760
    %1977 = vmatpush1.msra.mxu0 %v1976
    %1978 = vmatprep.subr.mxu0 0.0
    %v1979 = vand.u32 %v133, 4294901760
    %1980 = vmatpush1.msra.mxu0 %v1979
    %1981 = vmatprep.subr.mxu0 0.0
    %v1982 = vand.u32 %v134, 4294901760
    %1983 = vmatpush1.msra.mxu0 %v1982
    %1984 = vmatprep.subr.mxu0 0.0
    %v1985 = vand.u32 %v135, 4294901760
    %1986 = vmatpush1.msra.mxu0 %v1985
    %1987 = vmatprep.subr.mxu0 0.0
    %v1988 = vand.u32 %v136, 4294901760
    %1989 = vmatpush1.msra.mxu0 %v1988
    %1990 = vmatprep.subr.mxu0 0.0
    %v1991 = vand.u32 %v137, 4294901760
    %1992 = vmatpush1.msra.mxu0 %v1991
    %1993 = vmatprep.subr.mxu0 0.0
    %v1994 = vand.u32 %v138, 4294901760
    %1995 = vmatpush1.msra.mxu0 %v1994
    %1996 = vmatprep.subr.mxu0 0.0
    %v1997 = vand.u32 %v139, 4294901760
    %1998 = vmatpush1.msra.mxu0 %v1997
    %v1999 = vand.u32 %v41, 4294901760
    %v2000 = vsub.f32 %v41, %v1999
    %v2001 = vand.u32 %v2000, 4294901760
    %v2002 = vsub.f32 %v2000, %v2001
    %v2003 = vand.u32 %v2002, 4294901760
    %2004 = vmatprep.mubr.f32.mxu0 %v2003
    %v2005 = vand.u32 %v40, 4294901760
    %v2006 = vsub.f32 %v40, %v2005
    %v2007 = vand.u32 %v2006, 4294901760
    %v2008 = vsub.f32 %v2006, %v2007
    %v2009 = vand.u32 %v2008, 4294901760
    %2010 = vmatmul.mubr.f32.gmra.mrb[0].mxu0 %v2009
    %v2011 = vpop.f32.mrb[0].mxu0
    %v2012 = vadd.f32 %v1900, %v2011
    %v2013 = vpop.f32.mrb[0].mxu0
    %2014 = vdwg.mxu0
    %2015 = vmatprep.subr.mxu0 0.0
    %v2016 = vand.u32 %v108, 4294901760
    %v2017 = vsub.f32 %v108, %v2016
    %v2018 = vand.u32 %v2017, 4294901760
    %v2019 = vsub.f32 %v2017, %v2018
    %v2020 = vand.u32 %v2019, 4294901760
    %2021 = vmatpush1.msra.mxu0 %v2020
    %2022 = vmatprep.subr.mxu0 0.0
    %v2023 = vand.u32 %v109, 4294901760
    %v2024 = vsub.f32 %v109, %v2023
    %v2025 = vand.u32 %v2024, 4294901760
    %v2026 = vsub.f32 %v2024, %v2025
    %v2027 = vand.u32 %v2026, 4294901760
    %2028 = vmatpush1.msra.mxu0 %v2027
    %2029 = vmatprep.subr.mxu0 0.0
    %v2030 = vand.u32 %v110, 4294901760
    %v2031 = vsub.f32 %v110, %v2030
    %v2032 = vand.u32 %v2031, 4294901760
    %v2033 = vsub.f32 %v2031, %v2032
    %v2034 = vand.u32 %v2033, 4294901760
    %2035 = vmatpush1.msra.mxu0 %v2034
    %2036 = vmatprep.subr.mxu0 0.0
    %v2037 = vand.u32 %v111, 4294901760
    %v2038 = vsub.f32 %v111, %v2037
    %v2039 = vand.u32 %v2038, 4294901760
    %v2040 = vsub.f32 %v2038, %v2039
    %v2041 = vand.u32 %v2040, 4294901760
    %2042 = vmatpush1.msra.mxu0 %v2041
    %2043 = vmatprep.subr.mxu0 0.0
    %v2044 = vand.u32 %v112, 4294901760
    %v2045 = vsub.f32 %v112, %v2044
    %v2046 = vand.u32 %v2045, 4294901760
    %v2047 = vsub.f32 %v2045, %v2046
    %v2048 = vand.u32 %v2047, 4294901760
    %2049 = vmatpush1.msra.mxu0 %v2048
    %2050 = vmatprep.subr.mxu0 0.0
    %v2051 = vand.u32 %v113, 4294901760
    %v2052 = vsub.f32 %v113, %v2051
    %v2053 = vand.u32 %v2052, 4294901760
    %v2054 = vsub.f32 %v2052, %v2053
    %v2055 = vand.u32 %v2054, 4294901760
    %2056 = vmatpush1.msra.mxu0 %v2055
    %2057 = vmatprep.subr.mxu0 0.0
    %v2058 = vand.u32 %v114, 4294901760
    %v2059 = vsub.f32 %v114, %v2058
    %v2060 = vand.u32 %v2059, 4294901760
    %v2061 = vsub.f32 %v2059, %v2060
    %v2062 = vand.u32 %v2061, 4294901760
    %2063 = vmatpush1.msra.mxu0 %v2062
    %2064 = vmatprep.subr.mxu0 0.0
    %v2065 = vand.u32 %v115, 4294901760
    %v2066 = vsub.f32 %v115, %v2065
    %v2067 = vand.u32 %v2066, 4294901760
    %v2068 = vsub.f32 %v2066, %v2067
    %v2069 = vand.u32 %v2068, 4294901760
    %2070 = vmatpush1.msra.mxu0 %v2069
    %2071 = vmatprep.subr.mxu0 0.0
    %v2072 = vand.u32 %v116, 4294901760
    %v2073 = vsub.f32 %v116, %v2072
    %v2074 = vand.u32 %v2073, 4294901760
    %v2075 = vsub.f32 %v2073, %v2074
    %v2076 = vand.u32 %v2075, 4294901760
    %2077 = vmatpush1.msra.mxu0 %v2076
    %2078 = vmatprep.subr.mxu0 0.0
    %v2079 = vand.u32 %v117, 4294901760
    %v2080 = vsub.f32 %v117, %v2079
    %v2081 = vand.u32 %v2080, 4294901760
    %v2082 = vsub.f32 %v2080, %v2081
    %v2083 = vand.u32 %v2082, 4294901760
    %2084 = vmatpush1.msra.mxu0 %v2083
    %2085 = vmatprep.subr.mxu0 0.0
    %v2086 = vand.u32 %v118, 4294901760
    %v2087 = vsub.f32 %v118, %v2086
    %v2088 = vand.u32 %v2087, 4294901760
    %v2089 = vsub.f32 %v2087, %v2088
    %v2090 = vand.u32 %v2089, 4294901760
    %2091 = vmatpush1.msra.mxu0 %v2090
    %2092 = vmatprep.subr.mxu0 0.0
    %v2093 = vand.u32 %v119, 4294901760
    %v2094 = vsub.f32 %v119, %v2093
    %v2095 = vand.u32 %v2094, 4294901760
    %v2096 = vsub.f32 %v2094, %v2095
    %v2097 = vand.u32 %v2096, 4294901760
    %2098 = vmatpush1.msra.mxu0 %v2097
    %2099 = vmatprep.subr.mxu0 0.0
    %v2100 = vand.u32 %v120, 4294901760
    %v2101 = vsub.f32 %v120, %v2100
    %v2102 = vand.u32 %v2101, 4294901760
    %v2103 = vsub.f32 %v2101, %v2102
    %v2104 = vand.u32 %v2103, 4294901760
    %2105 = vmatpush1.msra.mxu0 %v2104
    %2106 = vmatprep.subr.mxu0 0.0
    %v2107 = vand.u32 %v121, 4294901760
    %v2108 = vsub.f32 %v121, %v2107
    %v2109 = vand.u32 %v2108, 4294901760
    %v2110 = vsub.f32 %v2108, %v2109
    %v2111 = vand.u32 %v2110, 4294901760
    %2112 = vmatpush1.msra.mxu0 %v2111
    %2113 = vmatprep.subr.mxu0 0.0
    %v2114 = vand.u32 %v122, 4294901760
    %v2115 = vsub.f32 %v122, %v2114
    %v2116 = vand.u32 %v2115, 4294901760
    %v2117 = vsub.f32 %v2115, %v2116
    %v2118 = vand.u32 %v2117, 4294901760
    %2119 = vmatpush1.msra.mxu0 %v2118
    %2120 = vmatprep.subr.mxu0 0.0
    %v2121 = vand.u32 %v123, 4294901760
    %v2122 = vsub.f32 %v123, %v2121
    %v2123 = vand.u32 %v2122, 4294901760
    %v2124 = vsub.f32 %v2122, %v2123
    %v2125 = vand.u32 %v2124, 4294901760
    %2126 = vmatpush1.msra.mxu0 %v2125
    %2127 = vmatprep.subr.mxu0 0.0
    %v2128 = vand.u32 %v124, 4294901760
    %v2129 = vsub.f32 %v124, %v2128
    %v2130 = vand.u32 %v2129, 4294901760
    %v2131 = vsub.f32 %v2129, %v2130
    %v2132 = vand.u32 %v2131, 4294901760
    %2133 = vmatpush1.msra.mxu0 %v2132
    %2134 = vmatprep.subr.mxu0 0.0
    %v2135 = vand.u32 %v125, 4294901760
    %v2136 = vsub.f32 %v125, %v2135
    %v2137 = vand.u32 %v2136, 4294901760
    %v2138 = vsub.f32 %v2136, %v2137
    %v2139 = vand.u32 %v2138, 4294901760
    %2140 = vmatpush1.msra.mxu0 %v2139
    %2141 = vmatprep.subr.mxu0 0.0
    %v2142 = vand.u32 %v126, 4294901760
    %v2143 = vsub.f32 %v126, %v2142
    %v2144 = vand.u32 %v2143, 4294901760
    %v2145 = vsub.f32 %v2143, %v2144
    %v2146 = vand.u32 %v2145, 4294901760
    %2147 = vmatpush1.msra.mxu0 %v2146
    %2148 = vmatprep.subr.mxu0 0.0
    %v2149 = vand.u32 %v127, 4294901760
    %v2150 = vsub.f32 %v127, %v2149
    %v2151 = vand.u32 %v2150, 4294901760
    %v2152 = vsub.f32 %v2150, %v2151
    %v2153 = vand.u32 %v2152, 4294901760
    %2154 = vmatpush1.msra.mxu0 %v2153
    %2155 = vmatprep.subr.mxu0 0.0
    %v2156 = vand.u32 %v128, 4294901760
    %v2157 = vsub.f32 %v128, %v2156
    %v2158 = vand.u32 %v2157, 4294901760
    %v2159 = vsub.f32 %v2157, %v2158
    %v2160 = vand.u32 %v2159, 4294901760
    %2161 = vmatpush1.msra.mxu0 %v2160
    %2162 = vmatprep.subr.mxu0 0.0
    %v2163 = vand.u32 %v129, 4294901760
    %v2164 = vsub.f32 %v129, %v2163
    %v2165 = vand.u32 %v2164, 4294901760
    %v2166 = vsub.f32 %v2164, %v2165
    %v2167 = vand.u32 %v2166, 4294901760
    %2168 = vmatpush1.msra.mxu0 %v2167
    %2169 = vmatprep.subr.mxu0 0.0
    %v2170 = vand.u32 %v130, 4294901760
    %v2171 = vsub.f32 %v130, %v2170
    %v2172 = vand.u32 %v2171, 4294901760
    %v2173 = vsub.f32 %v2171, %v2172
    %v2174 = vand.u32 %v2173, 4294901760
    %2175 = vmatpush1.msra.mxu0 %v2174
    %2176 = vmatprep.subr.mxu0 0.0
    %v2177 = vand.u32 %v131, 4294901760
    %v2178 = vsub.f32 %v131, %v2177
    %v2179 = vand.u32 %v2178, 4294901760
    %v2180 = vsub.f32 %v2178, %v2179
    %v2181 = vand.u32 %v2180, 4294901760
    %2182 = vmatpush1.msra.mxu0 %v2181
    %2183 = vmatprep.subr.mxu0 0.0
    %v2184 = vand.u32 %v132, 4294901760
    %v2185 = vsub.f32 %v132, %v2184
    %v2186 = vand.u32 %v2185, 4294901760
    %v2187 = vsub.f32 %v2185, %v2186
    %v2188 = vand.u32 %v2187, 4294901760
    %2189 = vmatpush1.msra.mxu0 %v2188
    %2190 = vmatprep.subr.mxu0 0.0
    %v2191 = vand.u32 %v133, 4294901760
    %v2192 = vsub.f32 %v133, %v2191
    %v2193 = vand.u32 %v2192, 4294901760
    %v2194 = vsub.f32 %v2192, %v2193
    %v2195 = vand.u32 %v2194, 4294901760
    %2196 = vmatpush1.msra.mxu0 %v2195
    %2197 = vmatprep.subr.mxu0 0.0
    %v2198 = vand.u32 %v134, 4294901760
    %v2199 = vsub.f32 %v134, %v2198
    %v2200 = vand.u32 %v2199, 4294901760
    %v2201 = vsub.f32 %v2199, %v2200
    %v2202 = vand.u32 %v2201, 4294901760
    %2203 = vmatpush1.msra.mxu0 %v2202
    %2204 = vmatprep.subr.mxu0 0.0
    %v2205 = vand.u32 %v135, 4294901760
    %v2206 = vsub.f32 %v135, %v2205
    %v2207 = vand.u32 %v2206, 4294901760
    %v2208 = vsub.f32 %v2206, %v2207
    %v2209 = vand.u32 %v2208, 4294901760
    %2210 = vmatpush1.msra.mxu0 %v2209
    %2211 = vmatprep.subr.mxu0 0.0
    %v2212 = vand.u32 %v136, 4294901760
    %v2213 = vsub.f32 %v136, %v2212
    %v2214 = vand.u32 %v2213, 4294901760
    %v2215 = vsub.f32 %v2213, %v2214
    %v2216 = vand.u32 %v2215, 4294901760
    %2217 = vmatpush1.msra.mxu0 %v2216
    %2218 = vmatprep.subr.mxu0 0.0
    %v2219 = vand.u32 %v137, 4294901760
    %v2220 = vsub.f32 %v137, %v2219
    %v2221 = vand.u32 %v2220, 4294901760
    %v2222 = vsub.f32 %v2220, %v2221
    %v2223 = vand.u32 %v2222, 4294901760
    %2224 = vmatpush1.msra.mxu0 %v2223
    %2225 = vmatprep.subr.mxu0 0.0
    %v2226 = vand.u32 %v138, 4294901760
    %v2227 = vsub.f32 %v138, %v2226
    %v2228 = vand.u32 %v2227, 4294901760
    %v2229 = vsub.f32 %v2227, %v2228
    %v2230 = vand.u32 %v2229, 4294901760
    %2231 = vmatpush1.msra.mxu0 %v2230
    %2232 = vmatprep.subr.mxu0 0.0
    %v2233 = vand.u32 %v139, 4294901760
    %v2234 = vsub.f32 %v139, %v2233
    %v2235 = vand.u32 %v2234, 4294901760
    %v2236 = vsub.f32 %v2234, %v2235
    %v2237 = vand.u32 %v2236, 4294901760
    %2238 = vmatpush1.msra.mxu0 %v2237
    %v2239 = vand.u32 %v41, 4294901760
    %2240 = vmatprep.mubr.f32.mxu0 %v2239
    %v2241 = vand.u32 %v40, 4294901760
    %2242 = vmatmul.mubr.f32.gmra.mrb[0].mxu0 %v2241
    %v2243 = vpop.f32.mrb[0].mxu0
    %v2244 = vadd.f32 %v2012, %v2243
    %v2245 = vpop.f32.mrb[0].mxu0
    %2246 = vdwg.mxu0
    %2247 = vmatprep.subr.mxu0 0.0
    %v2248 = vand.u32 %v108, 4294901760
    %v2249 = vsub.f32 %v108, %v2248
    %2250 = vmatpush1.msra.mxu0 %v2249
    %2251 = vmatprep.subr.mxu0 0.0
    %v2252 = vand.u32 %v109, 4294901760
    %v2253 = vsub.f32 %v109, %v2252
    %2254 = vmatpush1.msra.mxu0 %v2253
    %2255 = vmatprep.subr.mxu0 0.0
    %v2256 = vand.u32 %v110, 4294901760
    %v2257 = vsub.f32 %v110, %v2256
    %2258 = vmatpush1.msra.mxu0 %v2257
    %2259 = vmatprep.subr.mxu0 0.0
    %v2260 = vand.u32 %v111, 4294901760
    %v2261 = vsub.f32 %v111, %v2260
    %2262 = vmatpush1.msra.mxu0 %v2261
    %2263 = vmatprep.subr.mxu0 0.0
    %v2264 = vand.u32 %v112, 4294901760
    %v2265 = vsub.f32 %v112, %v2264
    %2266 = vmatpush1.msra.mxu0 %v2265
    %2267 = vmatprep.subr.mxu0 0.0
    %v2268 = vand.u32 %v113, 4294901760
    %v2269 = vsub.f32 %v113, %v2268
    %2270 = vmatpush1.msra.mxu0 %v2269
    %2271 = vmatprep.subr.mxu0 0.0
    %v2272 = vand.u32 %v114, 4294901760
    %v2273 = vsub.f32 %v114, %v2272
    %2274 = vmatpush1.msra.mxu0 %v2273
    %2275 = vmatprep.subr.mxu0 0.0
    %v2276 = vand.u32 %v115, 4294901760
    %v2277 = vsub.f32 %v115, %v2276
    %2278 = vmatpush1.msra.mxu0 %v2277
    %2279 = vmatprep.subr.mxu0 0.0
    %v2280 = vand.u32 %v116, 4294901760
    %v2281 = vsub.f32 %v116, %v2280
    %2282 = vmatpush1.msra.mxu0 %v2281
    %2283 = vmatprep.subr.mxu0 0.0
    %v2284 = vand.u32 %v117, 4294901760
    %v2285 = vsub.f32 %v117, %v2284
    %2286 = vmatpush1.msra.mxu0 %v2285
    %2287 = vmatprep.subr.mxu0 0.0
    %v2288 = vand.u32 %v118, 4294901760
    %v2289 = vsub.f32 %v118, %v2288
    %2290 = vmatpush1.msra.mxu0 %v2289
    %2291 = vmatprep.subr.mxu0 0.0
    %v2292 = vand.u32 %v119, 4294901760
    %v2293 = vsub.f32 %v119, %v2292
    %2294 = vmatpush1.msra.mxu0 %v2293
    %2295 = vmatprep.subr.mxu0 0.0
    %v2296 = vand.u32 %v120, 4294901760
    %v2297 = vsub.f32 %v120, %v2296
    %2298 = vmatpush1.msra.mxu0 %v2297
    %2299 = vmatprep.subr.mxu0 0.0
    %v2300 = vand.u32 %v121, 4294901760
    %v2301 = vsub.f32 %v121, %v2300
    %2302 = vmatpush1.msra.mxu0 %v2301
    %2303 = vmatprep.subr.mxu0 0.0
    %v2304 = vand.u32 %v122, 4294901760
    %v2305 = vsub.f32 %v122, %v2304
    %2306 = vmatpush1.msra.mxu0 %v2305
    %2307 = vmatprep.subr.mxu0 0.0
    %v2308 = vand.u32 %v123, 4294901760
    %v2309 = vsub.f32 %v123, %v2308
    %2310 = vmatpush1.msra.mxu0 %v2309
    %2311 = vmatprep.subr.mxu0 0.0
    %v2312 = vand.u32 %v124, 4294901760
    %v2313 = vsub.f32 %v124, %v2312
    %2314 = vmatpush1.msra.mxu0 %v2313
    %2315 = vmatprep.subr.mxu0 0.0
    %v2316 = vand.u32 %v125, 4294901760
    %v2317 = vsub.f32 %v125, %v2316
    %2318 = vmatpush1.msra.mxu0 %v2317
    %2319 = vmatprep.subr.mxu0 0.0
    %v2320 = vand.u32 %v126, 4294901760
    %v2321 = vsub.f32 %v126, %v2320
    %2322 = vmatpush1.msra.mxu0 %v2321
    %2323 = vmatprep.subr.mxu0 0.0
    %v2324 = vand.u32 %v127, 4294901760
    %v2325 = vsub.f32 %v127, %v2324
    %2326 = vmatpush1.msra.mxu0 %v2325
    %2327 = vmatprep.subr.mxu0 0.0
    %v2328 = vand.u32 %v128, 4294901760
    %v2329 = vsub.f32 %v128, %v2328
    %2330 = vmatpush1.msra.mxu0 %v2329
    %2331 = vmatprep.subr.mxu0 0.0
    %v2332 = vand.u32 %v129, 4294901760
    %v2333 = vsub.f32 %v129, %v2332
    %2334 = vmatpush1.msra.mxu0 %v2333
    %2335 = vmatprep.subr.mxu0 0.0
    %v2336 = vand.u32 %v130, 4294901760
    %v2337 = vsub.f32 %v130, %v2336
    %2338 = vmatpush1.msra.mxu0 %v2337
    %2339 = vmatprep.subr.mxu0 0.0
    %v2340 = vand.u32 %v131, 4294901760
    %v2341 = vsub.f32 %v131, %v2340
    %2342 = vmatpush1.msra.mxu0 %v2341
    %2343 = vmatprep.subr.mxu0 0.0
    %v2344 = vand.u32 %v132, 4294901760
    %v2345 = vsub.f32 %v132, %v2344
    %2346 = vmatpush1.msra.mxu0 %v2345
    %2347 = vmatprep.subr.mxu0 0.0
    %v2348 = vand.u32 %v133, 4294901760
    %v2349 = vsub.f32 %v133, %v2348
    %2350 = vmatpush1.msra.mxu0 %v2349
    %2351 = vmatprep.subr.mxu0 0.0
    %v2352 = vand.u32 %v134, 4294901760
    %v2353 = vsub.f32 %v134, %v2352
    %2354 = vmatpush1.msra.mxu0 %v2353
    %2355 = vmatprep.subr.mxu0 0.0
    %v2356 = vand.u32 %v135, 4294901760
    %v2357 = vsub.f32 %v135, %v2356
    %2358 = vmatpush1.msra.mxu0 %v2357
    %2359 = vmatprep.subr.mxu0 0.0
    %v2360 = vand.u32 %v136, 4294901760
    %v2361 = vsub.f32 %v136, %v2360
    %2362 = vmatpush1.msra.mxu0 %v2361
    %2363 = vmatprep.subr.mxu0 0.0
    %v2364 = vand.u32 %v137, 4294901760
    %v2365 = vsub.f32 %v137, %v2364
    %2366 = vmatpush1.msra.mxu0 %v2365
    %2367 = vmatprep.subr.mxu0 0.0
    %v2368 = vand.u32 %v138, 4294901760
    %v2369 = vsub.f32 %v138, %v2368
    %2370 = vmatpush1.msra.mxu0 %v2369
    %2371 = vmatprep.subr.mxu0 0.0
    %v2372 = vand.u32 %v139, 4294901760
    %v2373 = vsub.f32 %v139, %v2372
    %2374 = vmatpush1.msra.mxu0 %v2373
    %v2375 = vand.u32 %v41, 4294901760
    %v2376 = vsub.f32 %v41, %v2375
    %2377 = vmatprep.mubr.f32.mxu0 %v2376
    %v2378 = vand.u32 %v40, 4294901760
    %v2379 = vsub.f32 %v40, %v2378
    %2380 = vmatmul.mubr.f32.gmra.mrb[0].mxu0 %v2379
    %v2381 = vpop.f32.mrb[0].mxu0
    %v2382 = vadd.f32 %v2244, %v2381
    %v2383 = vpop.f32.mrb[0].mxu0
    %2384 = vdwg.mxu0
    %2385 = vmatprep.subr.mxu0 0.0
    %v2386 = vand.u32 %v108, 4294901760
    %2387 = vmatpush1.msra.mxu0 %v2386
    %2388 = vmatprep.subr.mxu0 0.0
    %v2389 = vand.u32 %v109, 4294901760
    %2390 = vmatpush1.msra.mxu0 %v2389
    %2391 = vmatprep.subr.mxu0 0.0
    %v2392 = vand.u32 %v110, 4294901760
    %2393 = vmatpush1.msra.mxu0 %v2392
    %2394 = vmatprep.subr.mxu0 0.0
    %v2395 = vand.u32 %v111, 4294901760
    %2396 = vmatpush1.msra.mxu0 %v2395
    %2397 = vmatprep.subr.mxu0 0.0
    %v2398 = vand.u32 %v112, 4294901760
    %2399 = vmatpush1.msra.mxu0 %v2398
    %2400 = vmatprep.subr.mxu0 0.0
    %v2401 = vand.u32 %v113, 4294901760
    %2402 = vmatpush1.msra.mxu0 %v2401
    %2403 = vmatprep.subr.mxu0 0.0
    %v2404 = vand.u32 %v114, 4294901760
    %2405 = vmatpush1.msra.mxu0 %v2404
    %2406 = vmatprep.subr.mxu0 0.0
    %v2407 = vand.u32 %v115, 4294901760
    %2408 = vmatpush1.msra.mxu0 %v2407
    %2409 = vmatprep.subr.mxu0 0.0
    %v2410 = vand.u32 %v116, 4294901760
    %2411 = vmatpush1.msra.mxu0 %v2410
    %2412 = vmatprep.subr.mxu0 0.0
    %v2413 = vand.u32 %v117, 4294901760
    %2414 = vmatpush1.msra.mxu0 %v2413
    %2415 = vmatprep.subr.mxu0 0.0
    %v2416 = vand.u32 %v118, 4294901760
    %2417 = vmatpush1.msra.mxu0 %v2416
    %2418 = vmatprep.subr.mxu0 0.0
    %v2419 = vand.u32 %v119, 4294901760
    %2420 = vmatpush1.msra.mxu0 %v2419
    %2421 = vmatprep.subr.mxu0 0.0
    %v2422 = vand.u32 %v120, 4294901760
    %2423 = vmatpush1.msra.mxu0 %v2422
    %2424 = vmatprep.subr.mxu0 0.0
    %v2425 = vand.u32 %v121, 4294901760
    %2426 = vmatpush1.msra.mxu0 %v2425
    %2427 = vmatprep.subr.mxu0 0.0
    %v2428 = vand.u32 %v122, 4294901760
    %2429 = vmatpush1.msra.mxu0 %v2428
    %2430 = vmatprep.subr.mxu0 0.0
    %v2431 = vand.u32 %v123, 4294901760
    %2432 = vmatpush1.msra.mxu0 %v2431
    %2433 = vmatprep.subr.mxu0 0.0
    %v2434 = vand.u32 %v124, 4294901760
    %2435 = vmatpush1.msra.mxu0 %v2434
    %2436 = vmatprep.subr.mxu0 0.0
    %v2437 = vand.u32 %v125, 4294901760
    %2438 = vmatpush1.msra.mxu0 %v2437
    %2439 = vmatprep.subr.mxu0 0.0
    %v2440 = vand.u32 %v126, 4294901760
    %2441 = vmatpush1.msra.mxu0 %v2440
    %2442 = vmatprep.subr.mxu0 0.0
    %v2443 = vand.u32 %v127, 4294901760
    %2444 = vmatpush1.msra.mxu0 %v2443
    %2445 = vmatprep.subr.mxu0 0.0
    %v2446 = vand.u32 %v128, 4294901760
    %2447 = vmatpush1.msra.mxu0 %v2446
    %2448 = vmatprep.subr.mxu0 0.0
    %v2449 = vand.u32 %v129, 4294901760
    %2450 = vmatpush1.msra.mxu0 %v2449
    %2451 = vmatprep.subr.mxu0 0.0
    %v2452 = vand.u32 %v130, 4294901760
    %2453 = vmatpush1.msra.mxu0 %v2452
    %2454 = vmatprep.subr.mxu0 0.0
    %v2455 = vand.u32 %v131, 4294901760
    %2456 = vmatpush1.msra.mxu0 %v2455
    %2457 = vmatprep.subr.mxu0 0.0
    %v2458 = vand.u32 %v132, 4294901760
    %2459 = vmatpush1.msra.mxu0 %v2458
    %2460 = vmatprep.subr.mxu0 0.0
    %v2461 = vand.u32 %v133, 4294901760
    %2462 = vmatpush1.msra.mxu0 %v2461
    %2463 = vmatprep.subr.mxu0 0.0
    %v2464 = vand.u32 %v134, 4294901760
    %2465 = vmatpush1.msra.mxu0 %v2464
    %2466 = vmatprep.subr.mxu0 0.0
    %v2467 = vand.u32 %v135, 4294901760
    %2468 = vmatpush1.msra.mxu0 %v2467
    %2469 = vmatprep.subr.mxu0 0.0
    %v2470 = vand.u32 %v136, 4294901760
    %2471 = vmatpush1.msra.mxu0 %v2470
    %2472 = vmatprep.subr.mxu0 0.0
    %v2473 = vand.u32 %v137, 4294901760
    %2474 = vmatpush1.msra.mxu0 %v2473
    %2475 = vmatprep.subr.mxu0 0.0
    %v2476 = vand.u32 %v138, 4294901760
    %2477 = vmatpush1.msra.mxu0 %v2476
    %2478 = vmatprep.subr.mxu0 0.0
    %v2479 = vand.u32 %v139, 4294901760
    %2480 = vmatpush1.msra.mxu0 %v2479
    %v2481 = vand.u32 %v41, 4294901760
    %v2482 = vsub.f32 %v41, %v2481
    %v2483 = vand.u32 %v2482, 4294901760
    %2484 = vmatprep.mubr.f32.mxu0 %v2483
    %v2485 = vand.u32 %v40, 4294901760
    %v2486 = vsub.f32 %v40, %v2485
    %v2487 = vand.u32 %v2486, 4294901760
    %2488 = vmatmul.mubr.f32.gmra.mrb[0].mxu0 %v2487
    %v2489 = vpop.f32.mrb[0].mxu0
    %v2490 = vadd.f32 %v2382, %v2489
    %v2491 = vpop.f32.mrb[0].mxu0
    %2492 = vdwg.mxu0
    %2493 = vmatprep.subr.mxu0 0.0
    %v2494 = vand.u32 %v108, 4294901760
    %v2495 = vsub.f32 %v108, %v2494
    %v2496 = vand.u32 %v2495, 4294901760
    %2497 = vmatpush1.msra.mxu0 %v2496
    %2498 = vmatprep.subr.mxu0 0.0
    %v2499 = vand.u32 %v109, 4294901760
    %v2500 = vsub.f32 %v109, %v2499
    %v2501 = vand.u32 %v2500, 4294901760
    %2502 = vmatpush1.msra.mxu0 %v2501
    %2503 = vmatprep.subr.mxu0 0.0
    %v2504 = vand.u32 %v110, 4294901760
    %v2505 = vsub.f32 %v110, %v2504
    %v2506 = vand.u32 %v2505, 4294901760
    %2507 = vmatpush1.msra.mxu0 %v2506
    %2508 = vmatprep.subr.mxu0 0.0
    %v2509 = vand.u32 %v111, 4294901760
    %v2510 = vsub.f32 %v111, %v2509
    %v2511 = vand.u32 %v2510, 4294901760
    %2512 = vmatpush1.msra.mxu0 %v2511
    %2513 = vmatprep.subr.mxu0 0.0
    %v2514 = vand.u32 %v112, 4294901760
    %v2515 = vsub.f32 %v112, %v2514
    %v2516 = vand.u32 %v2515, 4294901760
    %2517 = vmatpush1.msra.mxu0 %v2516
    %2518 = vmatprep.subr.mxu0 0.0
    %v2519 = vand.u32 %v113, 4294901760
    %v2520 = vsub.f32 %v113, %v2519
    %v2521 = vand.u32 %v2520, 4294901760
    %2522 = vmatpush1.msra.mxu0 %v2521
    %2523 = vmatprep.subr.mxu0 0.0
    %v2524 = vand.u32 %v114, 4294901760
    %v2525 = vsub.f32 %v114, %v2524
    %v2526 = vand.u32 %v2525, 4294901760
    %2527 = vmatpush1.msra.mxu0 %v2526
    %2528 = vmatprep.subr.mxu0 0.0
    %v2529 = vand.u32 %v115, 4294901760
    %v2530 = vsub.f32 %v115, %v2529
    %v2531 = vand.u32 %v2530, 4294901760
    %2532 = vmatpush1.msra.mxu0 %v2531
    %2533 = vmatprep.subr.mxu0 0.0
    %v2534 = vand.u32 %v116, 4294901760
    %v2535 = vsub.f32 %v116, %v2534
    %v2536 = vand.u32 %v2535, 4294901760
    %2537 = vmatpush1.msra.mxu0 %v2536
    %2538 = vmatprep.subr.mxu0 0.0
    %v2539 = vand.u32 %v117, 4294901760
    %v2540 = vsub.f32 %v117, %v2539
    %v2541 = vand.u32 %v2540, 4294901760
    %2542 = vmatpush1.msra.mxu0 %v2541
    %2543 = vmatprep.subr.mxu0 0.0
    %v2544 = vand.u32 %v118, 4294901760
    %v2545 = vsub.f32 %v118, %v2544
    %v2546 = vand.u32 %v2545, 4294901760
    %2547 = vmatpush1.msra.mxu0 %v2546
    %2548 = vmatprep.subr.mxu0 0.0
    %v2549 = vand.u32 %v119, 4294901760
    %v2550 = vsub.f32 %v119, %v2549
    %v2551 = vand.u32 %v2550, 4294901760
    %2552 = vmatpush1.msra.mxu0 %v2551
    %2553 = vmatprep.subr.mxu0 0.0
    %v2554 = vand.u32 %v120, 4294901760
    %v2555 = vsub.f32 %v120, %v2554
    %v2556 = vand.u32 %v2555, 4294901760
    %2557 = vmatpush1.msra.mxu0 %v2556
    %2558 = vmatprep.subr.mxu0 0.0
    %v2559 = vand.u32 %v121, 4294901760
    %v2560 = vsub.f32 %v121, %v2559
    %v2561 = vand.u32 %v2560, 4294901760
    %2562 = vmatpush1.msra.mxu0 %v2561
    %2563 = vmatprep.subr.mxu0 0.0
    %v2564 = vand.u32 %v122, 4294901760
    %v2565 = vsub.f32 %v122, %v2564
    %v2566 = vand.u32 %v2565, 4294901760
    %2567 = vmatpush1.msra.mxu0 %v2566
    %2568 = vmatprep.subr.mxu0 0.0
    %v2569 = vand.u32 %v123, 4294901760
    %v2570 = vsub.f32 %v123, %v2569
    %v2571 = vand.u32 %v2570, 4294901760
    %2572 = vmatpush1.msra.mxu0 %v2571
    %2573 = vmatprep.subr.mxu0 0.0
    %v2574 = vand.u32 %v124, 4294901760
    %v2575 = vsub.f32 %v124, %v2574
    %v2576 = vand.u32 %v2575, 4294901760
    %2577 = vmatpush1.msra.mxu0 %v2576
    %2578 = vmatprep.subr.mxu0 0.0
    %v2579 = vand.u32 %v125, 4294901760
    %v2580 = vsub.f32 %v125, %v2579
    %v2581 = vand.u32 %v2580, 4294901760
    %2582 = vmatpush1.msra.mxu0 %v2581
    %2583 = vmatprep.subr.mxu0 0.0
    %v2584 = vand.u32 %v126, 4294901760
    %v2585 = vsub.f32 %v126, %v2584
    %v2586 = vand.u32 %v2585, 4294901760
    %2587 = vmatpush1.msra.mxu0 %v2586
    %2588 = vmatprep.subr.mxu0 0.0
    %v2589 = vand.u32 %v127, 4294901760
    %v2590 = vsub.f32 %v127, %v2589
    %v2591 = vand.u32 %v2590, 4294901760
    %2592 = vmatpush1.msra.mxu0 %v2591
    %2593 = vmatprep.subr.mxu0 0.0
    %v2594 = vand.u32 %v128, 4294901760
    %v2595 = vsub.f32 %v128, %v2594
    %v2596 = vand.u32 %v2595, 4294901760
    %2597 = vmatpush1.msra.mxu0 %v2596
    %2598 = vmatprep.subr.mxu0 0.0
    %v2599 = vand.u32 %v129, 4294901760
    %v2600 = vsub.f32 %v129, %v2599
    %v2601 = vand.u32 %v2600, 4294901760
    %2602 = vmatpush1.msra.mxu0 %v2601
    %2603 = vmatprep.subr.mxu0 0.0
    %v2604 = vand.u32 %v130, 4294901760
    %v2605 = vsub.f32 %v130, %v2604
    %v2606 = vand.u32 %v2605, 4294901760
    %2607 = vmatpush1.msra.mxu0 %v2606
    %2608 = vmatprep.subr.mxu0 0.0
    %v2609 = vand.u32 %v131, 4294901760
    %v2610 = vsub.f32 %v131, %v2609
    %v2611 = vand.u32 %v2610, 4294901760
    %2612 = vmatpush1.msra.mxu0 %v2611
    %2613 = vmatprep.subr.mxu0 0.0
    %v2614 = vand.u32 %v132, 4294901760
    %v2615 = vsub.f32 %v132, %v2614
    %v2616 = vand.u32 %v2615, 4294901760
    %2617 = vmatpush1.msra.mxu0 %v2616
    %2618 = vmatprep.subr.mxu0 0.0
    %v2619 = vand.u32 %v133, 4294901760
    %v2620 = vsub.f32 %v133, %v2619
    %v2621 = vand.u32 %v2620, 4294901760
    %2622 = vmatpush1.msra.mxu0 %v2621
    %2623 = vmatprep.subr.mxu0 0.0
    %v2624 = vand.u32 %v134, 4294901760
    %v2625 = vsub.f32 %v134, %v2624
    %v2626 = vand.u32 %v2625, 4294901760
    %2627 = vmatpush1.msra.mxu0 %v2626
    %2628 = vmatprep.subr.mxu0 0.0
    %v2629 = vand.u32 %v135, 4294901760
    %v2630 = vsub.f32 %v135, %v2629
    %v2631 = vand.u32 %v2630, 4294901760
    %2632 = vmatpush1.msra.mxu0 %v2631
    %2633 = vmatprep.subr.mxu0 0.0
    %v2634 = vand.u32 %v136, 4294901760
    %v2635 = vsub.f32 %v136, %v2634
    %v2636 = vand.u32 %v2635, 4294901760
    %2637 = vmatpush1.msra.mxu0 %v2636
    %2638 = vmatprep.subr.mxu0 0.0
    %v2639 = vand.u32 %v137, 4294901760
    %v2640 = vsub.f32 %v137, %v2639
    %v2641 = vand.u32 %v2640, 4294901760
    %2642 = vmatpush1.msra.mxu0 %v2641
    %2643 = vmatprep.subr.mxu0 0.0
    %v2644 = vand.u32 %v138, 4294901760
    %v2645 = vsub.f32 %v138, %v2644
    %v2646 = vand.u32 %v2645, 4294901760
    %2647 = vmatpush1.msra.mxu0 %v2646
    %2648 = vmatprep.subr.mxu0 0.0
    %v2649 = vand.u32 %v139, 4294901760
    %v2650 = vsub.f32 %v139, %v2649
    %v2651 = vand.u32 %v2650, 4294901760
    %2652 = vmatpush1.msra.mxu0 %v2651
    %v2653 = vand.u32 %v41, 4294901760
    %2654 = vmatprep.mubr.f32.mxu0 %v2653
    %v2655 = vand.u32 %v40, 4294901760
    %2656 = vmatmul.mubr.f32.gmra.mrb[0].mxu0 %v2655
    %v2657 = vpop.f32.mrb[0].mxu0
    %v2658 = vadd.f32 %v2490, %v2657
    %v2659 = vpop.f32.mrb[0].mxu0
    %2660 = vdwg.mxu0
    %2661 = vmatprep.subr.mxu0 0.0
    %v2662 = vand.u32 %v108, 4294901760
    %2663 = vmatpush1.msra.mxu0 %v2662
    %2664 = vmatprep.subr.mxu0 0.0
    %v2665 = vand.u32 %v109, 4294901760
    %2666 = vmatpush1.msra.mxu0 %v2665
    %2667 = vmatprep.subr.mxu0 0.0
    %v2668 = vand.u32 %v110, 4294901760
    %2669 = vmatpush1.msra.mxu0 %v2668
    %2670 = vmatprep.subr.mxu0 0.0
    %v2671 = vand.u32 %v111, 4294901760
    %2672 = vmatpush1.msra.mxu0 %v2671
    %2673 = vmatprep.subr.mxu0 0.0
    %v2674 = vand.u32 %v112, 4294901760
    %2675 = vmatpush1.msra.mxu0 %v2674
    %2676 = vmatprep.subr.mxu0 0.0
    %v2677 = vand.u32 %v113, 4294901760
    %2678 = vmatpush1.msra.mxu0 %v2677
    %2679 = vmatprep.subr.mxu0 0.0
    %v2680 = vand.u32 %v114, 4294901760
    %2681 = vmatpush1.msra.mxu0 %v2680
    %2682 = vmatprep.subr.mxu0 0.0
    %v2683 = vand.u32 %v115, 4294901760
    %2684 = vmatpush1.msra.mxu0 %v2683
    %2685 = vmatprep.subr.mxu0 0.0
    %v2686 = vand.u32 %v116, 4294901760
    %2687 = vmatpush1.msra.mxu0 %v2686
    %2688 = vmatprep.subr.mxu0 0.0
    %v2689 = vand.u32 %v117, 4294901760
    %2690 = vmatpush1.msra.mxu0 %v2689
    %2691 = vmatprep.subr.mxu0 0.0
    %v2692 = vand.u32 %v118, 4294901760
    %2693 = vmatpush1.msra.mxu0 %v2692
    %2694 = vmatprep.subr.mxu0 0.0
    %v2695 = vand.u32 %v119, 4294901760
    %2696 = vmatpush1.msra.mxu0 %v2695
    %2697 = vmatprep.subr.mxu0 0.0
    %v2698 = vand.u32 %v120, 4294901760
    %2699 = vmatpush1.msra.mxu0 %v2698
    %2700 = vmatprep.subr.mxu0 0.0
    %v2701 = vand.u32 %v121, 4294901760
    %2702 = vmatpush1.msra.mxu0 %v2701
    %2703 = vmatprep.subr.mxu0 0.0
    %v2704 = vand.u32 %v122, 4294901760
    %2705 = vmatpush1.msra.mxu0 %v2704
    %2706 = vmatprep.subr.mxu0 0.0
    %v2707 = vand.u32 %v123, 4294901760
    %2708 = vmatpush1.msra.mxu0 %v2707
    %2709 = vmatprep.subr.mxu0 0.0
    %v2710 = vand.u32 %v124, 4294901760
    %2711 = vmatpush1.msra.mxu0 %v2710
    %2712 = vmatprep.subr.mxu0 0.0
    %v2713 = vand.u32 %v125, 4294901760
    %2714 = vmatpush1.msra.mxu0 %v2713
    %2715 = vmatprep.subr.mxu0 0.0
    %v2716 = vand.u32 %v126, 4294901760
    %2717 = vmatpush1.msra.mxu0 %v2716
    %2718 = vmatprep.subr.mxu0 0.0
    %v2719 = vand.u32 %v127, 4294901760
    %2720 = vmatpush1.msra.mxu0 %v2719
    %2721 = vmatprep.subr.mxu0 0.0
    %v2722 = vand.u32 %v128, 4294901760
    %2723 = vmatpush1.msra.mxu0 %v2722
    %2724 = vmatprep.subr.mxu0 0.0
    %v2725 = vand.u32 %v129, 4294901760
    %2726 = vmatpush1.msra.mxu0 %v2725
    %2727 = vmatprep.subr.mxu0 0.0
    %v2728 = vand.u32 %v130, 4294901760
    %2729 = vmatpush1.msra.mxu0 %v2728
    %2730 = vmatprep.subr.mxu0 0.0
    %v2731 = vand.u32 %v131, 4294901760
    %2732 = vmatpush1.msra.mxu0 %v2731
    %2733 = vmatprep.subr.mxu0 0.0
    %v2734 = vand.u32 %v132, 4294901760
    %2735 = vmatpush1.msra.mxu0 %v2734
    %2736 = vmatprep.subr.mxu0 0.0
    %v2737 = vand.u32 %v133, 4294901760
    %2738 = vmatpush1.msra.mxu0 %v2737
    %2739 = vmatprep.subr.mxu0 0.0
    %v2740 = vand.u32 %v134, 4294901760
    %2741 = vmatpush1.msra.mxu0 %v2740
    %2742 = vmatprep.subr.mxu0 0.0
    %v2743 = vand.u32 %v135, 4294901760
    %2744 = vmatpush1.msra.mxu0 %v2743
    %2745 = vmatprep.subr.mxu0 0.0
    %v2746 = vand.u32 %v136, 4294901760
    %2747 = vmatpush1.msra.mxu0 %v2746
    %2748 = vmatprep.subr.mxu0 0.0
    %v2749 = vand.u32 %v137, 4294901760
    %2750 = vmatpush1.msra.mxu0 %v2749
    %2751 = vmatprep.subr.mxu0 0.0
    %v2752 = vand.u32 %v138, 4294901760
    %2753 = vmatpush1.msra.mxu0 %v2752
    %2754 = vmatprep.subr.mxu0 0.0
    %v2755 = vand.u32 %v139, 4294901760
    %2756 = vmatpush1.msra.mxu0 %v2755
    %v2757 = vand.u32 %v41, 4294901760
    %2758 = vmatprep.mubr.f32.mxu0 %v2757
    %v2759 = vand.u32 %v40, 4294901760
    %2760 = vmatmul.mubr.f32.gmra.mrb[0].mxu0 %v2759
    %v2761 = vpop.f32.mrb[0].mxu0
    %v2762 = vadd.f32 %v2658, %v2761
    %v2763 = vpop.f32.mrb[0].mxu0
    %2764 = vdwg.mxu0
    %2765 = vmatprep.subr.mxu0 0.0
    %v2766 = vand.u32 %v140, 4294901760
    %2767 = vmatpush1.msra.mxu0 %v2766
    %2768 = vmatprep.subr.mxu0 0.0
    %v2769 = vand.u32 %v141, 4294901760
    %2770 = vmatpush1.msra.mxu0 %v2769
    %2771 = vmatprep.subr.mxu0 0.0
    %v2772 = vand.u32 %v142, 4294901760
    %2773 = vmatpush1.msra.mxu0 %v2772
    %2774 = vmatprep.subr.mxu0 0.0
    %v2775 = vand.u32 %v143, 4294901760
    %2776 = vmatpush1.msra.mxu0 %v2775
    %2777 = vmatprep.subr.mxu0 0.0
    %v2778 = vand.u32 %v144, 4294901760
    %2779 = vmatpush1.msra.mxu0 %v2778
    %2780 = vmatprep.subr.mxu0 0.0
    %v2781 = vand.u32 %v145, 4294901760
    %2782 = vmatpush1.msra.mxu0 %v2781
    %2783 = vmatprep.subr.mxu0 0.0
    %v2784 = vand.u32 %v146, 4294901760
    %2785 = vmatpush1.msra.mxu0 %v2784
    %2786 = vmatprep.subr.mxu0 0.0
    %v2787 = vand.u32 %v147, 4294901760
    %2788 = vmatpush1.msra.mxu0 %v2787
    %2789 = vmatprep.subr.mxu0 0.0
    %v2790 = vand.u32 %v148, 4294901760
    %2791 = vmatpush1.msra.mxu0 %v2790
    %2792 = vmatprep.subr.mxu0 0.0
    %v2793 = vand.u32 %v149, 4294901760
    %2794 = vmatpush1.msra.mxu0 %v2793
    %2795 = vmatprep.subr.mxu0 0.0
    %v2796 = vand.u32 %v150, 4294901760
    %2797 = vmatpush1.msra.mxu0 %v2796
    %2798 = vmatprep.subr.mxu0 0.0
    %v2799 = vand.u32 %v151, 4294901760
    %2800 = vmatpush1.msra.mxu0 %v2799
    %2801 = vmatprep.subr.mxu0 0.0
    %v2802 = vand.u32 %v152, 4294901760
    %2803 = vmatpush1.msra.mxu0 %v2802
    %2804 = vmatprep.subr.mxu0 0.0
    %v2805 = vand.u32 %v153, 4294901760
    %2806 = vmatpush1.msra.mxu0 %v2805
    %2807 = vmatprep.subr.mxu0 0.0
    %v2808 = vand.u32 %v154, 4294901760
    %2809 = vmatpush1.msra.mxu0 %v2808
    %2810 = vmatprep.subr.mxu0 0.0
    %v2811 = vand.u32 %v155, 4294901760
    %2812 = vmatpush1.msra.mxu0 %v2811
    %2813 = vmatprep.subr.mxu0 0.0
    %v2814 = vand.u32 %v156, 4294901760
    %2815 = vmatpush1.msra.mxu0 %v2814
    %2816 = vmatprep.subr.mxu0 0.0
    %v2817 = vand.u32 %v157, 4294901760
    %2818 = vmatpush1.msra.mxu0 %v2817
    %2819 = vmatprep.subr.mxu0 0.0
    %v2820 = vand.u32 %v158, 4294901760
    %2821 = vmatpush1.msra.mxu0 %v2820
    %2822 = vmatprep.subr.mxu0 0.0
    %v2823 = vand.u32 %v159, 4294901760
    %2824 = vmatpush1.msra.mxu0 %v2823
    %2825 = vmatprep.subr.mxu0 0.0
    %v2826 = vand.u32 %v160, 4294901760
    %2827 = vmatpush1.msra.mxu0 %v2826
    %2828 = vmatprep.subr.mxu0 0.0
    %v2829 = vand.u32 %v161, 4294901760
    %2830 = vmatpush1.msra.mxu0 %v2829
    %2831 = vmatprep.subr.mxu0 0.0
    %v2832 = vand.u32 %v162, 4294901760
    %2833 = vmatpush1.msra.mxu0 %v2832
    %2834 = vmatprep.subr.mxu0 0.0
    %v2835 = vand.u32 %v163, 4294901760
    %2836 = vmatpush1.msra.mxu0 %v2835
    %2837 = vmatprep.subr.mxu0 0.0
    %v2838 = vand.u32 %v164, 4294901760
    %2839 = vmatpush1.msra.mxu0 %v2838
    %2840 = vmatprep.subr.mxu0 0.0
    %v2841 = vand.u32 %v165, 4294901760
    %2842 = vmatpush1.msra.mxu0 %v2841
    %2843 = vmatprep.subr.mxu0 0.0
    %v2844 = vand.u32 %v166, 4294901760
    %2845 = vmatpush1.msra.mxu0 %v2844
    %2846 = vmatprep.subr.mxu0 0.0
    %v2847 = vand.u32 %v167, 4294901760
    %2848 = vmatpush1.msra.mxu0 %v2847
    %2849 = vmatprep.subr.mxu0 0.0
    %v2850 = vand.u32 %v168, 4294901760
    %2851 = vmatpush1.msra.mxu0 %v2850
    %2852 = vmatprep.subr.mxu0 0.0
    %v2853 = vand.u32 %v169, 4294901760
    %2854 = vmatpush1.msra.mxu0 %v2853
    %2855 = vmatprep.subr.mxu0 0.0
    %v2856 = vand.u32 %v170, 4294901760
    %2857 = vmatpush1.msra.mxu0 %v2856
    %2858 = vmatprep.subr.mxu0 0.0
    %v2859 = vand.u32 %v171, 4294901760
    %2860 = vmatpush1.msra.mxu0 %v2859
    %v2861 = vand.u32 %v43, 4294901760
    %v2862 = vsub.f32 %v43, %v2861
    %v2863 = vand.u32 %v2862, 4294901760
    %v2864 = vsub.f32 %v2862, %v2863
    %v2865 = vand.u32 %v2864, 4294901760
    %2866 = vmatprep.mubr.f32.mxu0 %v2865
    %v2867 = vand.u32 %v42, 4294901760
    %v2868 = vsub.f32 %v42, %v2867
    %v2869 = vand.u32 %v2868, 4294901760
    %v2870 = vsub.f32 %v2868, %v2869
    %v2871 = vand.u32 %v2870, 4294901760
    %2872 = vmatmul.mubr.f32.gmra.mrb[0].mxu0 %v2871
    %v2873 = vpop.f32.mrb[0].mxu0
    %v2874 = vadd.f32 %v2762, %v2873
    %v2875 = vpop.f32.mrb[0].mxu0
    %2876 = vdwg.mxu0
    %2877 = vmatprep.subr.mxu0 0.0
    %v2878 = vand.u32 %v140, 4294901760
    %v2879 = vsub.f32 %v140, %v2878
    %v2880 = vand.u32 %v2879, 4294901760
    %v2881 = vsub.f32 %v2879, %v2880
    %v2882 = vand.u32 %v2881, 4294901760
    %2883 = vmatpush1.msra.mxu0 %v2882
    %2884 = vmatprep.subr.mxu0 0.0
    %v2885 = vand.u32 %v141, 4294901760
    %v2886 = vsub.f32 %v141, %v2885
    %v2887 = vand.u32 %v2886, 4294901760
    %v2888 = vsub.f32 %v2886, %v2887
    %v2889 = vand.u32 %v2888, 4294901760
    %2890 = vmatpush1.msra.mxu0 %v2889
    %2891 = vmatprep.subr.mxu0 0.0
    %v2892 = vand.u32 %v142, 4294901760
    %v2893 = vsub.f32 %v142, %v2892
    %v2894 = vand.u32 %v2893, 4294901760
    %v2895 = vsub.f32 %v2893, %v2894
    %v2896 = vand.u32 %v2895, 4294901760
    %2897 = vmatpush1.msra.mxu0 %v2896
    %2898 = vmatprep.subr.mxu0 0.0
    %v2899 = vand.u32 %v143, 4294901760
    %v2900 = vsub.f32 %v143, %v2899
    %v2901 = vand.u32 %v2900, 4294901760
    %v2902 = vsub.f32 %v2900, %v2901
    %v2903 = vand.u32 %v2902, 4294901760
    %2904 = vmatpush1.msra.mxu0 %v2903
    %2905 = vmatprep.subr.mxu0 0.0
    %v2906 = vand.u32 %v144, 4294901760
    %v2907 = vsub.f32 %v144, %v2906
    %v2908 = vand.u32 %v2907, 4294901760
    %v2909 = vsub.f32 %v2907, %v2908
    %v2910 = vand.u32 %v2909, 4294901760
    %2911 = vmatpush1.msra.mxu0 %v2910
    %2912 = vmatprep.subr.mxu0 0.0
    %v2913 = vand.u32 %v145, 4294901760
    %v2914 = vsub.f32 %v145, %v2913
    %v2915 = vand.u32 %v2914, 4294901760
    %v2916 = vsub.f32 %v2914, %v2915
    %v2917 = vand.u32 %v2916, 4294901760
    %2918 = vmatpush1.msra.mxu0 %v2917
    %2919 = vmatprep.subr.mxu0 0.0
    %v2920 = vand.u32 %v146, 4294901760
    %v2921 = vsub.f32 %v146, %v2920
    %v2922 = vand.u32 %v2921, 4294901760
    %v2923 = vsub.f32 %v2921, %v2922
    %v2924 = vand.u32 %v2923, 4294901760
    %2925 = vmatpush1.msra.mxu0 %v2924
    %2926 = vmatprep.subr.mxu0 0.0
    %v2927 = vand.u32 %v147, 4294901760
    %v2928 = vsub.f32 %v147, %v2927
    %v2929 = vand.u32 %v2928, 4294901760
    %v2930 = vsub.f32 %v2928, %v2929
    %v2931 = vand.u32 %v2930, 4294901760
    %2932 = vmatpush1.msra.mxu0 %v2931
    %2933 = vmatprep.subr.mxu0 0.0
    %v2934 = vand.u32 %v148, 4294901760
    %v2935 = vsub.f32 %v148, %v2934
    %v2936 = vand.u32 %v2935, 4294901760
    %v2937 = vsub.f32 %v2935, %v2936
    %v2938 = vand.u32 %v2937, 4294901760
    %2939 = vmatpush1.msra.mxu0 %v2938
    %2940 = vmatprep.subr.mxu0 0.0
    %v2941 = vand.u32 %v149, 4294901760
    %v2942 = vsub.f32 %v149, %v2941
    %v2943 = vand.u32 %v2942, 4294901760
    %v2944 = vsub.f32 %v2942, %v2943
    %v2945 = vand.u32 %v2944, 4294901760
    %2946 = vmatpush1.msra.mxu0 %v2945
    %2947 = vmatprep.subr.mxu0 0.0
    %v2948 = vand.u32 %v150, 4294901760
    %v2949 = vsub.f32 %v150, %v2948
    %v2950 = vand.u32 %v2949, 4294901760
    %v2951 = vsub.f32 %v2949, %v2950
    %v2952 = vand.u32 %v2951, 4294901760
    %2953 = vmatpush1.msra.mxu0 %v2952
    %2954 = vmatprep.subr.mxu0 0.0
    %v2955 = vand.u32 %v151, 4294901760
    %v2956 = vsub.f32 %v151, %v2955
    %v2957 = vand.u32 %v2956, 4294901760
    %v2958 = vsub.f32 %v2956, %v2957
    %v2959 = vand.u32 %v2958, 4294901760
    %2960 = vmatpush1.msra.mxu0 %v2959
    %2961 = vmatprep.subr.mxu0 0.0
    %v2962 = vand.u32 %v152, 4294901760
    %v2963 = vsub.f32 %v152, %v2962
    %v2964 = vand.u32 %v2963, 4294901760
    %v2965 = vsub.f32 %v2963, %v2964
    %v2966 = vand.u32 %v2965, 4294901760
    %2967 = vmatpush1.msra.mxu0 %v2966
    %2968 = vmatprep.subr.mxu0 0.0
    %v2969 = vand.u32 %v153, 4294901760
    %v2970 = vsub.f32 %v153, %v2969
    %v2971 = vand.u32 %v2970, 4294901760
    %v2972 = vsub.f32 %v2970, %v2971
    %v2973 = vand.u32 %v2972, 4294901760
    %2974 = vmatpush1.msra.mxu0 %v2973
    %2975 = vmatprep.subr.mxu0 0.0
    %v2976 = vand.u32 %v154, 4294901760
    %v2977 = vsub.f32 %v154, %v2976
    %v2978 = vand.u32 %v2977, 4294901760
    %v2979 = vsub.f32 %v2977, %v2978
    %v2980 = vand.u32 %v2979, 4294901760
    %2981 = vmatpush1.msra.mxu0 %v2980
    %2982 = vmatprep.subr.mxu0 0.0
    %v2983 = vand.u32 %v155, 4294901760
    %v2984 = vsub.f32 %v155, %v2983
    %v2985 = vand.u32 %v2984, 4294901760
    %v2986 = vsub.f32 %v2984, %v2985
    %v2987 = vand.u32 %v2986, 4294901760
    %2988 = vmatpush1.msra.mxu0 %v2987
    %2989 = vmatprep.subr.mxu0 0.0
    %v2990 = vand.u32 %v156, 4294901760
    %v2991 = vsub.f32 %v156, %v2990
    %v2992 = vand.u32 %v2991, 4294901760
    %v2993 = vsub.f32 %v2991, %v2992
    %v2994 = vand.u32 %v2993, 4294901760
    %2995 = vmatpush1.msra.mxu0 %v2994
    %2996 = vmatprep.subr.mxu0 0.0
    %v2997 = vand.u32 %v157, 4294901760
    %v2998 = vsub.f32 %v157, %v2997
    %v2999 = vand.u32 %v2998, 4294901760
    %v3000 = vsub.f32 %v2998, %v2999
    %v3001 = vand.u32 %v3000, 4294901760
    %3002 = vmatpush1.msra.mxu0 %v3001
    %3003 = vmatprep.subr.mxu0 0.0
    %v3004 = vand.u32 %v158, 4294901760
    %v3005 = vsub.f32 %v158, %v3004
    %v3006 = vand.u32 %v3005, 4294901760
    %v3007 = vsub.f32 %v3005, %v3006
    %v3008 = vand.u32 %v3007, 4294901760
    %3009 = vmatpush1.msra.mxu0 %v3008
    %3010 = vmatprep.subr.mxu0 0.0
    %v3011 = vand.u32 %v159, 4294901760
    %v3012 = vsub.f32 %v159, %v3011
    %v3013 = vand.u32 %v3012, 4294901760
    %v3014 = vsub.f32 %v3012, %v3013
    %v3015 = vand.u32 %v3014, 4294901760
    %3016 = vmatpush1.msra.mxu0 %v3015
    %3017 = vmatprep.subr.mxu0 0.0
    %v3018 = vand.u32 %v160, 4294901760
    %v3019 = vsub.f32 %v160, %v3018
    %v3020 = vand.u32 %v3019, 4294901760
    %v3021 = vsub.f32 %v3019, %v3020
    %v3022 = vand.u32 %v3021, 4294901760
    %3023 = vmatpush1.msra.mxu0 %v3022
    %3024 = vmatprep.subr.mxu0 0.0
    %v3025 = vand.u32 %v161, 4294901760
    %v3026 = vsub.f32 %v161, %v3025
    %v3027 = vand.u32 %v3026, 4294901760
    %v3028 = vsub.f32 %v3026, %v3027
    %v3029 = vand.u32 %v3028, 4294901760
    %3030 = vmatpush1.msra.mxu0 %v3029
    %3031 = vmatprep.subr.mxu0 0.0
    %v3032 = vand.u32 %v162, 4294901760
    %v3033 = vsub.f32 %v162, %v3032
    %v3034 = vand.u32 %v3033, 4294901760
    %v3035 = vsub.f32 %v3033, %v3034
    %v3036 = vand.u32 %v3035, 4294901760
    %3037 = vmatpush1.msra.mxu0 %v3036
    %3038 = vmatprep.subr.mxu0 0.0
    %v3039 = vand.u32 %v163, 4294901760
    %v3040 = vsub.f32 %v163, %v3039
    %v3041 = vand.u32 %v3040, 4294901760
    %v3042 = vsub.f32 %v3040, %v3041
    %v3043 = vand.u32 %v3042, 4294901760
    %3044 = vmatpush1.msra.mxu0 %v3043
    %3045 = vmatprep.subr.mxu0 0.0
    %v3046 = vand.u32 %v164, 4294901760
    %v3047 = vsub.f32 %v164, %v3046
    %v3048 = vand.u32 %v3047, 4294901760
    %v3049 = vsub.f32 %v3047, %v3048
    %v3050 = vand.u32 %v3049, 4294901760
    %3051 = vmatpush1.msra.mxu0 %v3050
    %3052 = vmatprep.subr.mxu0 0.0
    %v3053 = vand.u32 %v165, 4294901760
    %v3054 = vsub.f32 %v165, %v3053
    %v3055 = vand.u32 %v3054, 4294901760
    %v3056 = vsub.f32 %v3054, %v3055
    %v3057 = vand.u32 %v3056, 4294901760
    %3058 = vmatpush1.msra.mxu0 %v3057
    %3059 = vmatprep.subr.mxu0 0.0
    %v3060 = vand.u32 %v166, 4294901760
    %v3061 = vsub.f32 %v166, %v3060
    %v3062 = vand.u32 %v3061, 4294901760
    %v3063 = vsub.f32 %v3061, %v3062
    %v3064 = vand.u32 %v3063, 4294901760
    %3065 = vmatpush1.msra.mxu0 %v3064
    %3066 = vmatprep.subr.mxu0 0.0
    %v3067 = vand.u32 %v167, 4294901760
    %v3068 = vsub.f32 %v167, %v3067
    %v3069 = vand.u32 %v3068, 4294901760
    %v3070 = vsub.f32 %v3068, %v3069
    %v3071 = vand.u32 %v3070, 4294901760
    %3072 = vmatpush1.msra.mxu0 %v3071
    %3073 = vmatprep.subr.mxu0 0.0
    %v3074 = vand.u32 %v168, 4294901760
    %v3075 = vsub.f32 %v168, %v3074
    %v3076 = vand.u32 %v3075, 4294901760
    %v3077 = vsub.f32 %v3075, %v3076
    %v3078 = vand.u32 %v3077, 4294901760
    %3079 = vmatpush1.msra.mxu0 %v3078
    %3080 = vmatprep.subr.mxu0 0.0
    %v3081 = vand.u32 %v169, 4294901760
    %v3082 = vsub.f32 %v169, %v3081
    %v3083 = vand.u32 %v3082, 4294901760
    %v3084 = vsub.f32 %v3082, %v3083
    %v3085 = vand.u32 %v3084, 4294901760
    %3086 = vmatpush1.msra.mxu0 %v3085
    %3087 = vmatprep.subr.mxu0 0.0
    %v3088 = vand.u32 %v170, 4294901760
    %v3089 = vsub.f32 %v170, %v3088
    %v3090 = vand.u32 %v3089, 4294901760
    %v3091 = vsub.f32 %v3089, %v3090
    %v3092 = vand.u32 %v3091, 4294901760
    %3093 = vmatpush1.msra.mxu0 %v3092
    %3094 = vmatprep.subr.mxu0 0.0
    %v3095 = vand.u32 %v171, 4294901760
    %v3096 = vsub.f32 %v171, %v3095
    %v3097 = vand.u32 %v3096, 4294901760
    %v3098 = vsub.f32 %v3096, %v3097
    %v3099 = vand.u32 %v3098, 4294901760
    %3100 = vmatpush1.msra.mxu0 %v3099
    %v3101 = vand.u32 %v43, 4294901760
    %3102 = vmatprep.mubr.f32.mxu0 %v3101
    %v3103 = vand.u32 %v42, 4294901760
    %3104 = vmatmul.mubr.f32.gmra.mrb[0].mxu0 %v3103
    %v3105 = vpop.f32.mrb[0].mxu0
    %v3106 = vadd.f32 %v2874, %v3105
    %v3107 = vpop.f32.mrb[0].mxu0
    %3108 = vdwg.mxu0
    %3109 = vmatprep.subr.mxu0 0.0
    %v3110 = vand.u32 %v140, 4294901760
    %v3111 = vsub.f32 %v140, %v3110
    %3112 = vmatpush1.msra.mxu0 %v3111
    %3113 = vmatprep.subr.mxu0 0.0
    %v3114 = vand.u32 %v141, 4294901760
    %v3115 = vsub.f32 %v141, %v3114
    %3116 = vmatpush1.msra.mxu0 %v3115
    %3117 = vmatprep.subr.mxu0 0.0
    %v3118 = vand.u32 %v142, 4294901760
    %v3119 = vsub.f32 %v142, %v3118
    %3120 = vmatpush1.msra.mxu0 %v3119
    %3121 = vmatprep.subr.mxu0 0.0
    %v3122 = vand.u32 %v143, 4294901760
    %v3123 = vsub.f32 %v143, %v3122
    %3124 = vmatpush1.msra.mxu0 %v3123
    %3125 = vmatprep.subr.mxu0 0.0
    %v3126 = vand.u32 %v144, 4294901760
    %v3127 = vsub.f32 %v144, %v3126
    %3128 = vmatpush1.msra.mxu0 %v3127
    %3129 = vmatprep.subr.mxu0 0.0
    %v3130 = vand.u32 %v145, 4294901760
    %v3131 = vsub.f32 %v145, %v3130
    %3132 = vmatpush1.msra.mxu0 %v3131
    %3133 = vmatprep.subr.mxu0 0.0
    %v3134 = vand.u32 %v146, 4294901760
    %v3135 = vsub.f32 %v146, %v3134
    %3136 = vmatpush1.msra.mxu0 %v3135
    %3137 = vmatprep.subr.mxu0 0.0
    %v3138 = vand.u32 %v147, 4294901760
    %v3139 = vsub.f32 %v147, %v3138
    %3140 = vmatpush1.msra.mxu0 %v3139
    %3141 = vmatprep.subr.mxu0 0.0
    %v3142 = vand.u32 %v148, 4294901760
    %v3143 = vsub.f32 %v148, %v3142
    %3144 = vmatpush1.msra.mxu0 %v3143
    %3145 = vmatprep.subr.mxu0 0.0
    %v3146 = vand.u32 %v149, 4294901760
    %v3147 = vsub.f32 %v149, %v3146
    %3148 = vmatpush1.msra.mxu0 %v3147
    %3149 = vmatprep.subr.mxu0 0.0
    %v3150 = vand.u32 %v150, 4294901760
    %v3151 = vsub.f32 %v150, %v3150
    %3152 = vmatpush1.msra.mxu0 %v3151
    %3153 = vmatprep.subr.mxu0 0.0
    %v3154 = vand.u32 %v151, 4294901760
    %v3155 = vsub.f32 %v151, %v3154
    %3156 = vmatpush1.msra.mxu0 %v3155
    %3157 = vmatprep.subr.mxu0 0.0
    %v3158 = vand.u32 %v152, 4294901760
    %v3159 = vsub.f32 %v152, %v3158
    %3160 = vmatpush1.msra.mxu0 %v3159
    %3161 = vmatprep.subr.mxu0 0.0
    %v3162 = vand.u32 %v153, 4294901760
    %v3163 = vsub.f32 %v153, %v3162
    %3164 = vmatpush1.msra.mxu0 %v3163
    %3165 = vmatprep.subr.mxu0 0.0
    %v3166 = vand.u32 %v154, 4294901760
    %v3167 = vsub.f32 %v154, %v3166
    %3168 = vmatpush1.msra.mxu0 %v3167
    %3169 = vmatprep.subr.mxu0 0.0
    %v3170 = vand.u32 %v155, 4294901760
    %v3171 = vsub.f32 %v155, %v3170
    %3172 = vmatpush1.msra.mxu0 %v3171
    %3173 = vmatprep.subr.mxu0 0.0
    %v3174 = vand.u32 %v156, 4294901760
    %v3175 = vsub.f32 %v156, %v3174
    %3176 = vmatpush1.msra.mxu0 %v3175
    %3177 = vmatprep.subr.mxu0 0.0
    %v3178 = vand.u32 %v157, 4294901760
    %v3179 = vsub.f32 %v157, %v3178
    %3180 = vmatpush1.msra.mxu0 %v3179
    %3181 = vmatprep.subr.mxu0 0.0
    %v3182 = vand.u32 %v158, 4294901760
    %v3183 = vsub.f32 %v158, %v3182
    %3184 = vmatpush1.msra.mxu0 %v3183
    %3185 = vmatprep.subr.mxu0 0.0
    %v3186 = vand.u32 %v159, 4294901760
    %v3187 = vsub.f32 %v159, %v3186
    %3188 = vmatpush1.msra.mxu0 %v3187
    %3189 = vmatprep.subr.mxu0 0.0
    %v3190 = vand.u32 %v160, 4294901760
    %v3191 = vsub.f32 %v160, %v3190
    %3192 = vmatpush1.msra.mxu0 %v3191
    %3193 = vmatprep.subr.mxu0 0.0
    %v3194 = vand.u32 %v161, 4294901760
    %v3195 = vsub.f32 %v161, %v3194
    %3196 = vmatpush1.msra.mxu0 %v3195
    %3197 = vmatprep.subr.mxu0 0.0
    %v3198 = vand.u32 %v162, 4294901760
    %v3199 = vsub.f32 %v162, %v3198
    %3200 = vmatpush1.msra.mxu0 %v3199
    %3201 = vmatprep.subr.mxu0 0.0
    %v3202 = vand.u32 %v163, 4294901760
    %v3203 = vsub.f32 %v163, %v3202
    %3204 = vmatpush1.msra.mxu0 %v3203
    %3205 = vmatprep.subr.mxu0 0.0
    %v3206 = vand.u32 %v164, 4294901760
    %v3207 = vsub.f32 %v164, %v3206
    %3208 = vmatpush1.msra.mxu0 %v3207
    %3209 = vmatprep.subr.mxu0 0.0
    %v3210 = vand.u32 %v165, 4294901760
    %v3211 = vsub.f32 %v165, %v3210
    %3212 = vmatpush1.msra.mxu0 %v3211
    %3213 = vmatprep.subr.mxu0 0.0
    %v3214 = vand.u32 %v166, 4294901760
    %v3215 = vsub.f32 %v166, %v3214
    %3216 = vmatpush1.msra.mxu0 %v3215
    %3217 = vmatprep.subr.mxu0 0.0
    %v3218 = vand.u32 %v167, 4294901760
    %v3219 = vsub.f32 %v167, %v3218
    %3220 = vmatpush1.msra.mxu0 %v3219
    %3221 = vmatprep.subr.mxu0 0.0
    %v3222 = vand.u32 %v168, 4294901760
    %v3223 = vsub.f32 %v168, %v3222
    %3224 = vmatpush1.msra.mxu0 %v3223
    %3225 = vmatprep.subr.mxu0 0.0
    %v3226 = vand.u32 %v169, 4294901760
    %v3227 = vsub.f32 %v169, %v3226
    %3228 = vmatpush1.msra.mxu0 %v3227
    %3229 = vmatprep.subr.mxu0 0.0
    %v3230 = vand.u32 %v170, 4294901760
    %v3231 = vsub.f32 %v170, %v3230
    %3232 = vmatpush1.msra.mxu0 %v3231
    %3233 = vmatprep.subr.mxu0 0.0
    %v3234 = vand.u32 %v171, 4294901760
    %v3235 = vsub.f32 %v171, %v3234
    %3236 = vmatpush1.msra.mxu0 %v3235
    %v3237 = vand.u32 %v43, 4294901760
    %v3238 = vsub.f32 %v43, %v3237
    %3239 = vmatprep.mubr.f32.mxu0 %v3238
    %v3240 = vand.u32 %v42, 4294901760
    %v3241 = vsub.f32 %v42, %v3240
    %3242 = vmatmul.mubr.f32.gmra.mrb[0].mxu0 %v3241
    %v3243 = vpop.f32.mrb[0].mxu0
    %v3244 = vadd.f32 %v3106, %v3243
    %v3245 = vpop.f32.mrb[0].mxu0
    %3246 = vdwg.mxu0
    %3247 = vmatprep.subr.mxu0 0.0
    %v3248 = vand.u32 %v140, 4294901760
    %3249 = vmatpush1.msra.mxu0 %v3248
    %3250 = vmatprep.subr.mxu0 0.0
    %v3251 = vand.u32 %v141, 4294901760
    %3252 = vmatpush1.msra.mxu0 %v3251
    %3253 = vmatprep.subr.mxu0 0.0
    %v3254 = vand.u32 %v142, 4294901760
    %3255 = vmatpush1.msra.mxu0 %v3254
    %3256 = vmatprep.subr.mxu0 0.0
    %v3257 = vand.u32 %v143, 4294901760
    %3258 = vmatpush1.msra.mxu0 %v3257
    %3259 = vmatprep.subr.mxu0 0.0
    %v3260 = vand.u32 %v144, 4294901760
    %3261 = vmatpush1.msra.mxu0 %v3260
    %3262 = vmatprep.subr.mxu0 0.0
    %v3263 = vand.u32 %v145, 4294901760
    %3264 = vmatpush1.msra.mxu0 %v3263
    %3265 = vmatprep.subr.mxu0 0.0
    %v3266 = vand.u32 %v146, 4294901760
    %3267 = vmatpush1.msra.mxu0 %v3266
    %3268 = vmatprep.subr.mxu0 0.0
    %v3269 = vand.u32 %v147, 4294901760
    %3270 = vmatpush1.msra.mxu0 %v3269
    %3271 = vmatprep.subr.mxu0 0.0
    %v3272 = vand.u32 %v148, 4294901760
    %3273 = vmatpush1.msra.mxu0 %v3272
    %3274 = vmatprep.subr.mxu0 0.0
    %v3275 = vand.u32 %v149, 4294901760
    %3276 = vmatpush1.msra.mxu0 %v3275
    %3277 = vmatprep.subr.mxu0 0.0
    %v3278 = vand.u32 %v150, 4294901760
    %3279 = vmatpush1.msra.mxu0 %v3278
    %3280 = vmatprep.subr.mxu0 0.0
    %v3281 = vand.u32 %v151, 4294901760
    %3282 = vmatpush1.msra.mxu0 %v3281
    %3283 = vmatprep.subr.mxu0 0.0
    %v3284 = vand.u32 %v152, 4294901760
    %3285 = vmatpush1.msra.mxu0 %v3284
    %3286 = vmatprep.subr.mxu0 0.0
    %v3287 = vand.u32 %v153, 4294901760
    %3288 = vmatpush1.msra.mxu0 %v3287
    %3289 = vmatprep.subr.mxu0 0.0
    %v3290 = vand.u32 %v154, 4294901760
    %3291 = vmatpush1.msra.mxu0 %v3290
    %3292 = vmatprep.subr.mxu0 0.0
    %v3293 = vand.u32 %v155, 4294901760
    %3294 = vmatpush1.msra.mxu0 %v3293
    %3295 = vmatprep.subr.mxu0 0.0
    %v3296 = vand.u32 %v156, 4294901760
    %3297 = vmatpush1.msra.mxu0 %v3296
    %3298 = vmatprep.subr.mxu0 0.0
    %v3299 = vand.u32 %v157, 4294901760
    %3300 = vmatpush1.msra.mxu0 %v3299
    %3301 = vmatprep.subr.mxu0 0.0
    %v3302 = vand.u32 %v158, 4294901760
    %3303 = vmatpush1.msra.mxu0 %v3302
    %3304 = vmatprep.subr.mxu0 0.0
    %v3305 = vand.u32 %v159, 4294901760
    %3306 = vmatpush1.msra.mxu0 %v3305
    %3307 = vmatprep.subr.mxu0 0.0
    %v3308 = vand.u32 %v160, 4294901760
    %3309 = vmatpush1.msra.mxu0 %v3308
    %3310 = vmatprep.subr.mxu0 0.0
    %v3311 = vand.u32 %v161, 4294901760
    %3312 = vmatpush1.msra.mxu0 %v3311
    %3313 = vmatprep.subr.mxu0 0.0
    %v3314 = vand.u32 %v162, 4294901760
    %3315 = vmatpush1.msra.mxu0 %v3314
    %3316 = vmatprep.subr.mxu0 0.0
    %v3317 = vand.u32 %v163, 4294901760
    %3318 = vmatpush1.msra.mxu0 %v3317
    %3319 = vmatprep.subr.mxu0 0.0
    %v3320 = vand.u32 %v164, 4294901760
    %3321 = vmatpush1.msra.mxu0 %v3320
    %3322 = vmatprep.subr.mxu0 0.0
    %v3323 = vand.u32 %v165, 4294901760
    %3324 = vmatpush1.msra.mxu0 %v3323
    %3325 = vmatprep.subr.mxu0 0.0
    %v3326 = vand.u32 %v166, 4294901760
    %3327 = vmatpush1.msra.mxu0 %v3326
    %3328 = vmatprep.subr.mxu0 0.0
    %v3329 = vand.u32 %v167, 4294901760
    %3330 = vmatpush1.msra.mxu0 %v3329
    %3331 = vmatprep.subr.mxu0 0.0
    %v3332 = vand.u32 %v168, 4294901760
    %3333 = vmatpush1.msra.mxu0 %v3332
    %3334 = vmatprep.subr.mxu0 0.0
    %v3335 = vand.u32 %v169, 4294901760
    %3336 = vmatpush1.msra.mxu0 %v3335
    %3337 = vmatprep.subr.mxu0 0.0
    %v3338 = vand.u32 %v170, 4294901760
    %3339 = vmatpush1.msra.mxu0 %v3338
    %3340 = vmatprep.subr.mxu0 0.0
    %v3341 = vand.u32 %v171, 4294901760
    %3342 = vmatpush1.msra.mxu0 %v3341
    %v3343 = vand.u32 %v43, 4294901760
    %v3344 = vsub.f32 %v43, %v3343
    %v3345 = vand.u32 %v3344, 4294901760
    %3346 = vmatprep.mubr.f32.mxu0 %v3345
    %v3347 = vand.u32 %v42, 4294901760
    %v3348 = vsub.f32 %v42, %v3347
    %v3349 = vand.u32 %v3348, 4294901760
    %3350 = vmatmul.mubr.f32.gmra.mrb[0].mxu0 %v3349
    %v3351 = vpop.f32.mrb[0].mxu0
    %v3352 = vadd.f32 %v3244, %v3351
    %v3353 = vpop.f32.mrb[0].mxu0
    %3354 = vdwg.mxu0
    %3355 = vmatprep.subr.mxu0 0.0
    %v3356 = vand.u32 %v140, 4294901760
    %v3357 = vsub.f32 %v140, %v3356
    %v3358 = vand.u32 %v3357, 4294901760
    %3359 = vmatpush1.msra.mxu0 %v3358
    %3360 = vmatprep.subr.mxu0 0.0
    %v3361 = vand.u32 %v141, 4294901760
    %v3362 = vsub.f32 %v141, %v3361
    %v3363 = vand.u32 %v3362, 4294901760
    %3364 = vmatpush1.msra.mxu0 %v3363
    %3365 = vmatprep.subr.mxu0 0.0
    %v3366 = vand.u32 %v142, 4294901760
    %v3367 = vsub.f32 %v142, %v3366
    %v3368 = vand.u32 %v3367, 4294901760
    %3369 = vmatpush1.msra.mxu0 %v3368
    %3370 = vmatprep.subr.mxu0 0.0
    %v3371 = vand.u32 %v143, 4294901760
    %v3372 = vsub.f32 %v143, %v3371
    %v3373 = vand.u32 %v3372, 4294901760
    %3374 = vmatpush1.msra.mxu0 %v3373
    %3375 = vmatprep.subr.mxu0 0.0
    %v3376 = vand.u32 %v144, 4294901760
    %v3377 = vsub.f32 %v144, %v3376
    %v3378 = vand.u32 %v3377, 4294901760
    %3379 = vmatpush1.msra.mxu0 %v3378
    %3380 = vmatprep.subr.mxu0 0.0
    %v3381 = vand.u32 %v145, 4294901760
    %v3382 = vsub.f32 %v145, %v3381
    %v3383 = vand.u32 %v3382, 4294901760
    %3384 = vmatpush1.msra.mxu0 %v3383
    %3385 = vmatprep.subr.mxu0 0.0
    %v3386 = vand.u32 %v146, 4294901760
    %v3387 = vsub.f32 %v146, %v3386
    %v3388 = vand.u32 %v3387, 4294901760
    %3389 = vmatpush1.msra.mxu0 %v3388
    %3390 = vmatprep.subr.mxu0 0.0
    %v3391 = vand.u32 %v147, 4294901760
    %v3392 = vsub.f32 %v147, %v3391
    %v3393 = vand.u32 %v3392, 4294901760
    %3394 = vmatpush1.msra.mxu0 %v3393
    %3395 = vmatprep.subr.mxu0 0.0
    %v3396 = vand.u32 %v148, 4294901760
    %v3397 = vsub.f32 %v148, %v3396
    %v3398 = vand.u32 %v3397, 4294901760
    %3399 = vmatpush1.msra.mxu0 %v3398
    %3400 = vmatprep.subr.mxu0 0.0
    %v3401 = vand.u32 %v149, 4294901760
    %v3402 = vsub.f32 %v149, %v3401
    %v3403 = vand.u32 %v3402, 4294901760
    %3404 = vmatpush1.msra.mxu0 %v3403
    %3405 = vmatprep.subr.mxu0 0.0
    %v3406 = vand.u32 %v150, 4294901760
    %v3407 = vsub.f32 %v150, %v3406
    %v3408 = vand.u32 %v3407, 4294901760
    %3409 = vmatpush1.msra.mxu0 %v3408
    %3410 = vmatprep.subr.mxu0 0.0
    %v3411 = vand.u32 %v151, 4294901760
    %v3412 = vsub.f32 %v151, %v3411
    %v3413 = vand.u32 %v3412, 4294901760
    %3414 = vmatpush1.msra.mxu0 %v3413
    %3415 = vmatprep.subr.mxu0 0.0
    %v3416 = vand.u32 %v152, 4294901760
    %v3417 = vsub.f32 %v152, %v3416
    %v3418 = vand.u32 %v3417, 4294901760
    %3419 = vmatpush1.msra.mxu0 %v3418
    %3420 = vmatprep.subr.mxu0 0.0
    %v3421 = vand.u32 %v153, 4294901760
    %v3422 = vsub.f32 %v153, %v3421
    %v3423 = vand.u32 %v3422, 4294901760
    %3424 = vmatpush1.msra.mxu0 %v3423
    %3425 = vmatprep.subr.mxu0 0.0
    %v3426 = vand.u32 %v154, 4294901760
    %v3427 = vsub.f32 %v154, %v3426
    %v3428 = vand.u32 %v3427, 4294901760
    %3429 = vmatpush1.msra.mxu0 %v3428
    %3430 = vmatprep.subr.mxu0 0.0
    %v3431 = vand.u32 %v155, 4294901760
    %v3432 = vsub.f32 %v155, %v3431
    %v3433 = vand.u32 %v3432, 4294901760
    %3434 = vmatpush1.msra.mxu0 %v3433
    %3435 = vmatprep.subr.mxu0 0.0
    %v3436 = vand.u32 %v156, 4294901760
    %v3437 = vsub.f32 %v156, %v3436
    %v3438 = vand.u32 %v3437, 4294901760
    %3439 = vmatpush1.msra.mxu0 %v3438
    %3440 = vmatprep.subr.mxu0 0.0
    %v3441 = vand.u32 %v157, 4294901760
    %v3442 = vsub.f32 %v157, %v3441
    %v3443 = vand.u32 %v3442, 4294901760
    %3444 = vmatpush1.msra.mxu0 %v3443
    %3445 = vmatprep.subr.mxu0 0.0
    %v3446 = vand.u32 %v158, 4294901760
    %v3447 = vsub.f32 %v158, %v3446
    %v3448 = vand.u32 %v3447, 4294901760
    %3449 = vmatpush1.msra.mxu0 %v3448
    %3450 = vmatprep.subr.mxu0 0.0
    %v3451 = vand.u32 %v159, 4294901760
    %v3452 = vsub.f32 %v159, %v3451
    %v3453 = vand.u32 %v3452, 4294901760
    %3454 = vmatpush1.msra.mxu0 %v3453
    %3455 = vmatprep.subr.mxu0 0.0
    %v3456 = vand.u32 %v160, 4294901760
    %v3457 = vsub.f32 %v160, %v3456
    %v3458 = vand.u32 %v3457, 4294901760
    %3459 = vmatpush1.msra.mxu0 %v3458
    %3460 = vmatprep.subr.mxu0 0.0
    %v3461 = vand.u32 %v161, 4294901760
    %v3462 = vsub.f32 %v161, %v3461
    %v3463 = vand.u32 %v3462, 4294901760
    %3464 = vmatpush1.msra.mxu0 %v3463
    %3465 = vmatprep.subr.mxu0 0.0
    %v3466 = vand.u32 %v162, 4294901760
    %v3467 = vsub.f32 %v162, %v3466
    %v3468 = vand.u32 %v3467, 4294901760
    %3469 = vmatpush1.msra.mxu0 %v3468
    %3470 = vmatprep.subr.mxu0 0.0
    %v3471 = vand.u32 %v163, 4294901760
    %v3472 = vsub.f32 %v163, %v3471
    %v3473 = vand.u32 %v3472, 4294901760
    %3474 = vmatpush1.msra.mxu0 %v3473
    %3475 = vmatprep.subr.mxu0 0.0
    %v3476 = vand.u32 %v164, 4294901760
    %v3477 = vsub.f32 %v164, %v3476
    %v3478 = vand.u32 %v3477, 4294901760
    %3479 = vmatpush1.msra.mxu0 %v3478
    %3480 = vmatprep.subr.mxu0 0.0
    %v3481 = vand.u32 %v165, 4294901760
    %v3482 = vsub.f32 %v165, %v3481
    %v3483 = vand.u32 %v3482, 4294901760
    %3484 = vmatpush1.msra.mxu0 %v3483
    %3485 = vmatprep.subr.mxu0 0.0
    %v3486 = vand.u32 %v166, 4294901760
    %v3487 = vsub.f32 %v166, %v3486
    %v3488 = vand.u32 %v3487, 4294901760
    %3489 = vmatpush1.msra.mxu0 %v3488
    %3490 = vmatprep.subr.mxu0 0.0
    %v3491 = vand.u32 %v167, 4294901760
    %v3492 = vsub.f32 %v167, %v3491
    %v3493 = vand.u32 %v3492, 4294901760
    %3494 = vmatpush1.msra.mxu0 %v3493
    %3495 = vmatprep.subr.mxu0 0.0
    %v3496 = vand.u32 %v168, 4294901760
    %v3497 = vsub.f32 %v168, %v3496
    %v3498 = vand.u32 %v3497, 4294901760
    %3499 = vmatpush1.msra.mxu0 %v3498
    %3500 = vmatprep.subr.mxu0 0.0
    %v3501 = vand.u32 %v169, 4294901760
    %v3502 = vsub.f32 %v169, %v3501
    %v3503 = vand.u32 %v3502, 4294901760
    %3504 = vmatpush1.msra.mxu0 %v3503
    %3505 = vmatprep.subr.mxu0 0.0
    %v3506 = vand.u32 %v170, 4294901760
    %v3507 = vsub.f32 %v170, %v3506
    %v3508 = vand.u32 %v3507, 4294901760
    %3509 = vmatpush1.msra.mxu0 %v3508
    %3510 = vmatprep.subr.mxu0 0.0
    %v3511 = vand.u32 %v171, 4294901760
    %v3512 = vsub.f32 %v171, %v3511
    %v3513 = vand.u32 %v3512, 4294901760
    %3514 = vmatpush1.msra.mxu0 %v3513
    %v3515 = vand.u32 %v43, 4294901760
    %3516 = vmatprep.mubr.f32.mxu0 %v3515
    %v3517 = vand.u32 %v42, 4294901760
    %3518 = vmatmul.mubr.f32.gmra.mrb[0].mxu0 %v3517
    %v3519 = vpop.f32.mrb[0].mxu0
    %v3520 = vadd.f32 %v3352, %v3519
    %v3521 = vpop.f32.mrb[0].mxu0
    %3522 = vdwg.mxu0
    %3523 = vmatprep.subr.mxu0 0.0
    %v3524 = vand.u32 %v140, 4294901760
    %3525 = vmatpush1.msra.mxu0 %v3524
    %3526 = vmatprep.subr.mxu0 0.0
    %v3527 = vand.u32 %v141, 4294901760
    %3528 = vmatpush1.msra.mxu0 %v3527
    %3529 = vmatprep.subr.mxu0 0.0
    %v3530 = vand.u32 %v142, 4294901760
    %3531 = vmatpush1.msra.mxu0 %v3530
    %3532 = vmatprep.subr.mxu0 0.0
    %v3533 = vand.u32 %v143, 4294901760
    %3534 = vmatpush1.msra.mxu0 %v3533
    %3535 = vmatprep.subr.mxu0 0.0
    %v3536 = vand.u32 %v144, 4294901760
    %3537 = vmatpush1.msra.mxu0 %v3536
    %3538 = vmatprep.subr.mxu0 0.0
    %v3539 = vand.u32 %v145, 4294901760
    %3540 = vmatpush1.msra.mxu0 %v3539
    %3541 = vmatprep.subr.mxu0 0.0
    %v3542 = vand.u32 %v146, 4294901760
    %3543 = vmatpush1.msra.mxu0 %v3542
    %3544 = vmatprep.subr.mxu0 0.0
    %v3545 = vand.u32 %v147, 4294901760
    %3546 = vmatpush1.msra.mxu0 %v3545
    %3547 = vmatprep.subr.mxu0 0.0
    %v3548 = vand.u32 %v148, 4294901760
    %3549 = vmatpush1.msra.mxu0 %v3548
    %3550 = vmatprep.subr.mxu0 0.0
    %v3551 = vand.u32 %v149, 4294901760
    %3552 = vmatpush1.msra.mxu0 %v3551
    %3553 = vmatprep.subr.mxu0 0.0
    %v3554 = vand.u32 %v150, 4294901760
    %3555 = vmatpush1.msra.mxu0 %v3554
    %3556 = vmatprep.subr.mxu0 0.0
    %v3557 = vand.u32 %v151, 4294901760
    %3558 = vmatpush1.msra.mxu0 %v3557
    %3559 = vmatprep.subr.mxu0 0.0
    %v3560 = vand.u32 %v152, 4294901760
    %3561 = vmatpush1.msra.mxu0 %v3560
    %3562 = vmatprep.subr.mxu0 0.0
    %v3563 = vand.u32 %v153, 4294901760
    %3564 = vmatpush1.msra.mxu0 %v3563
    %3565 = vmatprep.subr.mxu0 0.0
    %v3566 = vand.u32 %v154, 4294901760
    %3567 = vmatpush1.msra.mxu0 %v3566
    %3568 = vmatprep.subr.mxu0 0.0
    %v3569 = vand.u32 %v155, 4294901760
    %3570 = vmatpush1.msra.mxu0 %v3569
    %3571 = vmatprep.subr.mxu0 0.0
    %v3572 = vand.u32 %v156, 4294901760
    %3573 = vmatpush1.msra.mxu0 %v3572
    %3574 = vmatprep.subr.mxu0 0.0
    %v3575 = vand.u32 %v157, 4294901760
    %3576 = vmatpush1.msra.mxu0 %v3575
    %3577 = vmatprep.subr.mxu0 0.0
    %v3578 = vand.u32 %v158, 4294901760
    %3579 = vmatpush1.msra.mxu0 %v3578
    %3580 = vmatprep.subr.mxu0 0.0
    %v3581 = vand.u32 %v159, 4294901760
    %3582 = vmatpush1.msra.mxu0 %v3581
    %3583 = vmatprep.subr.mxu0 0.0
    %v3584 = vand.u32 %v160, 4294901760
    %3585 = vmatpush1.msra.mxu0 %v3584
    %3586 = vmatprep.subr.mxu0 0.0
    %v3587 = vand.u32 %v161, 4294901760
    %3588 = vmatpush1.msra.mxu0 %v3587
    %3589 = vmatprep.subr.mxu0 0.0
    %v3590 = vand.u32 %v162, 4294901760
    %3591 = vmatpush1.msra.mxu0 %v3590
    %3592 = vmatprep.subr.mxu0 0.0
    %v3593 = vand.u32 %v163, 4294901760
    %3594 = vmatpush1.msra.mxu0 %v3593
    %3595 = vmatprep.subr.mxu0 0.0
    %v3596 = vand.u32 %v164, 4294901760
    %3597 = vmatpush1.msra.mxu0 %v3596
    %3598 = vmatprep.subr.mxu0 0.0
    %v3599 = vand.u32 %v165, 4294901760
    %3600 = vmatpush1.msra.mxu0 %v3599
    %3601 = vmatprep.subr.mxu0 0.0
    %v3602 = vand.u32 %v166, 4294901760
    %3603 = vmatpush1.msra.mxu0 %v3602
    %3604 = vmatprep.subr.mxu0 0.0
    %v3605 = vand.u32 %v167, 4294901760
    %3606 = vmatpush1.msra.mxu0 %v3605
    %3607 = vmatprep.subr.mxu0 0.0
    %v3608 = vand.u32 %v168, 4294901760
    %3609 = vmatpush1.msra.mxu0 %v3608
    %3610 = vmatprep.subr.mxu0 0.0
    %v3611 = vand.u32 %v169, 4294901760
    %3612 = vmatpush1.msra.mxu0 %v3611
    %3613 = vmatprep.subr.mxu0 0.0
    %v3614 = vand.u32 %v170, 4294901760
    %3615 = vmatpush1.msra.mxu0 %v3614
    %3616 = vmatprep.subr.mxu0 0.0
    %v3617 = vand.u32 %v171, 4294901760
    %3618 = vmatpush1.msra.mxu0 %v3617
    %v3619 = vand.u32 %v43, 4294901760
    %3620 = vmatprep.mubr.f32.mxu0 %v3619
    %v3621 = vand.u32 %v42, 4294901760
    %3622 = vmatmul.mubr.f32.gmra.mrb[0].mxu0 %v3621
    %v3623 = vpop.f32.mrb[0].mxu0
    %v3624 = vadd.f32 %v3520, %v3623
    %v3625 = vpop.f32.mrb[0].mxu0
    %3626 = vdwg.mxu0
    %v3627 = vmax.f32 %v3624, 0.0
    %v3628 = vld [vmem:[%s3] sm:$0xff]
    %v3629 = vld [vmem:[%s3 + $0x8] sm:$0xff]
    %v3630 = vld [vmem:[%s3 + $0x10] sm:$0xff]
    %v3631 = vld [vmem:[%s3 + $0x18] sm:$0xff]
    %v3632 = vld [vmem:[%s4] sm:$0x1]
    %v3634 = vlaneseq
    %v3635 = vshrl.u32 %v3634, 7
    %v3636 = vsub.s32 0, %v3635
    %v3637 = vrot.slane %v3632, %v3636
    %vm3639 = vcmask 261120
    %v3641 = vsel %vm3639, %v3627, 0
    %3643 = vmatprep.subr.mxu0 0.0
    %v3644 = vand.u32 %v3628, 4294901760
    %3645 = vmatpush1.msra.mxu0 %v3644
    %3646 = vmatprep.subr.mxu0 0.0
    %v3647 = vand.u32 %v3629, 4294901760
    %3648 = vmatpush1.msra.mxu0 %v3647
    %3649 = vmatprep.subr.mxu0 0.0
    %v3650 = vand.u32 %v3630, 4294901760
    %3651 = vmatpush1.msra.mxu0 %v3650
    %3652 = vmatprep.subr.mxu0 0.0
    %v3653 = vand.u32 %v3631, 4294901760
    %3654 = vmatpush1.msra.mxu0 %v3653
    %3655 = vmatprep.subr.mxu0 0.0
    %3656 = vmatpush1.msra.mxu0 0.0
    %3657 = vmatprep.subr.mxu0 0.0
    %3658 = vmatpush1.msra.mxu0 0.0
    %3659 = vmatprep.subr.mxu0 0.0
    %3660 = vmatpush1.msra.mxu0 0.0
    %3661 = vmatprep.subr.mxu0 0.0
    %3662 = vmatpush1.msra.mxu0 0.0
    %3663 = vmatprep.subr.mxu0 0.0
    %3664 = vmatpush1.msra.mxu0 0.0
    %3665 = vmatprep.subr.mxu0 0.0
    %3666 = vmatpush1.msra.mxu0 0.0
    %3667 = vmatprep.subr.mxu0 0.0
    %3668 = vmatpush1.msra.mxu0 0.0
    %3669 = vmatprep.subr.mxu0 0.0
    %3670 = vmatpush1.msra.mxu0 0.0
    %3671 = vmatprep.subr.mxu0 0.0
    %3672 = vmatpush1.msra.mxu0 0.0
    %3673 = vmatprep.subr.mxu0 0.0
    %3674 = vmatpush1.msra.mxu0 0.0
    %3675 = vmatprep.subr.mxu0 0.0
    %3676 = vmatpush1.msra.mxu0 0.0
    %3677 = vmatprep.subr.mxu0 0.0
    %3678 = vmatpush1.msra.mxu0 0.0
    %3679 = vmatprep.subr.mxu0 0.0
    %3680 = vmatpush1.msra.mxu0 0.0
    %3681 = vmatprep.subr.mxu0 0.0
    %3682 = vmatpush1.msra.mxu0 0.0
    %3683 = vmatprep.subr.mxu0 0.0
    %3684 = vmatpush1.msra.mxu0 0.0
    %3685 = vmatprep.subr.mxu0 0.0
    %3686 = vmatpush1.msra.mxu0 0.0
    %3687 = vmatprep.subr.mxu0 0.0
    %3688 = vmatpush1.msra.mxu0 0.0
    %3689 = vmatprep.subr.mxu0 0.0
    %3690 = vmatpush1.msra.mxu0 0.0
    %3691 = vmatprep.subr.mxu0 0.0
    %3692 = vmatpush1.msra.mxu0 0.0
    %3693 = vmatprep.subr.mxu0 0.0
    %3694 = vmatpush1.msra.mxu0 0.0
    %3695 = vmatprep.subr.mxu0 0.0
    %3696 = vmatpush1.msra.mxu0 0.0
    %3697 = vmatprep.subr.mxu0 0.0
    %3698 = vmatpush1.msra.mxu0 0.0
    %3699 = vmatprep.subr.mxu0 0.0
    %3700 = vmatpush1.msra.mxu0 0.0
    %3701 = vmatprep.subr.mxu0 0.0
    %3702 = vmatpush1.msra.mxu0 0.0
    %3703 = vmatprep.subr.mxu0 0.0
    %3704 = vmatpush1.msra.mxu0 0.0
    %3705 = vmatprep.subr.mxu0 0.0
    %3706 = vmatpush1.msra.mxu0 0.0
    %3707 = vmatprep.subr.mxu0 0.0
    %3708 = vmatpush1.msra.mxu0 0.0
    %3709 = vmatprep.subr.mxu0 0.0
    %3710 = vmatpush1.msra.mxu0 0.0
    %3711 = vmatprep.mubr.f32.mxu0 0.0
    %v3712 = vand.u32 %v3641, 4294901760
    %v3713 = vsub.f32 %v3641, %v3712
    %v3714 = vand.u32 %v3713, 4294901760
    %v3715 = vsub.f32 %v3713, %v3714
    %v3716 = vand.u32 %v3715, 4294901760
    %3717 = vmatmul.mubr.f32.gmra.mrb[0].mxu0 %v3716
    %v3718 = vpop.f32.mrb[0].mxu0
    %v3719 = vadd.f32 %v3637, %v3718
    %v3720 = vpop.f32.mrb[0].mxu0
    %3721 = vdwg.mxu0
    %3722 = vmatprep.subr.mxu0 0.0
    %v3723 = vand.u32 %v3628, 4294901760
    %v3724 = vsub.f32 %v3628, %v3723
    %v3725 = vand.u32 %v3724, 4294901760
    %v3726 = vsub.f32 %v3724, %v3725
    %v3727 = vand.u32 %v3726, 4294901760
    %3728 = vmatpush1.msra.mxu0 %v3727
    %3729 = vmatprep.subr.mxu0 0.0
    %v3730 = vand.u32 %v3629, 4294901760
    %v3731 = vsub.f32 %v3629, %v3730
    %v3732 = vand.u32 %v3731, 4294901760
    %v3733 = vsub.f32 %v3731, %v3732
    %v3734 = vand.u32 %v3733, 4294901760
    %3735 = vmatpush1.msra.mxu0 %v3734
    %3736 = vmatprep.subr.mxu0 0.0
    %v3737 = vand.u32 %v3630, 4294901760
    %v3738 = vsub.f32 %v3630, %v3737
    %v3739 = vand.u32 %v3738, 4294901760
    %v3740 = vsub.f32 %v3738, %v3739
    %v3741 = vand.u32 %v3740, 4294901760
    %3742 = vmatpush1.msra.mxu0 %v3741
    %3743 = vmatprep.subr.mxu0 0.0
    %v3744 = vand.u32 %v3631, 4294901760
    %v3745 = vsub.f32 %v3631, %v3744
    %v3746 = vand.u32 %v3745, 4294901760
    %v3747 = vsub.f32 %v3745, %v3746
    %v3748 = vand.u32 %v3747, 4294901760
    %3749 = vmatpush1.msra.mxu0 %v3748
    %3750 = vmatprep.subr.mxu0 0.0
    %3751 = vmatpush1.msra.mxu0 0.0
    %3752 = vmatprep.subr.mxu0 0.0
    %3753 = vmatpush1.msra.mxu0 0.0
    %3754 = vmatprep.subr.mxu0 0.0
    %3755 = vmatpush1.msra.mxu0 0.0
    %3756 = vmatprep.subr.mxu0 0.0
    %3757 = vmatpush1.msra.mxu0 0.0
    %3758 = vmatprep.subr.mxu0 0.0
    %3759 = vmatpush1.msra.mxu0 0.0
    %3760 = vmatprep.subr.mxu0 0.0
    %3761 = vmatpush1.msra.mxu0 0.0
    %3762 = vmatprep.subr.mxu0 0.0
    %3763 = vmatpush1.msra.mxu0 0.0
    %3764 = vmatprep.subr.mxu0 0.0
    %3765 = vmatpush1.msra.mxu0 0.0
    %3766 = vmatprep.subr.mxu0 0.0
    %3767 = vmatpush1.msra.mxu0 0.0
    %3768 = vmatprep.subr.mxu0 0.0
    %3769 = vmatpush1.msra.mxu0 0.0
    %3770 = vmatprep.subr.mxu0 0.0
    %3771 = vmatpush1.msra.mxu0 0.0
    %3772 = vmatprep.subr.mxu0 0.0
    %3773 = vmatpush1.msra.mxu0 0.0
    %3774 = vmatprep.subr.mxu0 0.0
    %3775 = vmatpush1.msra.mxu0 0.0
    %3776 = vmatprep.subr.mxu0 0.0
    %3777 = vmatpush1.msra.mxu0 0.0
    %3778 = vmatprep.subr.mxu0 0.0
    %3779 = vmatpush1.msra.mxu0 0.0
    %3780 = vmatprep.subr.mxu0 0.0
    %3781 = vmatpush1.msra.mxu0 0.0
    %3782 = vmatprep.subr.mxu0 0.0
    %3783 = vmatpush1.msra.mxu0 0.0
    %3784 = vmatprep.subr.mxu0 0.0
    %3785 = vmatpush1.msra.mxu0 0.0
    %3786 = vmatprep.subr.mxu0 0.0
    %3787 = vmatpush1.msra.mxu0 0.0
    %3788 = vmatprep.subr.mxu0 0.0
    %3789 = vmatpush1.msra.mxu0 0.0
    %3790 = vmatprep.subr.mxu0 0.0
    %3791 = vmatpush1.msra.mxu0 0.0
    %3792 = vmatprep.subr.mxu0 0.0
    %3793 = vmatpush1.msra.mxu0 0.0
    %3794 = vmatprep.subr.mxu0 0.0
    %3795 = vmatpush1.msra.mxu0 0.0
    %3796 = vmatprep.subr.mxu0 0.0
    %3797 = vmatpush1.msra.mxu0 0.0
    %3798 = vmatprep.subr.mxu0 0.0
    %3799 = vmatpush1.msra.mxu0 0.0
    %3800 = vmatprep.subr.mxu0 0.0
    %3801 = vmatpush1.msra.mxu0 0.0
    %3802 = vmatprep.subr.mxu0 0.0
    %3803 = vmatpush1.msra.mxu0 0.0
    %3804 = vmatprep.subr.mxu0 0.0
    %3805 = vmatpush1.msra.mxu0 0.0
    %3806 = vmatprep.mubr.f32.mxu0 0.0
    %v3807 = vand.u32 %v3641, 4294901760
    %3808 = vmatmul.mubr.f32.gmra.mrb[0].mxu0 %v3807
    %v3809 = vpop.f32.mrb[0].mxu0
    %v3810 = vadd.f32 %v3719, %v3809
    %v3811 = vpop.f32.mrb[0].mxu0
    %3812 = vdwg.mxu0
    %3813 = vmatprep.subr.mxu0 0.0
    %v3814 = vand.u32 %v3628, 4294901760
    %v3815 = vsub.f32 %v3628, %v3814
    %3816 = vmatpush1.msra.mxu0 %v3815
    %3817 = vmatprep.subr.mxu0 0.0
    %v3818 = vand.u32 %v3629, 4294901760
    %v3819 = vsub.f32 %v3629, %v3818
    %3820 = vmatpush1.msra.mxu0 %v3819
    %3821 = vmatprep.subr.mxu0 0.0
    %v3822 = vand.u32 %v3630, 4294901760
    %v3823 = vsub.f32 %v3630, %v3822
    %3824 = vmatpush1.msra.mxu0 %v3823
    %3825 = vmatprep.subr.mxu0 0.0
    %v3826 = vand.u32 %v3631, 4294901760
    %v3827 = vsub.f32 %v3631, %v3826
    %3828 = vmatpush1.msra.mxu0 %v3827
    %3829 = vmatprep.subr.mxu0 0.0
    %3830 = vmatpush1.msra.mxu0 0.0
    %3831 = vmatprep.subr.mxu0 0.0
    %3832 = vmatpush1.msra.mxu0 0.0
    %3833 = vmatprep.subr.mxu0 0.0
    %3834 = vmatpush1.msra.mxu0 0.0
    %3835 = vmatprep.subr.mxu0 0.0
    %3836 = vmatpush1.msra.mxu0 0.0
    %3837 = vmatprep.subr.mxu0 0.0
    %3838 = vmatpush1.msra.mxu0 0.0
    %3839 = vmatprep.subr.mxu0 0.0
    %3840 = vmatpush1.msra.mxu0 0.0
    %3841 = vmatprep.subr.mxu0 0.0
    %3842 = vmatpush1.msra.mxu0 0.0
    %3843 = vmatprep.subr.mxu0 0.0
    %3844 = vmatpush1.msra.mxu0 0.0
    %3845 = vmatprep.subr.mxu0 0.0
    %3846 = vmatpush1.msra.mxu0 0.0
    %3847 = vmatprep.subr.mxu0 0.0
    %3848 = vmatpush1.msra.mxu0 0.0
    %3849 = vmatprep.subr.mxu0 0.0
    %3850 = vmatpush1.msra.mxu0 0.0
    %3851 = vmatprep.subr.mxu0 0.0
    %3852 = vmatpush1.msra.mxu0 0.0
    %3853 = vmatprep.subr.mxu0 0.0
    %3854 = vmatpush1.msra.mxu0 0.0
    %3855 = vmatprep.subr.mxu0 0.0
    %3856 = vmatpush1.msra.mxu0 0.0
    %3857 = vmatprep.subr.mxu0 0.0
    %3858 = vmatpush1.msra.mxu0 0.0
    %3859 = vmatprep.subr.mxu0 0.0
    %3860 = vmatpush1.msra.mxu0 0.0
    %3861 = vmatprep.subr.mxu0 0.0
    %3862 = vmatpush1.msra.mxu0 0.0
    %3863 = vmatprep.subr.mxu0 0.0
    %3864 = vmatpush1.msra.mxu0 0.0
    %3865 = vmatprep.subr.mxu0 0.0
    %3866 = vmatpush1.msra.mxu0 0.0
    %3867 = vmatprep.subr.mxu0 0.0
    %3868 = vmatpush1.msra.mxu0 0.0
    %3869 = vmatprep.subr.mxu0 0.0
    %3870 = vmatpush1.msra.mxu0 0.0
    %3871 = vmatprep.subr.mxu0 0.0
    %3872 = vmatpush1.msra.mxu0 0.0
    %3873 = vmatprep.subr.mxu0 0.0
    %3874 = vmatpush1.msra.mxu0 0.0
    %3875 = vmatprep.subr.mxu0 0.0
    %3876 = vmatpush1.msra.mxu0 0.0
    %3877 = vmatprep.subr.mxu0 0.0
    %3878 = vmatpush1.msra.mxu0 0.0
    %3879 = vmatprep.subr.mxu0 0.0
    %3880 = vmatpush1.msra.mxu0 0.0
    %3881 = vmatprep.subr.mxu0 0.0
    %3882 = vmatpush1.msra.mxu0 0.0
    %3883 = vmatprep.subr.mxu0 0.0
    %3884 = vmatpush1.msra.mxu0 0.0
    %3885 = vmatprep.mubr.f32.mxu0 0.0
    %v3886 = vand.u32 %v3641, 4294901760
    %v3887 = vsub.f32 %v3641, %v3886
    %3888 = vmatmul.mubr.f32.gmra.mrb[0].mxu0 %v3887
    %v3889 = vpop.f32.mrb[0].mxu0
    %v3890 = vadd.f32 %v3810, %v3889
    %v3891 = vpop.f32.mrb[0].mxu0
    %3892 = vdwg.mxu0
    %3893 = vmatprep.subr.mxu0 0.0
    %v3894 = vand.u32 %v3628, 4294901760
    %3895 = vmatpush1.msra.mxu0 %v3894
    %3896 = vmatprep.subr.mxu0 0.0
    %v3897 = vand.u32 %v3629, 4294901760
    %3898 = vmatpush1.msra.mxu0 %v3897
    %3899 = vmatprep.subr.mxu0 0.0
    %v3900 = vand.u32 %v3630, 4294901760
    %3901 = vmatpush1.msra.mxu0 %v3900
    %3902 = vmatprep.subr.mxu0 0.0
    %v3903 = vand.u32 %v3631, 4294901760
    %3904 = vmatpush1.msra.mxu0 %v3903
    %3905 = vmatprep.subr.mxu0 0.0
    %3906 = vmatpush1.msra.mxu0 0.0
    %3907 = vmatprep.subr.mxu0 0.0
    %3908 = vmatpush1.msra.mxu0 0.0
    %3909 = vmatprep.subr.mxu0 0.0
    %3910 = vmatpush1.msra.mxu0 0.0
    %3911 = vmatprep.subr.mxu0 0.0
    %3912 = vmatpush1.msra.mxu0 0.0
    %3913 = vmatprep.subr.mxu0 0.0
    %3914 = vmatpush1.msra.mxu0 0.0
    %3915 = vmatprep.subr.mxu0 0.0
    %3916 = vmatpush1.msra.mxu0 0.0
    %3917 = vmatprep.subr.mxu0 0.0
    %3918 = vmatpush1.msra.mxu0 0.0
    %3919 = vmatprep.subr.mxu0 0.0
    %3920 = vmatpush1.msra.mxu0 0.0
    %3921 = vmatprep.subr.mxu0 0.0
    %3922 = vmatpush1.msra.mxu0 0.0
    %3923 = vmatprep.subr.mxu0 0.0
    %3924 = vmatpush1.msra.mxu0 0.0
    %3925 = vmatprep.subr.mxu0 0.0
    %3926 = vmatpush1.msra.mxu0 0.0
    %3927 = vmatprep.subr.mxu0 0.0
    %3928 = vmatpush1.msra.mxu0 0.0
    %3929 = vmatprep.subr.mxu0 0.0
    %3930 = vmatpush1.msra.mxu0 0.0
    %3931 = vmatprep.subr.mxu0 0.0
    %3932 = vmatpush1.msra.mxu0 0.0
    %3933 = vmatprep.subr.mxu0 0.0
    %3934 = vmatpush1.msra.mxu0 0.0
    %3935 = vmatprep.subr.mxu0 0.0
    %3936 = vmatpush1.msra.mxu0 0.0
    %3937 = vmatprep.subr.mxu0 0.0
    %3938 = vmatpush1.msra.mxu0 0.0
    %3939 = vmatprep.subr.mxu0 0.0
    %3940 = vmatpush1.msra.mxu0 0.0
    %3941 = vmatprep.subr.mxu0 0.0
    %3942 = vmatpush1.msra.mxu0 0.0
    %3943 = vmatprep.subr.mxu0 0.0
    %3944 = vmatpush1.msra.mxu0 0.0
    %3945 = vmatprep.subr.mxu0 0.0
    %3946 = vmatpush1.msra.mxu0 0.0
    %3947 = vmatprep.subr.mxu0 0.0
    %3948 = vmatpush1.msra.mxu0 0.0
    %3949 = vmatprep.subr.mxu0 0.0
    %3950 = vmatpush1.msra.mxu0 0.0
    %3951 = vmatprep.subr.mxu0 0.0
    %3952 = vmatpush1.msra.mxu0 0.0
    %3953 = vmatprep.subr.mxu0 0.0
    %3954 = vmatpush1.msra.mxu0 0.0
    %3955 = vmatprep.subr.mxu0 0.0
    %3956 = vmatpush1.msra.mxu0 0.0
    %3957 = vmatprep.subr.mxu0 0.0
    %3958 = vmatpush1.msra.mxu0 0.0
    %3959 = vmatprep.subr.mxu0 0.0
    %3960 = vmatpush1.msra.mxu0 0.0
    %3961 = vmatprep.mubr.f32.mxu0 0.0
    %v3962 = vand.u32 %v3641, 4294901760
    %v3963 = vsub.f32 %v3641, %v3962
    %v3964 = vand.u32 %v3963, 4294901760
    %3965 = vmatmul.mubr.f32.gmra.mrb[0].mxu0 %v3964
    %v3966 = vpop.f32.mrb[0].mxu0
    %v3967 = vadd.f32 %v3890, %v3966
    %v3968 = vpop.f32.mrb[0].mxu0
    %3969 = vdwg.mxu0
    %3970 = vmatprep.subr.mxu0 0.0
    %v3971 = vand.u32 %v3628, 4294901760
    %v3972 = vsub.f32 %v3628, %v3971
    %v3973 = vand.u32 %v3972, 4294901760
    %3974 = vmatpush1.msra.mxu0 %v3973
    %3975 = vmatprep.subr.mxu0 0.0
    %v3976 = vand.u32 %v3629, 4294901760
    %v3977 = vsub.f32 %v3629, %v3976
    %v3978 = vand.u32 %v3977, 4294901760
    %3979 = vmatpush1.msra.mxu0 %v3978
    %3980 = vmatprep.subr.mxu0 0.0
    %v3981 = vand.u32 %v3630, 4294901760
    %v3982 = vsub.f32 %v3630, %v3981
    %v3983 = vand.u32 %v3982, 4294901760
    %3984 = vmatpush1.msra.mxu0 %v3983
    %3985 = vmatprep.subr.mxu0 0.0
    %v3986 = vand.u32 %v3631, 4294901760
    %v3987 = vsub.f32 %v3631, %v3986
    %v3988 = vand.u32 %v3987, 4294901760
    %3989 = vmatpush1.msra.mxu0 %v3988
    %3990 = vmatprep.subr.mxu0 0.0
    %3991 = vmatpush1.msra.mxu0 0.0
    %3992 = vmatprep.subr.mxu0 0.0
    %3993 = vmatpush1.msra.mxu0 0.0
    %3994 = vmatprep.subr.mxu0 0.0
    %3995 = vmatpush1.msra.mxu0 0.0
    %3996 = vmatprep.subr.mxu0 0.0
    %3997 = vmatpush1.msra.mxu0 0.0
    %3998 = vmatprep.subr.mxu0 0.0
    %3999 = vmatpush1.msra.mxu0 0.0
    %4000 = vmatprep.subr.mxu0 0.0
    %4001 = vmatpush1.msra.mxu0 0.0
    %4002 = vmatprep.subr.mxu0 0.0
    %4003 = vmatpush1.msra.mxu0 0.0
    %4004 = vmatprep.subr.mxu0 0.0
    %4005 = vmatpush1.msra.mxu0 0.0
    %4006 = vmatprep.subr.mxu0 0.0
    %4007 = vmatpush1.msra.mxu0 0.0
    %4008 = vmatprep.subr.mxu0 0.0
    %4009 = vmatpush1.msra.mxu0 0.0
    %4010 = vmatprep.subr.mxu0 0.0
    %4011 = vmatpush1.msra.mxu0 0.0
    %4012 = vmatprep.subr.mxu0 0.0
    %4013 = vmatpush1.msra.mxu0 0.0
    %4014 = vmatprep.subr.mxu0 0.0
    %4015 = vmatpush1.msra.mxu0 0.0
    %4016 = vmatprep.subr.mxu0 0.0
    %4017 = vmatpush1.msra.mxu0 0.0
    %4018 = vmatprep.subr.mxu0 0.0
    %4019 = vmatpush1.msra.mxu0 0.0
    %4020 = vmatprep.subr.mxu0 0.0
    %4021 = vmatpush1.msra.mxu0 0.0
    %4022 = vmatprep.subr.mxu0 0.0
    %4023 = vmatpush1.msra.mxu0 0.0
    %4024 = vmatprep.subr.mxu0 0.0
    %4025 = vmatpush1.msra.mxu0 0.0
    %4026 = vmatprep.subr.mxu0 0.0
    %4027 = vmatpush1.msra.mxu0 0.0
    %4028 = vmatprep.subr.mxu0 0.0
    %4029 = vmatpush1.msra.mxu0 0.0
    %4030 = vmatprep.subr.mxu0 0.0
    %4031 = vmatpush1.msra.mxu0 0.0
    %4032 = vmatprep.subr.mxu0 0.0
    %4033 = vmatpush1.msra.mxu0 0.0
    %4034 = vmatprep.subr.mxu0 0.0
    %4035 = vmatpush1.msra.mxu0 0.0
    %4036 = vmatprep.subr.mxu0 0.0
    %4037 = vmatpush1.msra.mxu0 0.0
    %4038 = vmatprep.subr.mxu0 0.0
    %4039 = vmatpush1.msra.mxu0 0.0
    %4040 = vmatprep.subr.mxu0 0.0
    %4041 = vmatpush1.msra.mxu0 0.0
    %4042 = vmatprep.subr.mxu0 0.0
    %4043 = vmatpush1.msra.mxu0 0.0
    %4044 = vmatprep.subr.mxu0 0.0
    %4045 = vmatpush1.msra.mxu0 0.0
    %4046 = vmatprep.mubr.f32.mxu0 0.0
    %v4047 = vand.u32 %v3641, 4294901760
    %4048 = vmatmul.mubr.f32.gmra.mrb[0].mxu0 %v4047
    %v4049 = vpop.f32.mrb[0].mxu0
    %v4050 = vadd.f32 %v3967, %v4049
    %v4051 = vpop.f32.mrb[0].mxu0
    %4052 = vdwg.mxu0
    %4053 = vmatprep.subr.mxu0 0.0
    %v4054 = vand.u32 %v3628, 4294901760
    %4055 = vmatpush1.msra.mxu0 %v4054
    %4056 = vmatprep.subr.mxu0 0.0
    %v4057 = vand.u32 %v3629, 4294901760
    %4058 = vmatpush1.msra.mxu0 %v4057
    %4059 = vmatprep.subr.mxu0 0.0
    %v4060 = vand.u32 %v3630, 4294901760
    %4061 = vmatpush1.msra.mxu0 %v4060
    %4062 = vmatprep.subr.mxu0 0.0
    %v4063 = vand.u32 %v3631, 4294901760
    %4064 = vmatpush1.msra.mxu0 %v4063
    %4065 = vmatprep.subr.mxu0 0.0
    %4066 = vmatpush1.msra.mxu0 0.0
    %4067 = vmatprep.subr.mxu0 0.0
    %4068 = vmatpush1.msra.mxu0 0.0
    %4069 = vmatprep.subr.mxu0 0.0
    %4070 = vmatpush1.msra.mxu0 0.0
    %4071 = vmatprep.subr.mxu0 0.0
    %4072 = vmatpush1.msra.mxu0 0.0
    %4073 = vmatprep.subr.mxu0 0.0
    %4074 = vmatpush1.msra.mxu0 0.0
    %4075 = vmatprep.subr.mxu0 0.0
    %4076 = vmatpush1.msra.mxu0 0.0
    %4077 = vmatprep.subr.mxu0 0.0
    %4078 = vmatpush1.msra.mxu0 0.0
    %4079 = vmatprep.subr.mxu0 0.0
    %4080 = vmatpush1.msra.mxu0 0.0
    %4081 = vmatprep.subr.mxu0 0.0
    %4082 = vmatpush1.msra.mxu0 0.0
    %4083 = vmatprep.subr.mxu0 0.0
    %4084 = vmatpush1.msra.mxu0 0.0
    %4085 = vmatprep.subr.mxu0 0.0
    %4086 = vmatpush1.msra.mxu0 0.0
    %4087 = vmatprep.subr.mxu0 0.0
    %4088 = vmatpush1.msra.mxu0 0.0
    %4089 = vmatprep.subr.mxu0 0.0
    %4090 = vmatpush1.msra.mxu0 0.0
    %4091 = vmatprep.subr.mxu0 0.0
    %4092 = vmatpush1.msra.mxu0 0.0
    %4093 = vmatprep.subr.mxu0 0.0
    %4094 = vmatpush1.msra.mxu0 0.0
    %4095 = vmatprep.subr.mxu0 0.0
    %4096 = vmatpush1.msra.mxu0 0.0
    %4097 = vmatprep.subr.mxu0 0.0
    %4098 = vmatpush1.msra.mxu0 0.0
    %4099 = vmatprep.subr.mxu0 0.0
    %4100 = vmatpush1.msra.mxu0 0.0
    %4101 = vmatprep.subr.mxu0 0.0
    %4102 = vmatpush1.msra.mxu0 0.0
    %4103 = vmatprep.subr.mxu0 0.0
    %4104 = vmatpush1.msra.mxu0 0.0
    %4105 = vmatprep.subr.mxu0 0.0
    %4106 = vmatpush1.msra.mxu0 0.0
    %4107 = vmatprep.subr.mxu0 0.0
    %4108 = vmatpush1.msra.mxu0 0.0
    %4109 = vmatprep.subr.mxu0 0.0
    %4110 = vmatpush1.msra.mxu0 0.0
    %4111 = vmatprep.subr.mxu0 0.0
    %4112 = vmatpush1.msra.mxu0 0.0
    %4113 = vmatprep.subr.mxu0 0.0
    %4114 = vmatpush1.msra.mxu0 0.0
    %4115 = vmatprep.subr.mxu0 0.0
    %4116 = vmatpush1.msra.mxu0 0.0
    %4117 = vmatprep.subr.mxu0 0.0
    %4118 = vmatpush1.msra.mxu0 0.0
    %4119 = vmatprep.subr.mxu0 0.0
    %4120 = vmatpush1.msra.mxu0 0.0
    %4121 = vmatprep.mubr.f32.mxu0 0.0
    %v4122 = vand.u32 %v3641, 4294901760
    %4123 = vmatmul.mubr.f32.gmra.mrb[0].mxu0 %v4122
    %v4124 = vpop.f32.mrb[0].mxu0
    %v4125 = vadd.f32 %v4050, %v4124
    %v4126 = vpop.f32.mrb[0].mxu0
    %4127 = vdwg.mxu0
    %v4128 = vmax.f32 %v4125, 0.0
    %v4129 = vld [vmem:[%s5] sm:$0xff]
    %v4130 = vld [vmem:[%s5 + $0x8] sm:$0xff]
    %v4131 = vld [vmem:[%s5 + $0x10] sm:$0xff]
    %v4132 = vld [vmem:[%s5 + $0x18] sm:$0xff]
    %v4133 = vld [vmem:[%s6] sm:$0x1]
    %v4135 = vlaneseq
    %v4136 = vshrl.u32 %v4135, 7
    %v4137 = vsub.s32 0, %v4136
    %v4138 = vrot.slane %v4133, %v4137
    %v4141 = vsel %vm3639, %v4128, 0
    %4143 = vmatprep.subr.mxu0 0.0
    %v4144 = vand.u32 %v4129, 4294901760
    %4145 = vmatpush1.msra.mxu0 %v4144
    %4146 = vmatprep.subr.mxu0 0.0
    %v4147 = vand.u32 %v4130, 4294901760
    %4148 = vmatpush1.msra.mxu0 %v4147
    %4149 = vmatprep.subr.mxu0 0.0
    %v4150 = vand.u32 %v4131, 4294901760
    %4151 = vmatpush1.msra.mxu0 %v4150
    %4152 = vmatprep.subr.mxu0 0.0
    %v4153 = vand.u32 %v4132, 4294901760
    %4154 = vmatpush1.msra.mxu0 %v4153
    %4155 = vmatprep.subr.mxu0 0.0
    %4156 = vmatpush1.msra.mxu0 0.0
    %4157 = vmatprep.subr.mxu0 0.0
    %4158 = vmatpush1.msra.mxu0 0.0
    %4159 = vmatprep.subr.mxu0 0.0
    %4160 = vmatpush1.msra.mxu0 0.0
    %4161 = vmatprep.subr.mxu0 0.0
    %4162 = vmatpush1.msra.mxu0 0.0
    %4163 = vmatprep.subr.mxu0 0.0
    %4164 = vmatpush1.msra.mxu0 0.0
    %4165 = vmatprep.subr.mxu0 0.0
    %4166 = vmatpush1.msra.mxu0 0.0
    %4167 = vmatprep.subr.mxu0 0.0
    %4168 = vmatpush1.msra.mxu0 0.0
    %4169 = vmatprep.subr.mxu0 0.0
    %4170 = vmatpush1.msra.mxu0 0.0
    %4171 = vmatprep.subr.mxu0 0.0
    %4172 = vmatpush1.msra.mxu0 0.0
    %4173 = vmatprep.subr.mxu0 0.0
    %4174 = vmatpush1.msra.mxu0 0.0
    %4175 = vmatprep.subr.mxu0 0.0
    %4176 = vmatpush1.msra.mxu0 0.0
    %4177 = vmatprep.subr.mxu0 0.0
    %4178 = vmatpush1.msra.mxu0 0.0
    %4179 = vmatprep.subr.mxu0 0.0
    %4180 = vmatpush1.msra.mxu0 0.0
    %4181 = vmatprep.subr.mxu0 0.0
    %4182 = vmatpush1.msra.mxu0 0.0
    %4183 = vmatprep.subr.mxu0 0.0
    %4184 = vmatpush1.msra.mxu0 0.0
    %4185 = vmatprep.subr.mxu0 0.0
    %4186 = vmatpush1.msra.mxu0 0.0
    %4187 = vmatprep.subr.mxu0 0.0
    %4188 = vmatpush1.msra.mxu0 0.0
    %4189 = vmatprep.subr.mxu0 0.0
    %4190 = vmatpush1.msra.mxu0 0.0
    %4191 = vmatprep.subr.mxu0 0.0
    %4192 = vmatpush1.msra.mxu0 0.0
    %4193 = vmatprep.subr.mxu0 0.0
    %4194 = vmatpush1.msra.mxu0 0.0
    %4195 = vmatprep.subr.mxu0 0.0
    %4196 = vmatpush1.msra.mxu0 0.0
    %4197 = vmatprep.subr.mxu0 0.0
    %4198 = vmatpush1.msra.mxu0 0.0
    %4199 = vmatprep.subr.mxu0 0.0
    %4200 = vmatpush1.msra.mxu0 0.0
    %4201 = vmatprep.subr.mxu0 0.0
    %4202 = vmatpush1.msra.mxu0 0.0
    %4203 = vmatprep.subr.mxu0 0.0
    %4204 = vmatpush1.msra.mxu0 0.0
    %4205 = vmatprep.subr.mxu0 0.0
    %4206 = vmatpush1.msra.mxu0 0.0
    %4207 = vmatprep.subr.mxu0 0.0
    %4208 = vmatpush1.msra.mxu0 0.0
    %4209 = vmatprep.subr.mxu0 0.0
    %4210 = vmatpush1.msra.mxu0 0.0
    %4211 = vmatprep.mubr.f32.mxu0 0.0
    %v4212 = vand.u32 %v4141, 4294901760
    %v4213 = vsub.f32 %v4141, %v4212
    %v4214 = vand.u32 %v4213, 4294901760
    %v4215 = vsub.f32 %v4213, %v4214
    %v4216 = vand.u32 %v4215, 4294901760
    %4217 = vmatmul.mubr.f32.gmra.mrb[0].mxu0 %v4216
    %v4218 = vpop.f32.mrb[0].mxu0
    %v4219 = vadd.f32 %v4138, %v4218
    %v4220 = vpop.f32.mrb[0].mxu0
    %4221 = vdwg.mxu0
    %4222 = vmatprep.subr.mxu0 0.0
    %v4223 = vand.u32 %v4129, 4294901760
    %v4224 = vsub.f32 %v4129, %v4223
    %v4225 = vand.u32 %v4224, 4294901760
    %v4226 = vsub.f32 %v4224, %v4225
    %v4227 = vand.u32 %v4226, 4294901760
    %4228 = vmatpush1.msra.mxu0 %v4227
    %4229 = vmatprep.subr.mxu0 0.0
    %v4230 = vand.u32 %v4130, 4294901760
    %v4231 = vsub.f32 %v4130, %v4230
    %v4232 = vand.u32 %v4231, 4294901760
    %v4233 = vsub.f32 %v4231, %v4232
    %v4234 = vand.u32 %v4233, 4294901760
    %4235 = vmatpush1.msra.mxu0 %v4234
    %4236 = vmatprep.subr.mxu0 0.0
    %v4237 = vand.u32 %v4131, 4294901760
    %v4238 = vsub.f32 %v4131, %v4237
    %v4239 = vand.u32 %v4238, 4294901760
    %v4240 = vsub.f32 %v4238, %v4239
    %v4241 = vand.u32 %v4240, 4294901760
    %4242 = vmatpush1.msra.mxu0 %v4241
    %4243 = vmatprep.subr.mxu0 0.0
    %v4244 = vand.u32 %v4132, 4294901760
    %v4245 = vsub.f32 %v4132, %v4244
    %v4246 = vand.u32 %v4245, 4294901760
    %v4247 = vsub.f32 %v4245, %v4246
    %v4248 = vand.u32 %v4247, 4294901760
    %4249 = vmatpush1.msra.mxu0 %v4248
    %4250 = vmatprep.subr.mxu0 0.0
    %4251 = vmatpush1.msra.mxu0 0.0
    %4252 = vmatprep.subr.mxu0 0.0
    %4253 = vmatpush1.msra.mxu0 0.0
    %4254 = vmatprep.subr.mxu0 0.0
    %4255 = vmatpush1.msra.mxu0 0.0
    %4256 = vmatprep.subr.mxu0 0.0
    %4257 = vmatpush1.msra.mxu0 0.0
    %4258 = vmatprep.subr.mxu0 0.0
    %4259 = vmatpush1.msra.mxu0 0.0
    %4260 = vmatprep.subr.mxu0 0.0
    %4261 = vmatpush1.msra.mxu0 0.0
    %4262 = vmatprep.subr.mxu0 0.0
    %4263 = vmatpush1.msra.mxu0 0.0
    %4264 = vmatprep.subr.mxu0 0.0
    %4265 = vmatpush1.msra.mxu0 0.0
    %4266 = vmatprep.subr.mxu0 0.0
    %4267 = vmatpush1.msra.mxu0 0.0
    %4268 = vmatprep.subr.mxu0 0.0
    %4269 = vmatpush1.msra.mxu0 0.0
    %4270 = vmatprep.subr.mxu0 0.0
    %4271 = vmatpush1.msra.mxu0 0.0
    %4272 = vmatprep.subr.mxu0 0.0
    %4273 = vmatpush1.msra.mxu0 0.0
    %4274 = vmatprep.subr.mxu0 0.0
    %4275 = vmatpush1.msra.mxu0 0.0
    %4276 = vmatprep.subr.mxu0 0.0
    %4277 = vmatpush1.msra.mxu0 0.0
    %4278 = vmatprep.subr.mxu0 0.0
    %4279 = vmatpush1.msra.mxu0 0.0
    %4280 = vmatprep.subr.mxu0 0.0
    %4281 = vmatpush1.msra.mxu0 0.0
    %4282 = vmatprep.subr.mxu0 0.0
    %4283 = vmatpush1.msra.mxu0 0.0
    %4284 = vmatprep.subr.mxu0 0.0
    %4285 = vmatpush1.msra.mxu0 0.0
    %4286 = vmatprep.subr.mxu0 0.0
    %4287 = vmatpush1.msra.mxu0 0.0
    %4288 = vmatprep.subr.mxu0 0.0
    %4289 = vmatpush1.msra.mxu0 0.0
    %4290 = vmatprep.subr.mxu0 0.0
    %4291 = vmatpush1.msra.mxu0 0.0
    %4292 = vmatprep.subr.mxu0 0.0
    %4293 = vmatpush1.msra.mxu0 0.0
    %4294 = vmatprep.subr.mxu0 0.0
    %4295 = vmatpush1.msra.mxu0 0.0
    %4296 = vmatprep.subr.mxu0 0.0
    %4297 = vmatpush1.msra.mxu0 0.0
    %4298 = vmatprep.subr.mxu0 0.0
    %4299 = vmatpush1.msra.mxu0 0.0
    %4300 = vmatprep.subr.mxu0 0.0
    %4301 = vmatpush1.msra.mxu0 0.0
    %4302 = vmatprep.subr.mxu0 0.0
    %4303 = vmatpush1.msra.mxu0 0.0
    %4304 = vmatprep.subr.mxu0 0.0
    %4305 = vmatpush1.msra.mxu0 0.0
    %4306 = vmatprep.mubr.f32.mxu0 0.0
    %v4307 = vand.u32 %v4141, 4294901760
    %4308 = vmatmul.mubr.f32.gmra.mrb[0].mxu0 %v4307
    %v4309 = vpop.f32.mrb[0].mxu0
    %v4310 = vadd.f32 %v4219, %v4309
    %v4311 = vpop.f32.mrb[0].mxu0
    %4312 = vdwg.mxu0
    %4313 = vmatprep.subr.mxu0 0.0
    %v4314 = vand.u32 %v4129, 4294901760
    %v4315 = vsub.f32 %v4129, %v4314
    %4316 = vmatpush1.msra.mxu0 %v4315
    %4317 = vmatprep.subr.mxu0 0.0
    %v4318 = vand.u32 %v4130, 4294901760
    %v4319 = vsub.f32 %v4130, %v4318
    %4320 = vmatpush1.msra.mxu0 %v4319
    %4321 = vmatprep.subr.mxu0 0.0
    %v4322 = vand.u32 %v4131, 4294901760
    %v4323 = vsub.f32 %v4131, %v4322
    %4324 = vmatpush1.msra.mxu0 %v4323
    %4325 = vmatprep.subr.mxu0 0.0
    %v4326 = vand.u32 %v4132, 4294901760
    %v4327 = vsub.f32 %v4132, %v4326
    %4328 = vmatpush1.msra.mxu0 %v4327
    %4329 = vmatprep.subr.mxu0 0.0
    %4330 = vmatpush1.msra.mxu0 0.0
    %4331 = vmatprep.subr.mxu0 0.0
    %4332 = vmatpush1.msra.mxu0 0.0
    %4333 = vmatprep.subr.mxu0 0.0
    %4334 = vmatpush1.msra.mxu0 0.0
    %4335 = vmatprep.subr.mxu0 0.0
    %4336 = vmatpush1.msra.mxu0 0.0
    %4337 = vmatprep.subr.mxu0 0.0
    %4338 = vmatpush1.msra.mxu0 0.0
    %4339 = vmatprep.subr.mxu0 0.0
    %4340 = vmatpush1.msra.mxu0 0.0
    %4341 = vmatprep.subr.mxu0 0.0
    %4342 = vmatpush1.msra.mxu0 0.0
    %4343 = vmatprep.subr.mxu0 0.0
    %4344 = vmatpush1.msra.mxu0 0.0
    %4345 = vmatprep.subr.mxu0 0.0
    %4346 = vmatpush1.msra.mxu0 0.0
    %4347 = vmatprep.subr.mxu0 0.0
    %4348 = vmatpush1.msra.mxu0 0.0
    %4349 = vmatprep.subr.mxu0 0.0
    %4350 = vmatpush1.msra.mxu0 0.0
    %4351 = vmatprep.subr.mxu0 0.0
    %4352 = vmatpush1.msra.mxu0 0.0
    %4353 = vmatprep.subr.mxu0 0.0
    %4354 = vmatpush1.msra.mxu0 0.0
    %4355 = vmatprep.subr.mxu0 0.0
    %4356 = vmatpush1.msra.mxu0 0.0
    %4357 = vmatprep.subr.mxu0 0.0
    %4358 = vmatpush1.msra.mxu0 0.0
    %4359 = vmatprep.subr.mxu0 0.0
    %4360 = vmatpush1.msra.mxu0 0.0
    %4361 = vmatprep.subr.mxu0 0.0
    %4362 = vmatpush1.msra.mxu0 0.0
    %4363 = vmatprep.subr.mxu0 0.0
    %4364 = vmatpush1.msra.mxu0 0.0
    %4365 = vmatprep.subr.mxu0 0.0
    %4366 = vmatpush1.msra.mxu0 0.0
    %4367 = vmatprep.subr.mxu0 0.0
    %4368 = vmatpush1.msra.mxu0 0.0
    %4369 = vmatprep.subr.mxu0 0.0
    %4370 = vmatpush1.msra.mxu0 0.0
    %4371 = vmatprep.subr.mxu0 0.0
    %4372 = vmatpush1.msra.mxu0 0.0
    %4373 = vmatprep.subr.mxu0 0.0
    %4374 = vmatpush1.msra.mxu0 0.0
    %4375 = vmatprep.subr.mxu0 0.0
    %4376 = vmatpush1.msra.mxu0 0.0
    %4377 = vmatprep.subr.mxu0 0.0
    %4378 = vmatpush1.msra.mxu0 0.0
    %4379 = vmatprep.subr.mxu0 0.0
    %4380 = vmatpush1.msra.mxu0 0.0
    %4381 = vmatprep.subr.mxu0 0.0
    %4382 = vmatpush1.msra.mxu0 0.0
    %4383 = vmatprep.subr.mxu0 0.0
    %4384 = vmatpush1.msra.mxu0 0.0
    %4385 = vmatprep.mubr.f32.mxu0 0.0
    %v4386 = vand.u32 %v4141, 4294901760
    %v4387 = vsub.f32 %v4141, %v4386
    %4388 = vmatmul.mubr.f32.gmra.mrb[0].mxu0 %v4387
    %v4389 = vpop.f32.mrb[0].mxu0
    %v4390 = vadd.f32 %v4310, %v4389
    %v4391 = vpop.f32.mrb[0].mxu0
    %4392 = vdwg.mxu0
    %4393 = vmatprep.subr.mxu0 0.0
    %v4394 = vand.u32 %v4129, 4294901760
    %4395 = vmatpush1.msra.mxu0 %v4394
    %4396 = vmatprep.subr.mxu0 0.0
    %v4397 = vand.u32 %v4130, 4294901760
    %4398 = vmatpush1.msra.mxu0 %v4397
    %4399 = vmatprep.subr.mxu0 0.0
    %v4400 = vand.u32 %v4131, 4294901760
    %4401 = vmatpush1.msra.mxu0 %v4400
    %4402 = vmatprep.subr.mxu0 0.0
    %v4403 = vand.u32 %v4132, 4294901760
    %4404 = vmatpush1.msra.mxu0 %v4403
    %4405 = vmatprep.subr.mxu0 0.0
    %4406 = vmatpush1.msra.mxu0 0.0
    %4407 = vmatprep.subr.mxu0 0.0
    %4408 = vmatpush1.msra.mxu0 0.0
    %4409 = vmatprep.subr.mxu0 0.0
    %4410 = vmatpush1.msra.mxu0 0.0
    %4411 = vmatprep.subr.mxu0 0.0
    %4412 = vmatpush1.msra.mxu0 0.0
    %4413 = vmatprep.subr.mxu0 0.0
    %4414 = vmatpush1.msra.mxu0 0.0
    %4415 = vmatprep.subr.mxu0 0.0
    %4416 = vmatpush1.msra.mxu0 0.0
    %4417 = vmatprep.subr.mxu0 0.0
    %4418 = vmatpush1.msra.mxu0 0.0
    %4419 = vmatprep.subr.mxu0 0.0
    %4420 = vmatpush1.msra.mxu0 0.0
    %4421 = vmatprep.subr.mxu0 0.0
    %4422 = vmatpush1.msra.mxu0 0.0
    %4423 = vmatprep.subr.mxu0 0.0
    %4424 = vmatpush1.msra.mxu0 0.0
    %4425 = vmatprep.subr.mxu0 0.0
    %4426 = vmatpush1.msra.mxu0 0.0
    %4427 = vmatprep.subr.mxu0 0.0
    %4428 = vmatpush1.msra.mxu0 0.0
    %4429 = vmatprep.subr.mxu0 0.0
    %4430 = vmatpush1.msra.mxu0 0.0
    %4431 = vmatprep.subr.mxu0 0.0
    %4432 = vmatpush1.msra.mxu0 0.0
    %4433 = vmatprep.subr.mxu0 0.0
    %4434 = vmatpush1.msra.mxu0 0.0
    %4435 = vmatprep.subr.mxu0 0.0
    %4436 = vmatpush1.msra.mxu0 0.0
    %4437 = vmatprep.subr.mxu0 0.0
    %4438 = vmatpush1.msra.mxu0 0.0
    %4439 = vmatprep.subr.mxu0 0.0
    %4440 = vmatpush1.msra.mxu0 0.0
    %4441 = vmatprep.subr.mxu0 0.0
    %4442 = vmatpush1.msra.mxu0 0.0
    %4443 = vmatprep.subr.mxu0 0.0
    %4444 = vmatpush1.msra.mxu0 0.0
    %4445 = vmatprep.subr.mxu0 0.0
    %4446 = vmatpush1.msra.mxu0 0.0
    %4447 = vmatprep.subr.mxu0 0.0
    %4448 = vmatpush1.msra.mxu0 0.0
    %4449 = vmatprep.subr.mxu0 0.0
    %4450 = vmatpush1.msra.mxu0 0.0
    %4451 = vmatprep.subr.mxu0 0.0
    %4452 = vmatpush1.msra.mxu0 0.0
    %4453 = vmatprep.subr.mxu0 0.0
    %4454 = vmatpush1.msra.mxu0 0.0
    %4455 = vmatprep.subr.mxu0 0.0
    %4456 = vmatpush1.msra.mxu0 0.0
    %4457 = vmatprep.subr.mxu0 0.0
    %4458 = vmatpush1.msra.mxu0 0.0
    %4459 = vmatprep.subr.mxu0 0.0
    %4460 = vmatpush1.msra.mxu0 0.0
    %4461 = vmatprep.mubr.f32.mxu0 0.0
    %v4462 = vand.u32 %v4141, 4294901760
    %v4463 = vsub.f32 %v4141, %v4462
    %v4464 = vand.u32 %v4463, 4294901760
    %4465 = vmatmul.mubr.f32.gmra.mrb[0].mxu0 %v4464
    %v4466 = vpop.f32.mrb[0].mxu0
    %v4467 = vadd.f32 %v4390, %v4466
    %v4468 = vpop.f32.mrb[0].mxu0
    %4469 = vdwg.mxu0
    %4470 = vmatprep.subr.mxu0 0.0
    %v4471 = vand.u32 %v4129, 4294901760
    %v4472 = vsub.f32 %v4129, %v4471
    %v4473 = vand.u32 %v4472, 4294901760
    %4474 = vmatpush1.msra.mxu0 %v4473
    %4475 = vmatprep.subr.mxu0 0.0
    %v4476 = vand.u32 %v4130, 4294901760
    %v4477 = vsub.f32 %v4130, %v4476
    %v4478 = vand.u32 %v4477, 4294901760
    %4479 = vmatpush1.msra.mxu0 %v4478
    %4480 = vmatprep.subr.mxu0 0.0
    %v4481 = vand.u32 %v4131, 4294901760
    %v4482 = vsub.f32 %v4131, %v4481
    %v4483 = vand.u32 %v4482, 4294901760
    %4484 = vmatpush1.msra.mxu0 %v4483
    %4485 = vmatprep.subr.mxu0 0.0
    %v4486 = vand.u32 %v4132, 4294901760
    %v4487 = vsub.f32 %v4132, %v4486
    %v4488 = vand.u32 %v4487, 4294901760
    %4489 = vmatpush1.msra.mxu0 %v4488
    %4490 = vmatprep.subr.mxu0 0.0
    %4491 = vmatpush1.msra.mxu0 0.0
    %4492 = vmatprep.subr.mxu0 0.0
    %4493 = vmatpush1.msra.mxu0 0.0
    %4494 = vmatprep.subr.mxu0 0.0
    %4495 = vmatpush1.msra.mxu0 0.0
    %4496 = vmatprep.subr.mxu0 0.0
    %4497 = vmatpush1.msra.mxu0 0.0
    %4498 = vmatprep.subr.mxu0 0.0
    %4499 = vmatpush1.msra.mxu0 0.0
    %4500 = vmatprep.subr.mxu0 0.0
    %4501 = vmatpush1.msra.mxu0 0.0
    %4502 = vmatprep.subr.mxu0 0.0
    %4503 = vmatpush1.msra.mxu0 0.0
    %4504 = vmatprep.subr.mxu0 0.0
    %4505 = vmatpush1.msra.mxu0 0.0
    %4506 = vmatprep.subr.mxu0 0.0
    %4507 = vmatpush1.msra.mxu0 0.0
    %4508 = vmatprep.subr.mxu0 0.0
    %4509 = vmatpush1.msra.mxu0 0.0
    %4510 = vmatprep.subr.mxu0 0.0
    %4511 = vmatpush1.msra.mxu0 0.0
    %4512 = vmatprep.subr.mxu0 0.0
    %4513 = vmatpush1.msra.mxu0 0.0
    %4514 = vmatprep.subr.mxu0 0.0
    %4515 = vmatpush1.msra.mxu0 0.0
    %4516 = vmatprep.subr.mxu0 0.0
    %4517 = vmatpush1.msra.mxu0 0.0
    %4518 = vmatprep.subr.mxu0 0.0
    %4519 = vmatpush1.msra.mxu0 0.0
    %4520 = vmatprep.subr.mxu0 0.0
    %4521 = vmatpush1.msra.mxu0 0.0
    %4522 = vmatprep.subr.mxu0 0.0
    %4523 = vmatpush1.msra.mxu0 0.0
    %4524 = vmatprep.subr.mxu0 0.0
    %4525 = vmatpush1.msra.mxu0 0.0
    %4526 = vmatprep.subr.mxu0 0.0
    %4527 = vmatpush1.msra.mxu0 0.0
    %4528 = vmatprep.subr.mxu0 0.0
    %4529 = vmatpush1.msra.mxu0 0.0
    %4530 = vmatprep.subr.mxu0 0.0
    %4531 = vmatpush1.msra.mxu0 0.0
    %4532 = vmatprep.subr.mxu0 0.0
    %4533 = vmatpush1.msra.mxu0 0.0
    %4534 = vmatprep.subr.mxu0 0.0
    %4535 = vmatpush1.msra.mxu0 0.0
    %4536 = vmatprep.subr.mxu0 0.0
    %4537 = vmatpush1.msra.mxu0 0.0
    %4538 = vmatprep.subr.mxu0 0.0
    %4539 = vmatpush1.msra.mxu0 0.0
    %4540 = vmatprep.subr.mxu0 0.0
    %4541 = vmatpush1.msra.mxu0 0.0
    %4542 = vmatprep.subr.mxu0 0.0
    %4543 = vmatpush1.msra.mxu0 0.0
    %4544 = vmatprep.subr.mxu0 0.0
    %4545 = vmatpush1.msra.mxu0 0.0
    %4546 = vmatprep.mubr.f32.mxu0 0.0
    %v4547 = vand.u32 %v4141, 4294901760
    %4548 = vmatmul.mubr.f32.gmra.mrb[0].mxu0 %v4547
    %v4549 = vpop.f32.mrb[0].mxu0
    %v4550 = vadd.f32 %v4467, %v4549
    %v4551 = vpop.f32.mrb[0].mxu0
    %4552 = vdwg.mxu0
    %4553 = vmatprep.subr.mxu0 0.0
    %v4554 = vand.u32 %v4129, 4294901760
    %4555 = vmatpush1.msra.mxu0 %v4554
    %4556 = vmatprep.subr.mxu0 0.0
    %v4557 = vand.u32 %v4130, 4294901760
    %4558 = vmatpush1.msra.mxu0 %v4557
    %4559 = vmatprep.subr.mxu0 0.0
    %v4560 = vand.u32 %v4131, 4294901760
    %4561 = vmatpush1.msra.mxu0 %v4560
    %4562 = vmatprep.subr.mxu0 0.0
    %v4563 = vand.u32 %v4132, 4294901760
    %4564 = vmatpush1.msra.mxu0 %v4563
    %4565 = vmatprep.subr.mxu0 0.0
    %4566 = vmatpush1.msra.mxu0 0.0
    %4567 = vmatprep.subr.mxu0 0.0
    %4568 = vmatpush1.msra.mxu0 0.0
    %4569 = vmatprep.subr.mxu0 0.0
    %4570 = vmatpush1.msra.mxu0 0.0
    %4571 = vmatprep.subr.mxu0 0.0
    %4572 = vmatpush1.msra.mxu0 0.0
    %4573 = vmatprep.subr.mxu0 0.0
    %4574 = vmatpush1.msra.mxu0 0.0
    %4575 = vmatprep.subr.mxu0 0.0
    %4576 = vmatpush1.msra.mxu0 0.0
    %4577 = vmatprep.subr.mxu0 0.0
    %4578 = vmatpush1.msra.mxu0 0.0
    %4579 = vmatprep.subr.mxu0 0.0
    %4580 = vmatpush1.msra.mxu0 0.0
    %4581 = vmatprep.subr.mxu0 0.0
    %4582 = vmatpush1.msra.mxu0 0.0
    %4583 = vmatprep.subr.mxu0 0.0
    %4584 = vmatpush1.msra.mxu0 0.0
    %4585 = vmatprep.subr.mxu0 0.0
    %4586 = vmatpush1.msra.mxu0 0.0
    %4587 = vmatprep.subr.mxu0 0.0
    %4588 = vmatpush1.msra.mxu0 0.0
    %4589 = vmatprep.subr.mxu0 0.0
    %4590 = vmatpush1.msra.mxu0 0.0
    %4591 = vmatprep.subr.mxu0 0.0
    %4592 = vmatpush1.msra.mxu0 0.0
    %4593 = vmatprep.subr.mxu0 0.0
    %4594 = vmatpush1.msra.mxu0 0.0
    %4595 = vmatprep.subr.mxu0 0.0
    %4596 = vmatpush1.msra.mxu0 0.0
    %4597 = vmatprep.subr.mxu0 0.0
    %4598 = vmatpush1.msra.mxu0 0.0
    %4599 = vmatprep.subr.mxu0 0.0
    %4600 = vmatpush1.msra.mxu0 0.0
    %4601 = vmatprep.subr.mxu0 0.0
    %4602 = vmatpush1.msra.mxu0 0.0
    %4603 = vmatprep.subr.mxu0 0.0
    %4604 = vmatpush1.msra.mxu0 0.0
    %4605 = vmatprep.subr.mxu0 0.0
    %4606 = vmatpush1.msra.mxu0 0.0
    %4607 = vmatprep.subr.mxu0 0.0
    %4608 = vmatpush1.msra.mxu0 0.0
    %4609 = vmatprep.subr.mxu0 0.0
    %4610 = vmatpush1.msra.mxu0 0.0
    %4611 = vmatprep.subr.mxu0 0.0
    %4612 = vmatpush1.msra.mxu0 0.0
    %4613 = vmatprep.subr.mxu0 0.0
    %4614 = vmatpush1.msra.mxu0 0.0
    %4615 = vmatprep.subr.mxu0 0.0
    %4616 = vmatpush1.msra.mxu0 0.0
    %4617 = vmatprep.subr.mxu0 0.0
    %4618 = vmatpush1.msra.mxu0 0.0
    %4619 = vmatprep.subr.mxu0 0.0
    %4620 = vmatpush1.msra.mxu0 0.0
    %4621 = vmatprep.mubr.f32.mxu0 0.0
    %v4622 = vand.u32 %v4141, 4294901760
    %4623 = vmatmul.mubr.f32.gmra.mrb[0].mxu0 %v4622
    %v4624 = vpop.f32.mrb[0].mxu0
    %v4625 = vadd.f32 %v4550, %v4624
    %v4626 = vpop.f32.mrb[0].mxu0
    %4627 = vdwg.mxu0
    %v4628 = vmax.f32 %v4625, 0.0
    %v4629 = vld [vmem:[%s7] sm:$0xff]
    %v4630 = vld [vmem:[%s7 + $0x8] sm:$0xff]
    %v4631 = vld [vmem:[%s7 + $0x10] sm:$0xff]
    %v4632 = vld [vmem:[%s7 + $0x18] sm:$0xff]
    %v4633 = vld [vmem:[%s7 + $0x20] sm:$0xff]
    %v4634 = vld [vmem:[%s7 + $0x28] sm:$0xff]
    %v4635 = vld [vmem:[%s7 + $0x30] sm:$0xff]
    %v4636 = vld [vmem:[%s7 + $0x38] sm:$0xff]
    %v4637 = vld [vmem:[%s8] sm:$0x3]
    %v4639 = vlaneseq
    %v4640 = vshrl.u32 %v4639, 7
    %v4641 = vsub.s32 0, %v4640
    %v4642 = vrot.slane %v4637, %v4641
    %v4643 = vlaneseq
    %v4644 = vshrl.u32 %v4643, 7
    %v4645 = vsub.s32 1, %v4644
    %v4646 = vrot.slane %v4637, %v4645
    %v4650 = vsel %vm3639, %v4628, 0
    %v4652 = vand.u32 %v4630, 4294901760
    %4653 = vmatprep.subr.mxu0 %v4652
    %v4654 = vand.u32 %v4629, 4294901760
    %4655 = vmatpush1.msra.mxu0 %v4654
    %v4656 = vand.u32 %v4632, 4294901760
    %4657 = vmatprep.subr.mxu0 %v4656
    %v4658 = vand.u32 %v4631, 4294901760
    %4659 = vmatpush1.msra.mxu0 %v4658
    %v4660 = vand.u32 %v4634, 4294901760
    %4661 = vmatprep.subr.mxu0 %v4660
    %v4662 = vand.u32 %v4633, 4294901760
    %4663 = vmatpush1.msra.mxu0 %v4662
    %v4664 = vand.u32 %v4636, 4294901760
    %4665 = vmatprep.subr.mxu0 %v4664
    %v4666 = vand.u32 %v4635, 4294901760
    %4667 = vmatpush1.msra.mxu0 %v4666
    %4668 = vmatprep.subr.mxu0 0.0
    %4669 = vmatpush1.msra.mxu0 0.0
    %4670 = vmatprep.subr.mxu0 0.0
    %4671 = vmatpush1.msra.mxu0 0.0
    %4672 = vmatprep.subr.mxu0 0.0
    %4673 = vmatpush1.msra.mxu0 0.0
    %4674 = vmatprep.subr.mxu0 0.0
    %4675 = vmatpush1.msra.mxu0 0.0
    %4676 = vmatprep.subr.mxu0 0.0
    %4677 = vmatpush1.msra.mxu0 0.0
    %4678 = vmatprep.subr.mxu0 0.0
    %4679 = vmatpush1.msra.mxu0 0.0
    %4680 = vmatprep.subr.mxu0 0.0
    %4681 = vmatpush1.msra.mxu0 0.0
    %4682 = vmatprep.subr.mxu0 0.0
    %4683 = vmatpush1.msra.mxu0 0.0
    %4684 = vmatprep.subr.mxu0 0.0
    %4685 = vmatpush1.msra.mxu0 0.0
    %4686 = vmatprep.subr.mxu0 0.0
    %4687 = vmatpush1.msra.mxu0 0.0
    %4688 = vmatprep.subr.mxu0 0.0
    %4689 = vmatpush1.msra.mxu0 0.0
    %4690 = vmatprep.subr.mxu0 0.0
    %4691 = vmatpush1.msra.mxu0 0.0
    %4692 = vmatprep.subr.mxu0 0.0
    %4693 = vmatpush1.msra.mxu0 0.0
    %4694 = vmatprep.subr.mxu0 0.0
    %4695 = vmatpush1.msra.mxu0 0.0
    %4696 = vmatprep.subr.mxu0 0.0
    %4697 = vmatpush1.msra.mxu0 0.0
    %4698 = vmatprep.subr.mxu0 0.0
    %4699 = vmatpush1.msra.mxu0 0.0
    %4700 = vmatprep.subr.mxu0 0.0
    %4701 = vmatpush1.msra.mxu0 0.0
    %4702 = vmatprep.subr.mxu0 0.0
    %4703 = vmatpush1.msra.mxu0 0.0
    %4704 = vmatprep.subr.mxu0 0.0
    %4705 = vmatpush1.msra.mxu0 0.0
    %4706 = vmatprep.subr.mxu0 0.0
    %4707 = vmatpush1.msra.mxu0 0.0
    %4708 = vmatprep.subr.mxu0 0.0
    %4709 = vmatpush1.msra.mxu0 0.0
    %4710 = vmatprep.subr.mxu0 0.0
    %4711 = vmatpush1.msra.mxu0 0.0
    %4712 = vmatprep.subr.mxu0 0.0
    %4713 = vmatpush1.msra.mxu0 0.0
    %4714 = vmatprep.subr.mxu0 0.0
    %4715 = vmatpush1.msra.mxu0 0.0
    %4716 = vmatprep.subr.mxu0 0.0
    %4717 = vmatpush1.msra.mxu0 0.0
    %4718 = vmatprep.subr.mxu0 0.0
    %4719 = vmatpush1.msra.mxu0 0.0
    %4720 = vmatprep.subr.mxu0 0.0
    %4721 = vmatpush1.msra.mxu0 0.0
    %4722 = vmatprep.subr.mxu0 0.0
    %4723 = vmatpush1.msra.mxu0 0.0
    %4724 = vmatprep.mubr.f32.mxu0 0.0
    %v4725 = vand.u32 %v4650, 4294901760
    %v4726 = vsub.f32 %v4650, %v4725
    %v4727 = vand.u32 %v4726, 4294901760
    %v4728 = vsub.f32 %v4726, %v4727
    %v4729 = vand.u32 %v4728, 4294901760
    %4730 = vmatmul.mubr.f32.gmra.mrb[0].mxu0 %v4729
    %v4731 = vpop.f32.mrb[0].mxu0
    %v4732 = vadd.f32 %v4642, %v4731
    %v4733 = vpop.f32.mrb[0].mxu0
    %v4734 = vadd.f32 %v4646, %v4733
    %4735 = vdwg.mxu0
    %v4736 = vand.u32 %v4630, 4294901760
    %v4737 = vsub.f32 %v4630, %v4736
    %v4738 = vand.u32 %v4737, 4294901760
    %v4739 = vsub.f32 %v4737, %v4738
    %v4740 = vand.u32 %v4739, 4294901760
    %4741 = vmatprep.subr.mxu0 %v4740
    %v4742 = vand.u32 %v4629, 4294901760
    %v4743 = vsub.f32 %v4629, %v4742
    %v4744 = vand.u32 %v4743, 4294901760
    %v4745 = vsub.f32 %v4743, %v4744
    %v4746 = vand.u32 %v4745, 4294901760
    %4747 = vmatpush1.msra.mxu0 %v4746
    %v4748 = vand.u32 %v4632, 4294901760
    %v4749 = vsub.f32 %v4632, %v4748
    %v4750 = vand.u32 %v4749, 4294901760
    %v4751 = vsub.f32 %v4749, %v4750
    %v4752 = vand.u32 %v4751, 4294901760
    %4753 = vmatprep.subr.mxu0 %v4752
    %v4754 = vand.u32 %v4631, 4294901760
    %v4755 = vsub.f32 %v4631, %v4754
    %v4756 = vand.u32 %v4755, 4294901760
    %v4757 = vsub.f32 %v4755, %v4756
    %v4758 = vand.u32 %v4757, 4294901760
    %4759 = vmatpush1.msra.mxu0 %v4758
    %v4760 = vand.u32 %v4634, 4294901760
    %v4761 = vsub.f32 %v4634, %v4760
    %v4762 = vand.u32 %v4761, 4294901760
    %v4763 = vsub.f32 %v4761, %v4762
    %v4764 = vand.u32 %v4763, 4294901760
    %4765 = vmatprep.subr.mxu0 %v4764
    %v4766 = vand.u32 %v4633, 4294901760
    %v4767 = vsub.f32 %v4633, %v4766
    %v4768 = vand.u32 %v4767, 4294901760
    %v4769 = vsub.f32 %v4767, %v4768
    %v4770 = vand.u32 %v4769, 4294901760
    %4771 = vmatpush1.msra.mxu0 %v4770
    %v4772 = vand.u32 %v4636, 4294901760
    %v4773 = vsub.f32 %v4636, %v4772
    %v4774 = vand.u32 %v4773, 4294901760
    %v4775 = vsub.f32 %v4773, %v4774
    %v4776 = vand.u32 %v4775, 4294901760
    %4777 = vmatprep.subr.mxu0 %v4776
    %v4778 = vand.u32 %v4635, 4294901760
    %v4779 = vsub.f32 %v4635, %v4778
    %v4780 = vand.u32 %v4779, 4294901760
    %v4781 = vsub.f32 %v4779, %v4780
    %v4782 = vand.u32 %v4781, 4294901760
    %4783 = vmatpush1.msra.mxu0 %v4782
    %4784 = vmatprep.subr.mxu0 0.0
    %4785 = vmatpush1.msra.mxu0 0.0
    %4786 = vmatprep.subr.mxu0 0.0
    %4787 = vmatpush1.msra.mxu0 0.0
    %4788 = vmatprep.subr.mxu0 0.0
    %4789 = vmatpush1.msra.mxu0 0.0
    %4790 = vmatprep.subr.mxu0 0.0
    %4791 = vmatpush1.msra.mxu0 0.0
    %4792 = vmatprep.subr.mxu0 0.0
    %4793 = vmatpush1.msra.mxu0 0.0
    %4794 = vmatprep.subr.mxu0 0.0
    %4795 = vmatpush1.msra.mxu0 0.0
    %4796 = vmatprep.subr.mxu0 0.0
    %4797 = vmatpush1.msra.mxu0 0.0
    %4798 = vmatprep.subr.mxu0 0.0
    %4799 = vmatpush1.msra.mxu0 0.0
    %4800 = vmatprep.subr.mxu0 0.0
    %4801 = vmatpush1.msra.mxu0 0.0
    %4802 = vmatprep.subr.mxu0 0.0
    %4803 = vmatpush1.msra.mxu0 0.0
    %4804 = vmatprep.subr.mxu0 0.0
    %4805 = vmatpush1.msra.mxu0 0.0
    %4806 = vmatprep.subr.mxu0 0.0
    %4807 = vmatpush1.msra.mxu0 0.0
    %4808 = vmatprep.subr.mxu0 0.0
    %4809 = vmatpush1.msra.mxu0 0.0
    %4810 = vmatprep.subr.mxu0 0.0
    %4811 = vmatpush1.msra.mxu0 0.0
    %4812 = vmatprep.subr.mxu0 0.0
    %4813 = vmatpush1.msra.mxu0 0.0
    %4814 = vmatprep.subr.mxu0 0.0
    %4815 = vmatpush1.msra.mxu0 0.0
    %4816 = vmatprep.subr.mxu0 0.0
    %4817 = vmatpush1.msra.mxu0 0.0
    %4818 = vmatprep.subr.mxu0 0.0
    %4819 = vmatpush1.msra.mxu0 0.0
    %4820 = vmatprep.subr.mxu0 0.0
    %4821 = vmatpush1.msra.mxu0 0.0
    %4822 = vmatprep.subr.mxu0 0.0
    %4823 = vmatpush1.msra.mxu0 0.0
    %4824 = vmatprep.subr.mxu0 0.0
    %4825 = vmatpush1.msra.mxu0 0.0
    %4826 = vmatprep.subr.mxu0 0.0
    %4827 = vmatpush1.msra.mxu0 0.0
    %4828 = vmatprep.subr.mxu0 0.0
    %4829 = vmatpush1.msra.mxu0 0.0
    %4830 = vmatprep.subr.mxu0 0.0
    %4831 = vmatpush1.msra.mxu0 0.0
    %4832 = vmatprep.subr.mxu0 0.0
    %4833 = vmatpush1.msra.mxu0 0.0
    %4834 = vmatprep.subr.mxu0 0.0
    %4835 = vmatpush1.msra.mxu0 0.0
    %4836 = vmatprep.subr.mxu0 0.0
    %4837 = vmatpush1.msra.mxu0 0.0
    %4838 = vmatprep.subr.mxu0 0.0
    %4839 = vmatpush1.msra.mxu0 0.0
    %4840 = vmatprep.mubr.f32.mxu0 0.0
    %v4841 = vand.u32 %v4650, 4294901760
    %4842 = vmatmul.mubr.f32.gmra.mrb[0].mxu0 %v4841
    %v4843 = vpop.f32.mrb[0].mxu0
    %v4844 = vadd.f32 %v4732, %v4843
    %v4845 = vpop.f32.mrb[0].mxu0
    %v4846 = vadd.f32 %v4734, %v4845
    %4847 = vdwg.mxu0
    %v4848 = vand.u32 %v4630, 4294901760
    %v4849 = vsub.f32 %v4630, %v4848
    %4850 = vmatprep.subr.mxu0 %v4849
    %v4851 = vand.u32 %v4629, 4294901760
    %v4852 = vsub.f32 %v4629, %v4851
    %4853 = vmatpush1.msra.mxu0 %v4852
    %v4854 = vand.u32 %v4632, 4294901760
    %v4855 = vsub.f32 %v4632, %v4854
    %4856 = vmatprep.subr.mxu0 %v4855
    %v4857 = vand.u32 %v4631, 4294901760
    %v4858 = vsub.f32 %v4631, %v4857
    %4859 = vmatpush1.msra.mxu0 %v4858
    %v4860 = vand.u32 %v4634, 4294901760
    %v4861 = vsub.f32 %v4634, %v4860
    %4862 = vmatprep.subr.mxu0 %v4861
    %v4863 = vand.u32 %v4633, 4294901760
    %v4864 = vsub.f32 %v4633, %v4863
    %4865 = vmatpush1.msra.mxu0 %v4864
    %v4866 = vand.u32 %v4636, 4294901760
    %v4867 = vsub.f32 %v4636, %v4866
    %4868 = vmatprep.subr.mxu0 %v4867
    %v4869 = vand.u32 %v4635, 4294901760
    %v4870 = vsub.f32 %v4635, %v4869
    %4871 = vmatpush1.msra.mxu0 %v4870
    %4872 = vmatprep.subr.mxu0 0.0
    %4873 = vmatpush1.msra.mxu0 0.0
    %4874 = vmatprep.subr.mxu0 0.0
    %4875 = vmatpush1.msra.mxu0 0.0
    %4876 = vmatprep.subr.mxu0 0.0
    %4877 = vmatpush1.msra.mxu0 0.0
    %4878 = vmatprep.subr.mxu0 0.0
    %4879 = vmatpush1.msra.mxu0 0.0
    %4880 = vmatprep.subr.mxu0 0.0
    %4881 = vmatpush1.msra.mxu0 0.0
    %4882 = vmatprep.subr.mxu0 0.0
    %4883 = vmatpush1.msra.mxu0 0.0
    %4884 = vmatprep.subr.mxu0 0.0
    %4885 = vmatpush1.msra.mxu0 0.0
    %4886 = vmatprep.subr.mxu0 0.0
    %4887 = vmatpush1.msra.mxu0 0.0
    %4888 = vmatprep.subr.mxu0 0.0
    %4889 = vmatpush1.msra.mxu0 0.0
    %4890 = vmatprep.subr.mxu0 0.0
    %4891 = vmatpush1.msra.mxu0 0.0
    %4892 = vmatprep.subr.mxu0 0.0
    %4893 = vmatpush1.msra.mxu0 0.0
    %4894 = vmatprep.subr.mxu0 0.0
    %4895 = vmatpush1.msra.mxu0 0.0
    %4896 = vmatprep.subr.mxu0 0.0
    %4897 = vmatpush1.msra.mxu0 0.0
    %4898 = vmatprep.subr.mxu0 0.0
    %4899 = vmatpush1.msra.mxu0 0.0
    %4900 = vmatprep.subr.mxu0 0.0
    %4901 = vmatpush1.msra.mxu0 0.0
    %4902 = vmatprep.subr.mxu0 0.0
    %4903 = vmatpush1.msra.mxu0 0.0
    %4904 = vmatprep.subr.mxu0 0.0
    %4905 = vmatpush1.msra.mxu0 0.0
    %4906 = vmatprep.subr.mxu0 0.0
    %4907 = vmatpush1.msra.mxu0 0.0
    %4908 = vmatprep.subr.mxu0 0.0
    %4909 = vmatpush1.msra.mxu0 0.0
    %4910 = vmatprep.subr.mxu0 0.0
    %4911 = vmatpush1.msra.mxu0 0.0
    %4912 = vmatprep.subr.mxu0 0.0
    %4913 = vmatpush1.msra.mxu0 0.0
    %4914 = vmatprep.subr.mxu0 0.0
    %4915 = vmatpush1.msra.mxu0 0.0
    %4916 = vmatprep.subr.mxu0 0.0
    %4917 = vmatpush1.msra.mxu0 0.0
    %4918 = vmatprep.subr.mxu0 0.0
    %4919 = vmatpush1.msra.mxu0 0.0
    %4920 = vmatprep.subr.mxu0 0.0
    %4921 = vmatpush1.msra.mxu0 0.0
    %4922 = vmatprep.subr.mxu0 0.0
    %4923 = vmatpush1.msra.mxu0 0.0
    %4924 = vmatprep.subr.mxu0 0.0
    %4925 = vmatpush1.msra.mxu0 0.0
    %4926 = vmatprep.subr.mxu0 0.0
    %4927 = vmatpush1.msra.mxu0 0.0
    %4928 = vmatprep.mubr.f32.mxu0 0.0
    %v4929 = vand.u32 %v4650, 4294901760
    %v4930 = vsub.f32 %v4650, %v4929
    %4931 = vmatmul.mubr.f32.gmra.mrb[0].mxu0 %v4930
    %v4932 = vpop.f32.mrb[0].mxu0
    %v4933 = vadd.f32 %v4844, %v4932
    %v4934 = vpop.f32.mrb[0].mxu0
    %v4935 = vadd.f32 %v4846, %v4934
    %4936 = vdwg.mxu0
    %v4937 = vand.u32 %v4630, 4294901760
    %4938 = vmatprep.subr.mxu0 %v4937
    %v4939 = vand.u32 %v4629, 4294901760
    %4940 = vmatpush1.msra.mxu0 %v4939
    %v4941 = vand.u32 %v4632, 4294901760
    %4942 = vmatprep.subr.mxu0 %v4941
    %v4943 = vand.u32 %v4631, 4294901760
    %4944 = vmatpush1.msra.mxu0 %v4943
    %v4945 = vand.u32 %v4634, 4294901760
    %4946 = vmatprep.subr.mxu0 %v4945
    %v4947 = vand.u32 %v4633, 4294901760
    %4948 = vmatpush1.msra.mxu0 %v4947
    %v4949 = vand.u32 %v4636, 4294901760
    %4950 = vmatprep.subr.mxu0 %v4949
    %v4951 = vand.u32 %v4635, 4294901760
    %4952 = vmatpush1.msra.mxu0 %v4951
    %4953 = vmatprep.subr.mxu0 0.0
    %4954 = vmatpush1.msra.mxu0 0.0
    %4955 = vmatprep.subr.mxu0 0.0
    %4956 = vmatpush1.msra.mxu0 0.0
    %4957 = vmatprep.subr.mxu0 0.0
    %4958 = vmatpush1.msra.mxu0 0.0
    %4959 = vmatprep.subr.mxu0 0.0
    %4960 = vmatpush1.msra.mxu0 0.0
    %4961 = vmatprep.subr.mxu0 0.0
    %4962 = vmatpush1.msra.mxu0 0.0
    %4963 = vmatprep.subr.mxu0 0.0
    %4964 = vmatpush1.msra.mxu0 0.0
    %4965 = vmatprep.subr.mxu0 0.0
    %4966 = vmatpush1.msra.mxu0 0.0
    %4967 = vmatprep.subr.mxu0 0.0
    %4968 = vmatpush1.msra.mxu0 0.0
    %4969 = vmatprep.subr.mxu0 0.0
    %4970 = vmatpush1.msra.mxu0 0.0
    %4971 = vmatprep.subr.mxu0 0.0
    %4972 = vmatpush1.msra.mxu0 0.0
    %4973 = vmatprep.subr.mxu0 0.0
    %4974 = vmatpush1.msra.mxu0 0.0
    %4975 = vmatprep.subr.mxu0 0.0
    %4976 = vmatpush1.msra.mxu0 0.0
    %4977 = vmatprep.subr.mxu0 0.0
    %4978 = vmatpush1.msra.mxu0 0.0
    %4979 = vmatprep.subr.mxu0 0.0
    %4980 = vmatpush1.msra.mxu0 0.0
    %4981 = vmatprep.subr.mxu0 0.0
    %4982 = vmatpush1.msra.mxu0 0.0
    %4983 = vmatprep.subr.mxu0 0.0
    %4984 = vmatpush1.msra.mxu0 0.0
    %4985 = vmatprep.subr.mxu0 0.0
    %4986 = vmatpush1.msra.mxu0 0.0
    %4987 = vmatprep.subr.mxu0 0.0
    %4988 = vmatpush1.msra.mxu0 0.0
    %4989 = vmatprep.subr.mxu0 0.0
    %4990 = vmatpush1.msra.mxu0 0.0
    %4991 = vmatprep.subr.mxu0 0.0
    %4992 = vmatpush1.msra.mxu0 0.0
    %4993 = vmatprep.subr.mxu0 0.0
    %4994 = vmatpush1.msra.mxu0 0.0
    %4995 = vmatprep.subr.mxu0 0.0
    %4996 = vmatpush1.msra.mxu0 0.0
    %4997 = vmatprep.subr.mxu0 0.0
    %4998 = vmatpush1.msra.mxu0 0.0
    %4999 = vmatprep.subr.mxu0 0.0
    %5000 = vmatpush1.msra.mxu0 0.0
    %5001 = vmatprep.subr.mxu0 0.0
    %5002 = vmatpush1.msra.mxu0 0.0
    %5003 = vmatprep.subr.mxu0 0.0
    %5004 = vmatpush1.msra.mxu0 0.0
    %5005 = vmatprep.subr.mxu0 0.0
    %5006 = vmatpush1.msra.mxu0 0.0
    %5007 = vmatprep.subr.mxu0 0.0
    %5008 = vmatpush1.msra.mxu0 0.0
    %5009 = vmatprep.mubr.f32.mxu0 0.0
    %v5010 = vand.u32 %v4650, 4294901760
    %v5011 = vsub.f32 %v4650, %v5010
    %v5012 = vand.u32 %v5011, 4294901760
    %5013 = vmatmul.mubr.f32.gmra.mrb[0].mxu0 %v5012
    %v5014 = vpop.f32.mrb[0].mxu0
    %v5015 = vadd.f32 %v4933, %v5014
    %v5016 = vpop.f32.mrb[0].mxu0
    %v5017 = vadd.f32 %v4935, %v5016
    %5018 = vdwg.mxu0
    %v5019 = vand.u32 %v4630, 4294901760
    %v5020 = vsub.f32 %v4630, %v5019
    %v5021 = vand.u32 %v5020, 4294901760
    %5022 = vmatprep.subr.mxu0 %v5021
    %v5023 = vand.u32 %v4629, 4294901760
    %v5024 = vsub.f32 %v4629, %v5023
    %v5025 = vand.u32 %v5024, 4294901760
    %5026 = vmatpush1.msra.mxu0 %v5025
    %v5027 = vand.u32 %v4632, 4294901760
    %v5028 = vsub.f32 %v4632, %v5027
    %v5029 = vand.u32 %v5028, 4294901760
    %5030 = vmatprep.subr.mxu0 %v5029
    %v5031 = vand.u32 %v4631, 4294901760
    %v5032 = vsub.f32 %v4631, %v5031
    %v5033 = vand.u32 %v5032, 4294901760
    %5034 = vmatpush1.msra.mxu0 %v5033
    %v5035 = vand.u32 %v4634, 4294901760
    %v5036 = vsub.f32 %v4634, %v5035
    %v5037 = vand.u32 %v5036, 4294901760
    %5038 = vmatprep.subr.mxu0 %v5037
    %v5039 = vand.u32 %v4633, 4294901760
    %v5040 = vsub.f32 %v4633, %v5039
    %v5041 = vand.u32 %v5040, 4294901760
    %5042 = vmatpush1.msra.mxu0 %v5041
    %v5043 = vand.u32 %v4636, 4294901760
    %v5044 = vsub.f32 %v4636, %v5043
    %v5045 = vand.u32 %v5044, 4294901760
    %5046 = vmatprep.subr.mxu0 %v5045
    %v5047 = vand.u32 %v4635, 4294901760
    %v5048 = vsub.f32 %v4635, %v5047
    %v5049 = vand.u32 %v5048, 4294901760
    %5050 = vmatpush1.msra.mxu0 %v5049
    %5051 = vmatprep.subr.mxu0 0.0
    %5052 = vmatpush1.msra.mxu0 0.0
    %5053 = vmatprep.subr.mxu0 0.0
    %5054 = vmatpush1.msra.mxu0 0.0
    %5055 = vmatprep.subr.mxu0 0.0
    %5056 = vmatpush1.msra.mxu0 0.0
    %5057 = vmatprep.subr.mxu0 0.0
    %5058 = vmatpush1.msra.mxu0 0.0
    %5059 = vmatprep.subr.mxu0 0.0
    %5060 = vmatpush1.msra.mxu0 0.0
    %5061 = vmatprep.subr.mxu0 0.0
    %5062 = vmatpush1.msra.mxu0 0.0
    %5063 = vmatprep.subr.mxu0 0.0
    %5064 = vmatpush1.msra.mxu0 0.0
    %5065 = vmatprep.subr.mxu0 0.0
    %5066 = vmatpush1.msra.mxu0 0.0
    %5067 = vmatprep.subr.mxu0 0.0
    %5068 = vmatpush1.msra.mxu0 0.0
    %5069 = vmatprep.subr.mxu0 0.0
    %5070 = vmatpush1.msra.mxu0 0.0
    %5071 = vmatprep.subr.mxu0 0.0
    %5072 = vmatpush1.msra.mxu0 0.0
    %5073 = vmatprep.subr.mxu0 0.0
    %5074 = vmatpush1.msra.mxu0 0.0
    %5075 = vmatprep.subr.mxu0 0.0
    %5076 = vmatpush1.msra.mxu0 0.0
    %5077 = vmatprep.subr.mxu0 0.0
    %5078 = vmatpush1.msra.mxu0 0.0
    %5079 = vmatprep.subr.mxu0 0.0
    %5080 = vmatpush1.msra.mxu0 0.0
    %5081 = vmatprep.subr.mxu0 0.0
    %5082 = vmatpush1.msra.mxu0 0.0
    %5083 = vmatprep.subr.mxu0 0.0
    %5084 = vmatpush1.msra.mxu0 0.0
    %5085 = vmatprep.subr.mxu0 0.0
    %5086 = vmatpush1.msra.mxu0 0.0
    %5087 = vmatprep.subr.mxu0 0.0
    %5088 = vmatpush1.msra.mxu0 0.0
    %5089 = vmatprep.subr.mxu0 0.0
    %5090 = vmatpush1.msra.mxu0 0.0
    %5091 = vmatprep.subr.mxu0 0.0
    %5092 = vmatpush1.msra.mxu0 0.0
    %5093 = vmatprep.subr.mxu0 0.0
    %5094 = vmatpush1.msra.mxu0 0.0
    %5095 = vmatprep.subr.mxu0 0.0
    %5096 = vmatpush1.msra.mxu0 0.0
    %5097 = vmatprep.subr.mxu0 0.0
    %5098 = vmatpush1.msra.mxu0 0.0
    %5099 = vmatprep.subr.mxu0 0.0
    %5100 = vmatpush1.msra.mxu0 0.0
    %5101 = vmatprep.subr.mxu0 0.0
    %5102 = vmatpush1.msra.mxu0 0.0
    %5103 = vmatprep.subr.mxu0 0.0
    %5104 = vmatpush1.msra.mxu0 0.0
    %5105 = vmatprep.subr.mxu0 0.0
    %5106 = vmatpush1.msra.mxu0 0.0
    %5107 = vmatprep.mubr.f32.mxu0 0.0
    %v5108 = vand.u32 %v4650, 4294901760
    %5109 = vmatmul.mubr.f32.gmra.mrb[0].mxu0 %v5108
    %v5110 = vpop.f32.mrb[0].mxu0
    %v5111 = vadd.f32 %v5015, %v5110
    %v5112 = vpop.f32.mrb[0].mxu0
    %v5113 = vadd.f32 %v5017, %v5112
    %5114 = vdwg.mxu0
    %v5115 = vand.u32 %v4630, 4294901760
    %5116 = vmatprep.subr.mxu0 %v5115
    %v5117 = vand.u32 %v4629, 4294901760
    %5118 = vmatpush1.msra.mxu0 %v5117
    %v5119 = vand.u32 %v4632, 4294901760
    %5120 = vmatprep.subr.mxu0 %v5119
    %v5121 = vand.u32 %v4631, 4294901760
    %5122 = vmatpush1.msra.mxu0 %v5121
    %v5123 = vand.u32 %v4634, 4294901760
    %5124 = vmatprep.subr.mxu0 %v5123
    %v5125 = vand.u32 %v4633, 4294901760
    %5126 = vmatpush1.msra.mxu0 %v5125
    %v5127 = vand.u32 %v4636, 4294901760
    %5128 = vmatprep.subr.mxu0 %v5127
    %v5129 = vand.u32 %v4635, 4294901760
    %5130 = vmatpush1.msra.mxu0 %v5129
    %5131 = vmatprep.subr.mxu0 0.0
    %5132 = vmatpush1.msra.mxu0 0.0
    %5133 = vmatprep.subr.mxu0 0.0
    %5134 = vmatpush1.msra.mxu0 0.0
    %5135 = vmatprep.subr.mxu0 0.0
    %5136 = vmatpush1.msra.mxu0 0.0
    %5137 = vmatprep.subr.mxu0 0.0
    %5138 = vmatpush1.msra.mxu0 0.0
    %5139 = vmatprep.subr.mxu0 0.0
    %5140 = vmatpush1.msra.mxu0 0.0
    %5141 = vmatprep.subr.mxu0 0.0
    %5142 = vmatpush1.msra.mxu0 0.0
    %5143 = vmatprep.subr.mxu0 0.0
    %5144 = vmatpush1.msra.mxu0 0.0
    %5145 = vmatprep.subr.mxu0 0.0
    %5146 = vmatpush1.msra.mxu0 0.0
    %5147 = vmatprep.subr.mxu0 0.0
    %5148 = vmatpush1.msra.mxu0 0.0
    %5149 = vmatprep.subr.mxu0 0.0
    %5150 = vmatpush1.msra.mxu0 0.0
    %5151 = vmatprep.subr.mxu0 0.0
    %5152 = vmatpush1.msra.mxu0 0.0
    %5153 = vmatprep.subr.mxu0 0.0
    %5154 = vmatpush1.msra.mxu0 0.0
    %5155 = vmatprep.subr.mxu0 0.0
    %5156 = vmatpush1.msra.mxu0 0.0
    %5157 = vmatprep.subr.mxu0 0.0
    %5158 = vmatpush1.msra.mxu0 0.0
    %5159 = vmatprep.subr.mxu0 0.0
    %5160 = vmatpush1.msra.mxu0 0.0
    %5161 = vmatprep.subr.mxu0 0.0
    %5162 = vmatpush1.msra.mxu0 0.0
    %5163 = vmatprep.subr.mxu0 0.0
    %5164 = vmatpush1.msra.mxu0 0.0
    %5165 = vmatprep.subr.mxu0 0.0
    %5166 = vmatpush1.msra.mxu0 0.0
    %5167 = vmatprep.subr.mxu0 0.0
    %5168 = vmatpush1.msra.mxu0 0.0
    %5169 = vmatprep.subr.mxu0 0.0
    %5170 = vmatpush1.msra.mxu0 0.0
    %5171 = vmatprep.subr.mxu0 0.0
    %5172 = vmatpush1.msra.mxu0 0.0
    %5173 = vmatprep.subr.mxu0 0.0
    %5174 = vmatpush1.msra.mxu0 0.0
    %5175 = vmatprep.subr.mxu0 0.0
    %5176 = vmatpush1.msra.mxu0 0.0
    %5177 = vmatprep.subr.mxu0 0.0
    %5178 = vmatpush1.msra.mxu0 0.0
    %5179 = vmatprep.subr.mxu0 0.0
    %5180 = vmatpush1.msra.mxu0 0.0
    %5181 = vmatprep.subr.mxu0 0.0
    %5182 = vmatpush1.msra.mxu0 0.0
    %5183 = vmatprep.subr.mxu0 0.0
    %5184 = vmatpush1.msra.mxu0 0.0
    %5185 = vmatprep.subr.mxu0 0.0
    %5186 = vmatpush1.msra.mxu0 0.0
    %5187 = vmatprep.mubr.f32.mxu0 0.0
    %v5188 = vand.u32 %v4650, 4294901760
    %5189 = vmatmul.mubr.f32.gmra.mrb[0].mxu0 %v5188
    %v5190 = vpop.f32.mrb[0].mxu0
    %v5191 = vadd.f32 %v5111, %v5190
    %v5192 = vpop.f32.mrb[0].mxu0
    %v5193 = vadd.f32 %v5113, %v5192
    %5194 = vdwg.mxu0
    %v5195 = vmax.f32 %v5193, -20.0
    %v5196 = vmin.f32 %v5195, 20.0
    %v5197 = vmul.f32 %v5196, 0.5
    %v5198 = vmul.f32 %v5197, 1.442695
    %v5199 = vpow.pop %v5198
    %v5200 = vmul.f32 %v5199, %v5199
    %v5201 = vld [vmem:[%s9] sm:$0xff]
    %v5202 = vmul.f32 %v5199, %v5201
    %v5203 = vadd.f32 %v5191, %v5202
    %v5204 = vmul.f32 %v5191, %v5191
    %v5205 = vadd.f32 %v5204, %v5200
    %v5206 = vsub.f32 %v5205, 1.0
    %v5207 = vsub.f32 %v5206, %v5196
    %v5208 = vmul.f32 %v5207, 0.5
    %vm5209 = vcmask 64512
    %v5210 = vsel %vm5209, %v5208, 0.0
    %5211 = vadd.xlane.f32.xlu0 %v5210
    %v5212 = vpop.xlane.xlu0 %5211
    %vm5213 = vcmask 1047752
    %5214 = vst.msk [vmem:[#allocation2] sm:$0xff] %vm5213, 0.0
    %5215 = vst.msk [vmem:[#allocation2] sm:$0xff] %vm5209, %v5191
    %5217 = vrot.lane.b32.xlu0 %v5196, 8
    %v5218 = vpop.permute.xlu0 %5217
    %vm5220 = vcmask 130112
    %5221 = vst.msk [vmem:[#allocation2] sm:$0xff] %vm5220, %v5218
    %5223 = vrot.lane.b32.xlu0 %v5203, 16
    %v5224 = vpop.permute.xlu0 %5223
    %vm5226 = vcmask 195712
    %5227 = vst.msk [vmem:[#allocation2] sm:$0xff] %vm5226, %v5224
    %vm5228 = vcmask 203968
    %5229 = vst.msk [vmem:[#allocation2] sm:$0xff] %vm5228, %v5212
    // Predicated region
    $region42: #{tpu_custom_call.1} parent=1 // pred_check
      _
    $region43: #{tpu_custom_call.1} parent=1 // pred_check_branch
      %5231 = sbr.rel (0) target = $region45
    $region44: #{tpu_custom_call.1} parent=1 // pred_region
      %s5233 = ssub.s32 128, 128
      %5234 = vsyncadd [#allocation3], %s5233
      %s5236 = sshll.u32 [#allocation2], 4
      %s5237 = int_to_ptr.vmem [resolvable:$true] %s5236
      %5239 = dma.vmem_to_hbm [thread:$0]  %s5237, 128, %s10, [#allocation3]
    $region45: #{tpu_custom_call.1} parent=1 // pred_fallthru
      _
    // Predicated region
    $region46: #{tpu_custom_call.1} parent=1 // pred_check
      _
    $region47: #{tpu_custom_call.1} parent=1 // pred_check_branch
      %5241 = sbr.rel (0) target = $region49
    $region48: #{tpu_custom_call.1} parent=1 // pred_region
      %5242 = dma.done [#allocation3], 128
    $region49: #{tpu_custom_call.1} parent=1 // pred_fallthru
      _
    %5243 = vsyncpa [#allocation3], 1

</llo_original>
